<compile_context>
chip_gen: v7x
topology: tpu7x:2x2x1
jax: 0.10.0
libtpu: 0.0.40
codegen_flags: <defaults>
</compile_context>

<pallas_src>
import numpy as np
import jax
import jax.numpy as jnp
from jax.experimental import pallas as pl
from jax.experimental.pallas import tpu as pltpu

LAYER_NUM = 9


def _safe_pow(base, expo):
    # x ** y for positive (or masked-away) bases, lowered via EUP exp/log.
    return jnp.exp(expo * jnp.log(jnp.maximum(base, 1e-20)))


def _make_nmf_kernel(layer_num):
    def _nmf_kernel(L_ref, L2_ref, p_ref, tau_ref, plam_ref, WaT_ref, WaTX_ref,
                    Wm_ref, XWm_ref, M0_ref, A0_ref,
                    Mout_ref, Aout_ref):
        Wm = Wm_ref[...]        # (N, R) bf16  — MXU operand for A @ Wm
        XWm = XWm_ref[...]      # (m, R) f32   — precomputed X @ Wm
        M = M0_ref[...]         # (m, R) f32
        A = A0_ref[...]         # (R, N) f32

        # Unrolled layer loop — single invocation, no grid overhead.
        for k in range(layer_num):
            L = L_ref[k]
            L2 = L2_ref[k]
            pm1 = p_ref[k] - 1.0
            tau = tau_ref[k]        # (R, 1)  hoisted threshold constant
            plam = plam_ref[k]      # (R, 1)  hoisted p * theta

            # ---- A update:  x = A - L * ((Wa^T M) A - Wa^T X) ----
            WaTM = jnp.dot(WaT_ref[k], M,
                           preferred_element_type=jnp.float32)          # (R, R) tiny
            G = jnp.dot(WaTM.astype(jnp.bfloat16), A.astype(jnp.bfloat16),
                        preferred_element_type=jnp.float32) - WaTX_ref[k]  # (R, N)
            x = A - L * G

            # Generalized soft threshold; kept branch implies x > tau > 0 so
            # abs/sign are unnecessary.  relu + sum2one follow.
            # TODO(synk): if p is frozen at 0.5, _safe_pow(x, -0.5) == rsqrt(x).
            val = x - plam * _safe_pow(x, pm1)
            v = jnp.where(x - tau > 0, val, 0.0)
            v = jnp.minimum(v, 1.0)
            Z = jnp.maximum(v, 0.0)
            colsum = jnp.sum(Z, axis=0, keepdims=True) + 0.0001          # (1, N)
            A = Z * pl.reciprocal(colsum, approx=True)

            # ---- M update:  M = relu(M - L2 * (M (A Wm) - X Wm)) ----
            AWm = jnp.dot(A.astype(jnp.bfloat16), Wm,
                          preferred_element_type=jnp.float32)            # (R, R)
            MAWm = jnp.dot(M, AWm, preferred_element_type=jnp.float32)   # (m, R) tiny
            M = jnp.maximum(M - L2 * (MAWm - XWm), 0.0)

            Mout_ref[k] = M
            Aout_ref[k] = A

    return _nmf_kernel


@jax.jit
def l1nmf_forward(X, M0, A0, Wm, L, L2, p, theta, Wa):
    """Returns (M_list, A_list) exactly like L1NMF_Net.forward."""
    layer_num = int(L.shape[0])
    m, R = M0.shape
    N = A0.shape[1]

    # ---- Wrapper-side (XLA) precompute: layer-constant and/or tiny ----
    p_ = p.reshape(layer_num, 1, 1)
    one_m_p = 1.0 - p_
    tau = (_safe_pow(2.0 * one_m_p * theta, 1.0 / (2.0 - p_))
           + p_ * theta * _safe_pow(2.0 * theta * one_m_p,
                                    (p_ - 1.0) / (2.0 - p_)))     # (layers, R, 1)
    plam = p_ * theta                                             # (layers, R, 1)
    WaT = jnp.transpose(Wa, (0, 2, 1))                            # (layers, R, m)
    WaTX = jnp.einsum('lrm,mn->lrn', WaT, X)                      # (layers, R, N)
    XWm = jnp.dot(X, Wm)                                          # (m, R)
    Wm_bf = Wm.astype(jnp.bfloat16)                               # (N, R) MXU operand

    Mout, Aout = pl.pallas_call(
        _make_nmf_kernel(layer_num),
        in_specs=[
            pl.BlockSpec(memory_space=pltpu.MemorySpace.SMEM),   # L     (layers,)
            pl.BlockSpec(memory_space=pltpu.MemorySpace.SMEM),   # L2    (layers,)
            pl.BlockSpec(memory_space=pltpu.MemorySpace.SMEM),   # p     (layers,)
            pl.BlockSpec(memory_space=pltpu.MemorySpace.VMEM),   # tau   (layers, R, 1)
            pl.BlockSpec(memory_space=pltpu.MemorySpace.VMEM),   # plam  (layers, R, 1)
            pl.BlockSpec(memory_space=pltpu.MemorySpace.VMEM),   # Wa^T  (layers, R, m)
            pl.BlockSpec(memory_space=pltpu.MemorySpace.VMEM),   # Wa^T X (layers, R, N)
            pl.BlockSpec(memory_space=pltpu.MemorySpace.VMEM),   # W_m   (N, R) bf16
            pl.BlockSpec(memory_space=pltpu.MemorySpace.VMEM),   # X W_m (m, R)
            pl.BlockSpec(memory_space=pltpu.MemorySpace.VMEM),   # M0    (m, R)
            pl.BlockSpec(memory_space=pltpu.MemorySpace.VMEM),   # A0    (R, N)
        ],
        out_specs=[
            pl.BlockSpec(memory_space=pltpu.MemorySpace.VMEM),
            pl.BlockSpec(memory_space=pltpu.MemorySpace.VMEM),
        ],
        out_shape=[
            jax.ShapeDtypeStruct((layer_num, m, R), jnp.float32),
            jax.ShapeDtypeStruct((layer_num, R, N), jnp.float32),
        ],
    )(L, L2, p, tau, plam, WaT, WaTX, Wm_bf, XWm, M0, A0)

    M_list = [M0] + [Mout[k] for k in range(layer_num)]
    A_list = [A0] + [Aout[k] for k in range(layer_num)]
    return M_list, A_list


def l1nmf_reference(X, M0, A0, Wm, L, L2, p, theta, Wa):
    """Pure-JAX reference mirroring the PyTorch forward (f32, exact ordering)."""
    M_list, A_list = [M0], [A0]
    layer_num = L.shape[0]
    R, N = A0.shape
    for k in range(layer_num):
        Lk, L2k, pk = L[k], L2[k], p[k]
        lam = jnp.broadcast_to(theta[k], (R, N))
        M, A = M_list[-1], A_list[-1]
        T = M @ A - X
        x = A - Lk * (Wa[k].T @ T)
        tau = _safe_pow(2.0 * (1.0 - pk) * lam, 1.0 / (2.0 - pk)) \
            + pk * lam * _safe_pow(2.0 * lam * (1.0 - pk), (pk - 1.0) / (2.0 - pk))
        absx = jnp.abs(x)
        val = jnp.sign(x) * (absx - pk * lam * _safe_pow(absx, pk - 1.0))
        v = jnp.where(x - tau > 0, val, 0.0)
        v = jnp.where(v > 1.0, 1.0, v)
        Z = jnp.maximum(v, 0.0)
        A_new = Z / (Z.sum(0, keepdims=True) + 0.0001)
        T2 = M @ A_new - X
        M_new = jnp.maximum(M - T2 @ (L2k * Wm), 0.0)
        M_list.append(M_new)
        A_list.append(A_new)
    return M_list, A_list


if __name__ == "__main__":
    layer_num = LAYER_NUM
    m, R, N = 32, 8, 128     # bands, endmembers, pixels (small synthetic sizes)

    key = jax.random.PRNGKey(0)
    kM, kA, kX = jax.random.split(key, 3)
    M_np = np.asarray(jax.random.uniform(kM, (m, R), jnp.float32), dtype=np.float64)
    A_param_np = np.asarray(jax.random.uniform(kA, (N, R), jnp.float32), dtype=np.float64)
    X = jax.random.uniform(kX, (m, N), jnp.float32)

    # Deterministic parameter initialization following __init__:
    eig = np.linalg.eigvalsh(M_np.T @ M_np) + 0.1
    L_val = 1.0 / np.max(eig)
    theta0 = np.ones((1, R)) * 0.01 * L_val
    eig2 = np.linalg.eigvalsh(A_param_np @ A_param_np.T) + 0.1
    L2_val = 1.0 / np.max(eig2)
    # TODO(synk): calW uses a cvxpy/SCS solve; use the deterministic closed-form
    # W = M (M^T M)^-1, which satisfies diag(W^T M) == 1.
    Wa0 = M_np @ np.linalg.inv(M_np.T @ M_np + 1e-6 * np.eye(R))

    L = jnp.full((layer_num,), L_val, dtype=jnp.float32)
    L2 = jnp.full((layer_num,), L2_val, dtype=jnp.float32)
    p = jnp.full((layer_num,), 0.5, dtype=jnp.float32)
    theta = jnp.tile(jnp.asarray(theta0.T, jnp.float32)[None], (layer_num, 1, 1))  # (layers, R, 1)
    Wa = jnp.tile(jnp.asarray(Wa0, jnp.float32)[None], (layer_num, 1, 1))          # (layers, m, R)

    M0 = jnp.asarray(M_np, jnp.float32)          # (m, R)
    A0 = jnp.asarray(A_param_np.T, jnp.float32)  # (R, N)   A.values.T
    Wm = jnp.asarray(A_param_np, jnp.float32)    # (N, R)   W_m = A.values

    M_list, A_list = l1nmf_forward(X, M0, A0, Wm, L, L2, p, theta, Wa)
    jax.block_until_ready((M_list, A_list))

    # Sanity check against pure-JAX reference (loose tol: bf16 MXU operands,
    # algebraic reassociation, approx EUP reciprocal in sum2one).
    M_ref, A_ref = l1nmf_reference(X, M0, A0, Wm, L, L2, p, theta, Wa)
    assert len(M_list) == layer_num + 1 and len(A_list) == layer_num + 1
    assert all(bool(jnp.all(jnp.isfinite(x))) for x in M_list + A_list)
    assert np.allclose(np.asarray(M_list[-1]), np.asarray(M_ref[-1]), rtol=5e-2, atol=5e-2)
    assert np.allclose(np.asarray(A_list[-1]), np.asarray(A_ref[-1]), rtol=5e-2, atol=5e-2)

    print("KERNEL_OK")
</pallas_src>

<mosaic_0001>
module attributes {stable_mosaic.version = 11 : i64} {
  func.func @_nmf_kernel(%arg0: memref<9xf32, #tpu.memory_space<smem>>, %arg1: memref<9xf32, #tpu.memory_space<smem>>, %arg2: memref<9xf32, #tpu.memory_space<smem>>, %arg3: memref<9x8x1xf32, #tpu.memory_space<vmem>>, %arg4: memref<9x8x1xf32, #tpu.memory_space<vmem>>, %arg5: memref<9x8x32xf32, #tpu.memory_space<vmem>>, %arg6: memref<9x8x128xf32, #tpu.memory_space<vmem>>, %arg7: memref<128x8xbf16, #tpu.memory_space<vmem>>, %arg8: memref<32x8xf32, #tpu.memory_space<vmem>>, %arg9: memref<32x8xf32, #tpu.memory_space<vmem>>, %arg10: memref<8x128xf32, #tpu.memory_space<vmem>>, %arg11: memref<9x32x8xf32, #tpu.memory_space<vmem>>, %arg12: memref<9x8x128xf32, #tpu.memory_space<vmem>>) attributes {dimension_semantics = [], scalar_prefetch = 0 : i64, scratch_operands = 0 : i64, tpu.core_type = #tpu.core_type<tc>} {
    %c0 = arith.constant 0 : index
    %c0_0 = arith.constant 0 : index
    %0 = vector.load %arg7[%c0, %c0_0] : memref<128x8xbf16, #tpu.memory_space<vmem>>, vector<128x8xbf16>
    %c0_1 = arith.constant 0 : index
    %c0_2 = arith.constant 0 : index
    %1 = vector.load %arg8[%c0_1, %c0_2] : memref<32x8xf32, #tpu.memory_space<vmem>>, vector<32x8xf32>
    %c0_3 = arith.constant 0 : index
    %c0_4 = arith.constant 0 : index
    %2 = vector.load %arg9[%c0_3, %c0_4] : memref<32x8xf32, #tpu.memory_space<vmem>>, vector<32x8xf32>
    %c0_5 = arith.constant 0 : index
    %c0_6 = arith.constant 0 : index
    %3 = vector.load %arg10[%c0_5, %c0_6] : memref<8x128xf32, #tpu.memory_space<vmem>>, vector<8x128xf32>
    %c0_7 = arith.constant 0 : index
    %4 = memref.load %arg0[%c0_7] : memref<9xf32, #tpu.memory_space<smem>>
    %c0_8 = arith.constant 0 : index
    %5 = memref.load %arg1[%c0_8] : memref<9xf32, #tpu.memory_space<smem>>
    %c0_9 = arith.constant 0 : index
    %6 = memref.load %arg2[%c0_9] : memref<9xf32, #tpu.memory_space<smem>>
    %cst = arith.constant 1.000000e+00 : f32
    %7 = arith.subf %6, %cst : f32
    %c0_10 = arith.constant 0 : index
    %c0_11 = arith.constant 0 : index
    %c0_12 = arith.constant 0 : index
    %8 = vector.load %arg3[%c0_10, %c0_11, %c0_12] : memref<9x8x1xf32, #tpu.memory_space<vmem>>, vector<1x8x1xf32>
    %9 = vector.shape_cast %8 : vector<1x8x1xf32> to vector<8x1xf32>
    %c0_13 = arith.constant 0 : index
    %c0_14 = arith.constant 0 : index
    %c0_15 = arith.constant 0 : index
    %10 = vector.load %arg4[%c0_13, %c0_14, %c0_15] : memref<9x8x1xf32, #tpu.memory_space<vmem>>, vector<1x8x1xf32>
    %11 = vector.shape_cast %10 : vector<1x8x1xf32> to vector<8x1xf32>
    %c0_16 = arith.constant 0 : index
    %c0_17 = arith.constant 0 : index
    %c0_18 = arith.constant 0 : index
    %12 = vector.load %arg5[%c0_16, %c0_17, %c0_18] : memref<9x8x32xf32, #tpu.memory_space<vmem>>, vector<1x8x32xf32>
    %13 = vector.shape_cast %12 : vector<1x8x32xf32> to vector<8x32xf32>
    %cst_19 = arith.constant dense<0.000000e+00> : vector<8x8xf32>
    %14 = tpu.matmul %13, %2, %cst_19 {dimension_numbers = #tpu.dot_dimension_numbers<[1], [0], [0], [1], [0, 0, 1, 1], [], []>} : vector<8x32xf32>, vector<32x8xf32>, vector<8x8xf32> -> vector<8x8xf32>
    %15 = arith.truncf %14 : vector<8x8xf32> to vector<8x8xbf16>
    %16 = arith.truncf %3 : vector<8x128xf32> to vector<8x128xbf16>
    %cst_20 = arith.constant dense<0.000000e+00> : vector<8x128xf32>
    %17 = tpu.matmul %15, %16, %cst_20 {dimension_numbers = #tpu.dot_dimension_numbers<[1], [0], [0], [1], [0, 0, 1, 1], [], []>} : vector<8x8xbf16>, vector<8x128xbf16>, vector<8x128xf32> -> vector<8x128xf32>
    %c0_21 = arith.constant 0 : index
    %c0_22 = arith.constant 0 : index
    %c0_23 = arith.constant 0 : index
    %18 = vector.load %arg6[%c0_21, %c0_22, %c0_23] : memref<9x8x128xf32, #tpu.memory_space<vmem>>, vector<1x8x128xf32>
    %19 = vector.shape_cast %18 : vector<1x8x128xf32> to vector<8x128xf32>
    %20 = arith.subf %17, %19 : vector<8x128xf32>
    %21 = vector.broadcast %4 : f32 to vector<8x128xf32>
    %22 = arith.mulf %21, %20 : vector<8x128xf32>
    %23 = arith.subf %3, %22 : vector<8x128xf32>
    %cst_24 = arith.constant 9.99999968E-21 : f32
    %24 = vector.broadcast %cst_24 : f32 to vector<8x128xf32>
    %25 = arith.maximumf %23, %24 : vector<8x128xf32>
    %26 = math.log %25 : vector<8x128xf32>
    %27 = vector.broadcast %7 : f32 to vector<8x128xf32>
    %28 = arith.mulf %27, %26 : vector<8x128xf32>
    %29 = math.exp %28 : vector<8x128xf32>
    %30 = vector.broadcast %11 : vector<8x1xf32> to vector<8x128xf32>
    %31 = arith.mulf %30, %29 : vector<8x128xf32>
    %32 = arith.subf %23, %31 : vector<8x128xf32>
    %33 = vector.broadcast %9 : vector<8x1xf32> to vector<8x128xf32>
    %34 = arith.subf %23, %33 : vector<8x128xf32>
    %cst_25 = arith.constant 0.000000e+00 : f32
    %35 = vector.broadcast %cst_25 : f32 to vector<8x128xf32>
    %36 = arith.cmpf ogt, %34, %35 : vector<8x128xf32>
    %cst_26 = arith.constant 0.000000e+00 : f32
    %37 = vector.broadcast %cst_26 : f32 to vector<8x128xf32>
    %38 = arith.select %36, %32, %37 : vector<8x128xi1>, vector<8x128xf32>
    %cst_27 = arith.constant 1.000000e+00 : f32
    %39 = vector.broadcast %cst_27 : f32 to vector<8x128xf32>
    %40 = arith.minimumf %38, %39 : vector<8x128xf32>
    %cst_28 = arith.constant 0.000000e+00 : f32
    %41 = vector.broadcast %cst_28 : f32 to vector<8x128xf32>
    %42 = arith.maximumf %40, %41 : vector<8x128xf32>
    %cst_29 = arith.constant dense<0.000000e+00> : vector<128xf32>
    %43 = vector.multi_reduction <add>, %42, %cst_29 [0] : vector<8x128xf32> to vector<128xf32>
    %44 = vector.shape_cast %43 : vector<128xf32> to vector<1x128xf32>
    %cst_30 = arith.constant 9.99999974E-5 : f32
    %45 = vector.broadcast %cst_30 : f32 to vector<1x128xf32>
    %46 = arith.addf %44, %45 : vector<1x128xf32>
    %47 = tpu.reciprocal %46 {approx = true} : vector<1x128xf32> -> vector<1x128xf32>
    %48 = vector.broadcast %47 : vector<1x128xf32> to vector<8x128xf32>
    %49 = arith.mulf %42, %48 : vector<8x128xf32>
    %50 = arith.truncf %49 : vector<8x128xf32> to vector<8x128xbf16>
    %cst_31 = arith.constant dense<0.000000e+00> : vector<8x8xf32>
    %51 = tpu.matmul %50, %0, %cst_31 {dimension_numbers = #tpu.dot_dimension_numbers<[1], [0], [0], [1], [0, 0, 1, 1], [], []>} : vector<8x128xbf16>, vector<128x8xbf16>, vector<8x8xf32> -> vector<8x8xf32>
    %cst_32 = arith.constant dense<0.000000e+00> : vector<32x8xf32>
    %52 = tpu.matmul %2, %51, %cst_32 {dimension_numbers = #tpu.dot_dimension_numbers<[1], [0], [0], [1], [0, 0, 1, 1], [], []>} : vector<32x8xf32>, vector<8x8xf32>, vector<32x8xf32> -> vector<32x8xf32>
    %53 = arith.subf %52, %1 : vector<32x8xf32>
    %54 = vector.broadcast %5 : f32 to vector<32x8xf32>
    %55 = arith.mulf %54, %53 : vector<32x8xf32>
    %56 = arith.subf %2, %55 : vector<32x8xf32>
    %cst_33 = arith.constant 0.000000e+00 : f32
    %57 = vector.broadcast %cst_33 : f32 to vector<32x8xf32>
    %58 = arith.maximumf %56, %57 : vector<32x8xf32>
    %c0_34 = arith.constant 0 : index
    %c0_35 = arith.constant 0 : index
    %c0_36 = arith.constant 0 : index
    %59 = vector.load %arg11[%c0_34, %c0_35, %c0_36] : memref<9x32x8xf32, #tpu.memory_space<vmem>>, vector<1x32x8xf32>
    %60 = vector.shape_cast %59 : vector<1x32x8xf32> to vector<32x8xf32>
    %61 = vector.shape_cast %58 : vector<32x8xf32> to vector<1x32x8xf32>
    tpu.vector_store %arg11[%c0_34, %c0_35, %c0_36], %61 {strides = array<i32>} : memref<9x32x8xf32, #tpu.memory_space<vmem>>, vector<1x32x8xf32>,
    %c0_37 = arith.constant 0 : index
    %c0_38 = arith.constant 0 : index
    %c0_39 = arith.constant 0 : index
    %62 = vector.load %arg12[%c0_37, %c0_38, %c0_39] : memref<9x8x128xf32, #tpu.memory_space<vmem>>, vector<1x8x128xf32>
    %63 = vector.shape_cast %62 : vector<1x8x128xf32> to vector<8x128xf32>
    %64 = vector.shape_cast %49 : vector<8x128xf32> to vector<1x8x128xf32>
    tpu.vector_store %arg12[%c0_37, %c0_38, %c0_39], %64 {strides = array<i32>} : memref<9x8x128xf32, #tpu.memory_space<vmem>>, vector<1x8x128xf32>,
    %c1 = arith.constant 1 : index
    %65 = memref.load %arg0[%c1] : memref<9xf32, #tpu.memory_space<smem>>
    %c1_40 = arith.constant 1 : index
    %66 = memref.load %arg1[%c1_40] : memref<9xf32, #tpu.memory_space<smem>>
    %c1_41 = arith.constant 1 : index
    %67 = memref.load %arg2[%c1_41] : memref<9xf32, #tpu.memory_space<smem>>
    %cst_42 = arith.constant 1.000000e+00 : f32
    %68 = arith.subf %67, %cst_42 : f32
    %c1_43 = arith.constant 1 : index
    %c0_44 = arith.constant 0 : index
    %c0_45 = arith.constant 0 : index
    %69 = vector.load %arg3[%c1_43, %c0_44, %c0_45] : memref<9x8x1xf32, #tpu.memory_space<vmem>>, vector<1x8x1xf32>
    %70 = vector.shape_cast %69 : vector<1x8x1xf32> to vector<8x1xf32>
    %c1_46 = arith.constant 1 : index
    %c0_47 = arith.constant 0 : index
    %c0_48 = arith.constant 0 : index
    %71 = vector.load %arg4[%c1_46, %c0_47, %c0_48] : memref<9x8x1xf32, #tpu.memory_space<vmem>>, vector<1x8x1xf32>
    %72 = vector.shape_cast %71 : vector<1x8x1xf32> to vector<8x1xf32>
    %c1_49 = arith.constant 1 : index
    %c0_50 = arith.constant 0 : index
    %c0_51 = arith.constant 0 : index
    %73 = vector.load %arg5[%c1_49, %c0_50, %c0_51] : memref<9x8x32xf32, #tpu.memory_space<vmem>>, vector<1x8x32xf32>
    %74 = vector.shape_cast %73 : vector<1x8x32xf32> to vector<8x32xf32>
    %cst_52 = arith.constant dense<0.000000e+00> : vector<8x8xf32>
    %75 = tpu.matmul %74, %58, %cst_52 {dimension_numbers = #tpu.dot_dimension_numbers<[1], [0], [0], [1], [0, 0, 1, 1], [], []>} : vector<8x32xf32>, vector<32x8xf32>, vector<8x8xf32> -> vector<8x8xf32>
    %76 = arith.truncf %75 : vector<8x8xf32> to vector<8x8xbf16>
    %77 = arith.truncf %49 : vector<8x128xf32> to vector<8x128xbf16>
    %cst_53 = arith.constant dense<0.000000e+00> : vector<8x128xf32>
    %78 = tpu.matmul %76, %77, %cst_53 {dimension_numbers = #tpu.dot_dimension_numbers<[1], [0], [0], [1], [0, 0, 1, 1], [], []>} : vector<8x8xbf16>, vector<8x128xbf16>, vector<8x128xf32> -> vector<8x128xf32>
    %c1_54 = arith.constant 1 : index
    %c0_55 = arith.constant 0 : index
    %c0_56 = arith.constant 0 : index
    %79 = vector.load %arg6[%c1_54, %c0_55, %c0_56] : memref<9x8x128xf32, #tpu.memory_space<vmem>>, vector<1x8x128xf32>
    %80 = vector.shape_cast %79 : vector<1x8x128xf32> to vector<8x128xf32>
    %81 = arith.subf %78, %80 : vector<8x128xf32>
    %82 = vector.broadcast %65 : f32 to vector<8x128xf32>
    %83 = arith.mulf %82, %81 : vector<8x128xf32>
    %84 = arith.subf %49, %83 : vector<8x128xf32>
    %cst_57 = arith.constant 9.99999968E-21 : f32
    %85 = vector.broadcast %cst_57 : f32 to vector<8x128xf32>
    %86 = arith.maximumf %84, %85 : vector<8x128xf32>
    %87 = math.log %86 : vector<8x128xf32>
    %88 = vector.broadcast %68 : f32 to vector<8x128xf32>
    %89 = arith.mulf %88, %87 : vector<8x128xf32>
    %90 = math.exp %89 : vector<8x128xf32>
    %91 = vector.broadcast %72 : vector<8x1xf32> to vector<8x128xf32>
    %92 = arith.mulf %91, %90 : vector<8x128xf32>
    %93 = arith.subf %84, %92 : vector<8x128xf32>
    %94 = vector.broadcast %70 : vector<8x1xf32> to vector<8x128xf32>
    %95 = arith.subf %84, %94 : vector<8x128xf32>
    %cst_58 = arith.constant 0.000000e+00 : f32
    %96 = vector.broadcast %cst_58 : f32 to vector<8x128xf32>
    %97 = arith.cmpf ogt, %95, %96 : vector<8x128xf32>
    %cst_59 = arith.constant 0.000000e+00 : f32
    %98 = vector.broadcast %cst_59 : f32 to vector<8x128xf32>
    %99 = arith.select %97, %93, %98 : vector<8x128xi1>, vector<8x128xf32>
    %cst_60 = arith.constant 1.000000e+00 : f32
    %100 = vector.broadcast %cst_60 : f32 to vector<8x128xf32>
    %101 = arith.minimumf %99, %100 : vector<8x128xf32>
    %cst_61 = arith.constant 0.000000e+00 : f32
    %102 = vector.broadcast %cst_61 : f32 to vector<8x128xf32>
    %103 = arith.maximumf %101, %102 : vector<8x128xf32>
    %cst_62 = arith.constant dense<0.000000e+00> : vector<128xf32>
    %104 = vector.multi_reduction <add>, %103, %cst_62 [0] : vector<8x128xf32> to vector<128xf32>
    %105 = vector.shape_cast %104 : vector<128xf32> to vector<1x128xf32>
    %cst_63 = arith.constant 9.99999974E-5 : f32
    %106 = vector.broadcast %cst_63 : f32 to vector<1x128xf32>
    %107 = arith.addf %105, %106 : vector<1x128xf32>
    %108 = tpu.reciprocal %107 {approx = true} : vector<1x128xf32> -> vector<1x128xf32>
    %109 = vector.broadcast %108 : vector<1x128xf32> to vector<8x128xf32>
    %110 = arith.mulf %103, %109 : vector<8x128xf32>
    %111 = arith.truncf %110 : vector<8x128xf32> to vector<8x128xbf16>
    %cst_64 = arith.constant dense<0.000000e+00> : vector<8x8xf32>
    %112 = tpu.matmul %111, %0, %cst_64 {dimension_numbers = #tpu.dot_dimension_numbers<[1], [0], [0], [1], [0, 0, 1, 1], [], []>} : vector<8x128xbf16>, vector<128x8xbf16>, vector<8x8xf32> -> vector<8x8xf32>
    %cst_65 = arith.constant dense<0.000000e+00> : vector<32x8xf32>
    %113 = tpu.matmul %58, %112, %cst_65 {dimension_numbers = #tpu.dot_dimension_numbers<[1], [0], [0], [1], [0, 0, 1, 1], [], []>} : vector<32x8xf32>, vector<8x8xf32>, vector<32x8xf32> -> vector<32x8xf32>
    %114 = arith.subf %113, %1 : vector<32x8xf32>
    %115 = vector.broadcast %66 : f32 to vector<32x8xf32>
    %116 = arith.mulf %115, %114 : vector<32x8xf32>
    %117 = arith.subf %58, %116 : vector<32x8xf32>
    %cst_66 = arith.constant 0.000000e+00 : f32
    %118 = vector.broadcast %cst_66 : f32 to vector<32x8xf32>
    %119 = arith.maximumf %117, %118 : vector<32x8xf32>
    %c1_67 = arith.constant 1 : index
    %c0_68 = arith.constant 0 : index
    %c0_69 = arith.constant 0 : index
    %120 = vector.load %arg11[%c1_67, %c0_68, %c0_69] : memref<9x32x8xf32, #tpu.memory_space<vmem>>, vector<1x32x8xf32>
    %121 = vector.shape_cast %120 : vector<1x32x8xf32> to vector<32x8xf32>
    %122 = vector.shape_cast %119 : vector<32x8xf32> to vector<1x32x8xf32>
    tpu.vector_store %arg11[%c1_67, %c0_68, %c0_69], %122 {strides = array<i32>} : memref<9x32x8xf32, #tpu.memory_space<vmem>>, vector<1x32x8xf32>,
    %c1_70 = arith.constant 1 : index
    %c0_71 = arith.constant 0 : index
    %c0_72 = arith.constant 0 : index
    %123 = vector.load %arg12[%c1_70, %c0_71, %c0_72] : memref<9x8x128xf32, #tpu.memory_space<vmem>>, vector<1x8x128xf32>
    %124 = vector.shape_cast %123 : vector<1x8x128xf32> to vector<8x128xf32>
    %125 = vector.shape_cast %110 : vector<8x128xf32> to vector<1x8x128xf32>
    tpu.vector_store %arg12[%c1_70, %c0_71, %c0_72], %125 {strides = array<i32>} : memref<9x8x128xf32, #tpu.memory_space<vmem>>, vector<1x8x128xf32>,
    %c2 = arith.constant 2 : index
    %126 = memref.load %arg0[%c2] : memref<9xf32, #tpu.memory_space<smem>>
    %c2_73 = arith.constant 2 : index
    %127 = memref.load %arg1[%c2_73] : memref<9xf32, #tpu.memory_space<smem>>
    %c2_74 = arith.constant 2 : index
    %128 = memref.load %arg2[%c2_74] : memref<9xf32, #tpu.memory_space<smem>>
    %cst_75 = arith.constant 1.000000e+00 : f32
    %129 = arith.subf %128, %cst_75 : f32
    %c2_76 = arith.constant 2 : index
    %c0_77 = arith.constant 0 : index
    %c0_78 = arith.constant 0 : index
    %130 = vector.load %arg3[%c2_76, %c0_77, %c0_78] : memref<9x8x1xf32, #tpu.memory_space<vmem>>, vector<1x8x1xf32>
    %131 = vector.shape_cast %130 : vector<1x8x1xf32> to vector<8x1xf32>
    %c2_79 = arith.constant 2 : index
    %c0_80 = arith.constant 0 : index
    %c0_81 = arith.constant 0 : index
    %132 = vector.load %arg4[%c2_79, %c0_80, %c0_81] : memref<9x8x1xf32, #tpu.memory_space<vmem>>, vector<1x8x1xf32>
    %133 = vector.shape_cast %132 : vector<1x8x1xf32> to vector<8x1xf32>
    %c2_82 = arith.constant 2 : index
    %c0_83 = arith.constant 0 : index
    %c0_84 = arith.constant 0 : index
    %134 = vector.load %arg5[%c2_82, %c0_83, %c0_84] : memref<9x8x32xf32, #tpu.memory_space<vmem>>, vector<1x8x32xf32>
    %135 = vector.shape_cast %134 : vector<1x8x32xf32> to vector<8x32xf32>
    %cst_85 = arith.constant dense<0.000000e+00> : vector<8x8xf32>
    %136 = tpu.matmul %135, %119, %cst_85 {dimension_numbers = #tpu.dot_dimension_numbers<[1], [0], [0], [1], [0, 0, 1, 1], [], []>} : vector<8x32xf32>, vector<32x8xf32>, vector<8x8xf32> -> vector<8x8xf32>
    %137 = arith.truncf %136 : vector<8x8xf32> to vector<8x8xbf16>
    %138 = arith.truncf %110 : vector<8x128xf32> to vector<8x128xbf16>
    %cst_86 = arith.constant dense<0.000000e+00> : vector<8x128xf32>
    %139 = tpu.matmul %137, %138, %cst_86 {dimension_numbers = #tpu.dot_dimension_numbers<[1], [0], [0], [1], [0, 0, 1, 1], [], []>} : vector<8x8xbf16>, vector<8x128xbf16>, vector<8x128xf32> -> vector<8x128xf32>
    %c2_87 = arith.constant 2 : index
    %c0_88 = arith.constant 0 : index
    %c0_89 = arith.constant 0 : index
    %140 = vector.load %arg6[%c2_87, %c0_88, %c0_89] : memref<9x8x128xf32, #tpu.memory_space<vmem>>, vector<1x8x128xf32>
    %141 = vector.shape_cast %140 : vector<1x8x128xf32> to vector<8x128xf32>
    %142 = arith.subf %139, %141 : vector<8x128xf32>
    %143 = vector.broadcast %126 : f32 to vector<8x128xf32>
    %144 = arith.mulf %143, %142 : vector<8x128xf32>
    %145 = arith.subf %110, %144 : vector<8x128xf32>
    %cst_90 = arith.constant 9.99999968E-21 : f32
    %146 = vector.broadcast %cst_90 : f32 to vector<8x128xf32>
    %147 = arith.maximumf %145, %146 : vector<8x128xf32>
    %148 = math.log %147 : vector<8x128xf32>
    %149 = vector.broadcast %129 : f32 to vector<8x128xf32>
    %150 = arith.mulf %149, %148 : vector<8x128xf32>
    %151 = math.exp %150 : vector<8x128xf32>
    %152 = vector.broadcast %133 : vector<8x1xf32> to vector<8x128xf32>
    %153 = arith.mulf %152, %151 : vector<8x128xf32>
    %154 = arith.subf %145, %153 : vector<8x128xf32>
    %155 = vector.broadcast %131 : vector<8x1xf32> to vector<8x128xf32>
    %156 = arith.subf %145, %155 : vector<8x128xf32>
    %cst_91 = arith.constant 0.000000e+00 : f32
    %157 = vector.broadcast %cst_91 : f32 to vector<8x128xf32>
    %158 = arith.cmpf ogt, %156, %157 : vector<8x128xf32>
    %cst_92 = arith.constant 0.000000e+00 : f32
    %159 = vector.broadcast %cst_92 : f32 to vector<8x128xf32>
    %160 = arith.select %158, %154, %159 : vector<8x128xi1>, vector<8x128xf32>
    %cst_93 = arith.constant 1.000000e+00 : f32
    %161 = vector.broadcast %cst_93 : f32 to vector<8x128xf32>
    %162 = arith.minimumf %160, %161 : vector<8x128xf32>
    %cst_94 = arith.constant 0.000000e+00 : f32
    %163 = vector.broadcast %cst_94 : f32 to vector<8x128xf32>
    %164 = arith.maximumf %162, %163 : vector<8x128xf32>
    %cst_95 = arith.constant dense<0.000000e+00> : vector<128xf32>
    %165 = vector.multi_reduction <add>, %164, %cst_95 [0] : vector<8x128xf32> to vector<128xf32>
    %166 = vector.shape_cast %165 : vector<128xf32> to vector<1x128xf32>
    %cst_96 = arith.constant 9.99999974E-5 : f32
    %167 = vector.broadcast %cst_96 : f32 to vector<1x128xf32>
    %168 = arith.addf %166, %167 : vector<1x128xf32>
    %169 = tpu.reciprocal %168 {approx = true} : vector<1x128xf32> -> vector<1x128xf32>
    %170 = vector.broadcast %169 : vector<1x128xf32> to vector<8x128xf32>
    %171 = arith.mulf %164, %170 : vector<8x128xf32>
    %172 = arith.truncf %171 : vector<8x128xf32> to vector<8x128xbf16>
    %cst_97 = arith.constant dense<0.000000e+00> : vector<8x8xf32>
    %173 = tpu.matmul %172, %0, %cst_97 {dimension_numbers = #tpu.dot_dimension_numbers<[1], [0], [0], [1], [0, 0, 1, 1], [], []>} : vector<8x128xbf16>, vector<128x8xbf16>, vector<8x8xf32> -> vector<8x8xf32>
    %cst_98 = arith.constant dense<0.000000e+00> : vector<32x8xf32>
    %174 = tpu.matmul %119, %173, %cst_98 {dimension_numbers = #tpu.dot_dimension_numbers<[1], [0], [0], [1], [0, 0, 1, 1], [], []>} : vector<32x8xf32>, vector<8x8xf32>, vector<32x8xf32> -> vector<32x8xf32>
    %175 = arith.subf %174, %1 : vector<32x8xf32>
    %176 = vector.broadcast %127 : f32 to vector<32x8xf32>
    %177 = arith.mulf %176, %175 : vector<32x8xf32>
    %178 = arith.subf %119, %177 : vector<32x8xf32>
    %cst_99 = arith.constant 0.000000e+00 : f32
    %179 = vector.broadcast %cst_99 : f32 to vector<32x8xf32>
    %180 = arith.maximumf %178, %179 : vector<32x8xf32>
    %c2_100 = arith.constant 2 : index
    %c0_101 = arith.constant 0 : index
    %c0_102 = arith.constant 0 : index
    %181 = vector.load %arg11[%c2_100, %c0_101, %c0_102] : memref<9x32x8xf32, #tpu.memory_space<vmem>>, vector<1x32x8xf32>
    %182 = vector.shape_cast %181 : vector<1x32x8xf32> to vector<32x8xf32>
    %183 = vector.shape_cast %180 : vector<32x8xf32> to vector<1x32x8xf32>
    tpu.vector_store %arg11[%c2_100, %c0_101, %c0_102], %183 {strides = array<i32>} : memref<9x32x8xf32, #tpu.memory_space<vmem>>, vector<1x32x8xf32>,
    %c2_103 = arith.constant 2 : index
    %c0_104 = arith.constant 0 : index
    %c0_105 = arith.constant 0 : index
    %184 = vector.load %arg12[%c2_103, %c0_104, %c0_105] : memref<9x8x128xf32, #tpu.memory_space<vmem>>, vector<1x8x128xf32>
    %185 = vector.shape_cast %184 : vector<1x8x128xf32> to vector<8x128xf32>
    %186 = vector.shape_cast %171 : vector<8x128xf32> to vector<1x8x128xf32>
    tpu.vector_store %arg12[%c2_103, %c0_104, %c0_105], %186 {strides = array<i32>} : memref<9x8x128xf32, #tpu.memory_space<vmem>>, vector<1x8x128xf32>,
    %c3 = arith.constant 3 : index
    %187 = memref.load %arg0[%c3] : memref<9xf32, #tpu.memory_space<smem>>
    %c3_106 = arith.constant 3 : index
    %188 = memref.load %arg1[%c3_106] : memref<9xf32, #tpu.memory_space<smem>>
    %c3_107 = arith.constant 3 : index
    %189 = memref.load %arg2[%c3_107] : memref<9xf32, #tpu.memory_space<smem>>
    %cst_108 = arith.constant 1.000000e+00 : f32
    %190 = arith.subf %189, %cst_108 : f32
    %c3_109 = arith.constant 3 : index
    %c0_110 = arith.constant 0 : index
    %c0_111 = arith.constant 0 : index
    %191 = vector.load %arg3[%c3_109, %c0_110, %c0_111] : memref<9x8x1xf32, #tpu.memory_space<vmem>>, vector<1x8x1xf32>
    %192 = vector.shape_cast %191 : vector<1x8x1xf32> to vector<8x1xf32>
    %c3_112 = arith.constant 3 : index
    %c0_113 = arith.constant 0 : index
    %c0_114 = arith.constant 0 : index
    %193 = vector.load %arg4[%c3_112, %c0_113, %c0_114] : memref<9x8x1xf32, #tpu.memory_space<vmem>>, vector<1x8x1xf32>
    %194 = vector.shape_cast %193 : vector<1x8x1xf32> to vector<8x1xf32>
    %c3_115 = arith.constant 3 : index
    %c0_116 = arith.constant 0 : index
    %c0_117 = arith.constant 0 : index
    %195 = vector.load %arg5[%c3_115, %c0_116, %c0_117] : memref<9x8x32xf32, #tpu.memory_space<vmem>>, vector<1x8x32xf32>
    %196 = vector.shape_cast %195 : vector<1x8x32xf32> to vector<8x32xf32>
    %cst_118 = arith.constant dense<0.000000e+00> : vector<8x8xf32>
    %197 = tpu.matmul %196, %180, %cst_118 {dimension_numbers = #tpu.dot_dimension_numbers<[1], [0], [0], [1], [0, 0, 1, 1], [], []>} : vector<8x32xf32>, vector<32x8xf32>, vector<8x8xf32> -> vector<8x8xf32>
    %198 = arith.truncf %197 : vector<8x8xf32> to vector<8x8xbf16>
    %199 = arith.truncf %171 : vector<8x128xf32> to vector<8x128xbf16>
    %cst_119 = arith.constant dense<0.000000e+00> : vector<8x128xf32>
    %200 = tpu.matmul %198, %199, %cst_119 {dimension_numbers = #tpu.dot_dimension_numbers<[1], [0], [0], [1], [0, 0, 1, 1], [], []>} : vector<8x8xbf16>, vector<8x128xbf16>, vector<8x128xf32> -> vector<8x128xf32>
    %c3_120 = arith.constant 3 : index
    %c0_121 = arith.constant 0 : index
    %c0_122 = arith.constant 0 : index
    %201 = vector.load %arg6[%c3_120, %c0_121, %c0_122] : memref<9x8x128xf32, #tpu.memory_space<vmem>>, vector<1x8x128xf32>
    %202 = vector.shape_cast %201 : vector<1x8x128xf32> to vector<8x128xf32>
    %203 = arith.subf %200, %202 : vector<8x128xf32>
    %204 = vector.broadcast %187 : f32 to vector<8x128xf32>
    %205 = arith.mulf %204, %203 : vector<8x128xf32>
    %206 = arith.subf %171, %205 : vector<8x128xf32>
    %cst_123 = arith.constant 9.99999968E-21 : f32
    %207 = vector.broadcast %cst_123 : f32 to vector<8x128xf32>
    %208 = arith.maximumf %206, %207 : vector<8x128xf32>
    %209 = math.log %208 : vector<8x128xf32>
    %210 = vector.broadcast %190 : f32 to vector<8x128xf32>
    %211 = arith.mulf %210, %209 : vector<8x128xf32>
    %212 = math.exp %211 : vector<8x128xf32>
    %213 = vector.broadcast %194 : vector<8x1xf32> to vector<8x128xf32>
    %214 = arith.mulf %213, %212 : vector<8x128xf32>
    %215 = arith.subf %206, %214 : vector<8x128xf32>
    %216 = vector.broadcast %192 : vector<8x1xf32> to vector<8x128xf32>
    %217 = arith.subf %206, %216 : vector<8x128xf32>
    %cst_124 = arith.constant 0.000000e+00 : f32
    %218 = vector.broadcast %cst_124 : f32 to vector<8x128xf32>
    %219 = arith.cmpf ogt, %217, %218 : vector<8x128xf32>
    %cst_125 = arith.constant 0.000000e+00 : f32
    %220 = vector.broadcast %cst_125 : f32 to vector<8x128xf32>
    %221 = arith.select %219, %215, %220 : vector<8x128xi1>, vector<8x128xf32>
    %cst_126 = arith.constant 1.000000e+00 : f32
    %222 = vector.broadcast %cst_126 : f32 to vector<8x128xf32>
    %223 = arith.minimumf %221, %222 : vector<8x128xf32>
    %cst_127 = arith.constant 0.000000e+00 : f32
    %224 = vector.broadcast %cst_127 : f32 to vector<8x128xf32>
    %225 = arith.maximumf %223, %224 : vector<8x128xf32>
    %cst_128 = arith.constant dense<0.000000e+00> : vector<128xf32>
    %226 = vector.multi_reduction <add>, %225, %cst_128 [0] : vector<8x128xf32> to vector<128xf32>
    %227 = vector.shape_cast %226 : vector<128xf32> to vector<1x128xf32>
    %cst_129 = arith.constant 9.99999974E-5 : f32
    %228 = vector.broadcast %cst_129 : f32 to vector<1x128xf32>
    %229 = arith.addf %227, %228 : vector<1x128xf32>
    %230 = tpu.reciprocal %229 {approx = true} : vector<1x128xf32> -> vector<1x128xf32>
    %231 = vector.broadcast %230 : vector<1x128xf32> to vector<8x128xf32>
    %232 = arith.mulf %225, %231 : vector<8x128xf32>
    %233 = arith.truncf %232 : vector<8x128xf32> to vector<8x128xbf16>
    %cst_130 = arith.constant dense<0.000000e+00> : vector<8x8xf32>
    %234 = tpu.matmul %233, %0, %cst_130 {dimension_numbers = #tpu.dot_dimension_numbers<[1], [0], [0], [1], [0, 0, 1, 1], [], []>} : vector<8x128xbf16>, vector<128x8xbf16>, vector<8x8xf32> -> vector<8x8xf32>
    %cst_131 = arith.constant dense<0.000000e+00> : vector<32x8xf32>
    %235 = tpu.matmul %180, %234, %cst_131 {dimension_numbers = #tpu.dot_dimension_numbers<[1], [0], [0], [1], [0, 0, 1, 1], [], []>} : vector<32x8xf32>, vector<8x8xf32>, vector<32x8xf32> -> vector<32x8xf32>
    %236 = arith.subf %235, %1 : vector<32x8xf32>
    %237 = vector.broadcast %188 : f32 to vector<32x8xf32>
    %238 = arith.mulf %237, %236 : vector<32x8xf32>
    %239 = arith.subf %180, %238 : vector<32x8xf32>
    %cst_132 = arith.constant 0.000000e+00 : f32
    %240 = vector.broadcast %cst_132 : f32 to vector<32x8xf32>
    %241 = arith.maximumf %239, %240 : vector<32x8xf32>
    %c3_133 = arith.constant 3 : index
    %c0_134 = arith.constant 0 : index
    %c0_135 = arith.constant 0 : index
    %242 = vector.load %arg11[%c3_133, %c0_134, %c0_135] : memref<9x32x8xf32, #tpu.memory_space<vmem>>, vector<1x32x8xf32>
    %243 = vector.shape_cast %242 : vector<1x32x8xf32> to vector<32x8xf32>
    %244 = vector.shape_cast %241 : vector<32x8xf32> to vector<1x32x8xf32>
    tpu.vector_store %arg11[%c3_133, %c0_134, %c0_135], %244 {strides = array<i32>} : memref<9x32x8xf32, #tpu.memory_space<vmem>>, vector<1x32x8xf32>,
    %c3_136 = arith.constant 3 : index
    %c0_137 = arith.constant 0 : index
    %c0_138 = arith.constant 0 : index
    %245 = vector.load %arg12[%c3_136, %c0_137, %c0_138] : memref<9x8x128xf32, #tpu.memory_space<vmem>>, vector<1x8x128xf32>
    %246 = vector.shape_cast %245 : vector<1x8x128xf32> to vector<8x128xf32>
    %247 = vector.shape_cast %232 : vector<8x128xf32> to vector<1x8x128xf32>
    tpu.vector_store %arg12[%c3_136, %c0_137, %c0_138], %247 {strides = array<i32>} : memref<9x8x128xf32, #tpu.memory_space<vmem>>, vector<1x8x128xf32>,
    %c4 = arith.constant 4 : index
    %248 = memref.load %arg0[%c4] : memref<9xf32, #tpu.memory_space<smem>>
    %c4_139 = arith.constant 4 : index
    %249 = memref.load %arg1[%c4_139] : memref<9xf32, #tpu.memory_space<smem>>
    %c4_140 = arith.constant 4 : index
    %250 = memref.load %arg2[%c4_140] : memref<9xf32, #tpu.memory_space<smem>>
    %cst_141 = arith.constant 1.000000e+00 : f32
    %251 = arith.subf %250, %cst_141 : f32
    %c4_142 = arith.constant 4 : index
    %c0_143 = arith.constant 0 : index
    %c0_144 = arith.constant 0 : index
    %252 = vector.load %arg3[%c4_142, %c0_143, %c0_144] : memref<9x8x1xf32, #tpu.memory_space<vmem>>, vector<1x8x1xf32>
    %253 = vector.shape_cast %252 : vector<1x8x1xf32> to vector<8x1xf32>
    %c4_145 = arith.constant 4 : index
    %c0_146 = arith.constant 0 : index
    %c0_147 = arith.constant 0 : index
    %254 = vector.load %arg4[%c4_145, %c0_146, %c0_147] : memref<9x8x1xf32, #tpu.memory_space<vmem>>, vector<1x8x1xf32>
    %255 = vector.shape_cast %254 : vector<1x8x1xf32> to vector<8x1xf32>
    %c4_148 = arith.constant 4 : index
    %c0_149 = arith.constant 0 : index
    %c0_150 = arith.constant 0 : index
    %256 = vector.load %arg5[%c4_148, %c0_149, %c0_150] : memref<9x8x32xf32, #tpu.memory_space<vmem>>, vector<1x8x32xf32>
    %257 = vector.shape_cast %256 : vector<1x8x32xf32> to vector<8x32xf32>
    %cst_151 = arith.constant dense<0.000000e+00> : vector<8x8xf32>
    %258 = tpu.matmul %257, %241, %cst_151 {dimension_numbers = #tpu.dot_dimension_numbers<[1], [0], [0], [1], [0, 0, 1, 1], [], []>} : vector<8x32xf32>, vector<32x8xf32>, vector<8x8xf32> -> vector<8x8xf32>
    %259 = arith.truncf %258 : vector<8x8xf32> to vector<8x8xbf16>
    %260 = arith.truncf %232 : vector<8x128xf32> to vector<8x128xbf16>
    %cst_152 = arith.constant dense<0.000000e+00> : vector<8x128xf32>
    %261 = tpu.matmul %259, %260, %cst_152 {dimension_numbers = #tpu.dot_dimension_numbers<[1], [0], [0], [1], [0, 0, 1, 1], [], []>} : vector<8x8xbf16>, vector<8x128xbf16>, vector<8x128xf32> -> vector<8x128xf32>
    %c4_153 = arith.constant 4 : index
    %c0_154 = arith.constant 0 : index
    %c0_155 = arith.constant 0 : index
    %262 = vector.load %arg6[%c4_153, %c0_154, %c0_155] : memref<9x8x128xf32, #tpu.memory_space<vmem>>, vector<1x8x128xf32>
    %263 = vector.shape_cast %262 : vector<1x8x128xf32> to vector<8x128xf32>
    %264 = arith.subf %261, %263 : vector<8x128xf32>
    %265 = vector.broadcast %248 : f32 to vector<8x128xf32>
    %266 = arith.mulf %265, %264 : vector<8x128xf32>
    %267 = arith.subf %232, %266 : vector<8x128xf32>
    %cst_156 = arith.constant 9.99999968E-21 : f32
    %268 = vector.broadcast %cst_156 : f32 to vector<8x128xf32>
    %269 = arith.maximumf %267, %268 : vector<8x128xf32>
    %270 = math.log %269 : vector<8x128xf32>
    %271 = vector.broadcast %251 : f32 to vector<8x128xf32>
    %272 = arith.mulf %271, %270 : vector<8x128xf32>
    %273 = math.exp %272 : vector<8x128xf32>
    %274 = vector.broadcast %255 : vector<8x1xf32> to vector<8x128xf32>
    %275 = arith.mulf %274, %273 : vector<8x128xf32>
    %276 = arith.subf %267, %275 : vector<8x128xf32>
    %277 = vector.broadcast %253 : vector<8x1xf32> to vector<8x128xf32>
    %278 = arith.subf %267, %277 : vector<8x128xf32>
    %cst_157 = arith.constant 0.000000e+00 : f32
    %279 = vector.broadcast %cst_157 : f32 to vector<8x128xf32>
    %280 = arith.cmpf ogt, %278, %279 : vector<8x128xf32>
    %cst_158 = arith.constant 0.000000e+00 : f32
    %281 = vector.broadcast %cst_158 : f32 to vector<8x128xf32>
    %282 = arith.select %280, %276, %281 : vector<8x128xi1>, vector<8x128xf32>
    %cst_159 = arith.constant 1.000000e+00 : f32
    %283 = vector.broadcast %cst_159 : f32 to vector<8x128xf32>
    %284 = arith.minimumf %282, %283 : vector<8x128xf32>
    %cst_160 = arith.constant 0.000000e+00 : f32
    %285 = vector.broadcast %cst_160 : f32 to vector<8x128xf32>
    %286 = arith.maximumf %284, %285 : vector<8x128xf32>
    %cst_161 = arith.constant dense<0.000000e+00> : vector<128xf32>
    %287 = vector.multi_reduction <add>, %286, %cst_161 [0] : vector<8x128xf32> to vector<128xf32>
    %288 = vector.shape_cast %287 : vector<128xf32> to vector<1x128xf32>
    %cst_162 = arith.constant 9.99999974E-5 : f32
    %289 = vector.broadcast %cst_162 : f32 to vector<1x128xf32>
    %290 = arith.addf %288, %289 : vector<1x128xf32>
    %291 = tpu.reciprocal %290 {approx = true} : vector<1x128xf32> -> vector<1x128xf32>
    %292 = vector.broadcast %291 : vector<1x128xf32> to vector<8x128xf32>
    %293 = arith.mulf %286, %292 : vector<8x128xf32>
    %294 = arith.truncf %293 : vector<8x128xf32> to vector<8x128xbf16>
    %cst_163 = arith.constant dense<0.000000e+00> : vector<8x8xf32>
    %295 = tpu.matmul %294, %0, %cst_163 {dimension_numbers = #tpu.dot_dimension_numbers<[1], [0], [0], [1], [0, 0, 1, 1], [], []>} : vector<8x128xbf16>, vector<128x8xbf16>, vector<8x8xf32> -> vector<8x8xf32>
    %cst_164 = arith.constant dense<0.000000e+00> : vector<32x8xf32>
    %296 = tpu.matmul %241, %295, %cst_164 {dimension_numbers = #tpu.dot_dimension_numbers<[1], [0], [0], [1], [0, 0, 1, 1], [], []>} : vector<32x8xf32>, vector<8x8xf32>, vector<32x8xf32> -> vector<32x8xf32>
    %297 = arith.subf %296, %1 : vector<32x8xf32>
    %298 = vector.broadcast %249 : f32 to vector<32x8xf32>
    %299 = arith.mulf %298, %297 : vector<32x8xf32>
    %300 = arith.subf %241, %299 : vector<32x8xf32>
    %cst_165 = arith.constant 0.000000e+00 : f32
    %301 = vector.broadcast %cst_165 : f32 to vector<32x8xf32>
    %302 = arith.maximumf %300, %301 : vector<32x8xf32>
    %c4_166 = arith.constant 4 : index
    %c0_167 = arith.constant 0 : index
    %c0_168 = arith.constant 0 : index
    %303 = vector.load %arg11[%c4_166, %c0_167, %c0_168] : memref<9x32x8xf32, #tpu.memory_space<vmem>>, vector<1x32x8xf32>
    %304 = vector.shape_cast %303 : vector<1x32x8xf32> to vector<32x8xf32>
    %305 = vector.shape_cast %302 : vector<32x8xf32> to vector<1x32x8xf32>
    tpu.vector_store %arg11[%c4_166, %c0_167, %c0_168], %305 {strides = array<i32>} : memref<9x32x8xf32, #tpu.memory_space<vmem>>, vector<1x32x8xf32>,
    %c4_169 = arith.constant 4 : index
    %c0_170 = arith.constant 0 : index
    %c0_171 = arith.constant 0 : index
    %306 = vector.load %arg12[%c4_169, %c0_170, %c0_171] : memref<9x8x128xf32, #tpu.memory_space<vmem>>, vector<1x8x128xf32>
    %307 = vector.shape_cast %306 : vector<1x8x128xf32> to vector<8x128xf32>
    %308 = vector.shape_cast %293 : vector<8x128xf32> to vector<1x8x128xf32>
    tpu.vector_store %arg12[%c4_169, %c0_170, %c0_171], %308 {strides = array<i32>} : memref<9x8x128xf32, #tpu.memory_space<vmem>>, vector<1x8x128xf32>,
    %c5 = arith.constant 5 : index
    %309 = memref.load %arg0[%c5] : memref<9xf32, #tpu.memory_space<smem>>
    %c5_172 = arith.constant 5 : index
    %310 = memref.load %arg1[%c5_172] : memref<9xf32, #tpu.memory_space<smem>>
    %c5_173 = arith.constant 5 : index
    %311 = memref.load %arg2[%c5_173] : memref<9xf32, #tpu.memory_space<smem>>
    %cst_174 = arith.constant 1.000000e+00 : f32
    %312 = arith.subf %311, %cst_174 : f32
    %c5_175 = arith.constant 5 : index
    %c0_176 = arith.constant 0 : index
    %c0_177 = arith.constant 0 : index
    %313 = vector.load %arg3[%c5_175, %c0_176, %c0_177] : memref<9x8x1xf32, #tpu.memory_space<vmem>>, vector<1x8x1xf32>
    %314 = vector.shape_cast %313 : vector<1x8x1xf32> to vector<8x1xf32>
    %c5_178 = arith.constant 5 : index
    %c0_179 = arith.constant 0 : index
    %c0_180 = arith.constant 0 : index
    %315 = vector.load %arg4[%c5_178, %c0_179, %c0_180] : memref<9x8x1xf32, #tpu.memory_space<vmem>>, vector<1x8x1xf32>
    %316 = vector.shape_cast %315 : vector<1x8x1xf32> to vector<8x1xf32>
    %c5_181 = arith.constant 5 : index
    %c0_182 = arith.constant 0 : index
    %c0_183 = arith.constant 0 : index
    %317 = vector.load %arg5[%c5_181, %c0_182, %c0_183] : memref<9x8x32xf32, #tpu.memory_space<vmem>>, vector<1x8x32xf32>
    %318 = vector.shape_cast %317 : vector<1x8x32xf32> to vector<8x32xf32>
    %cst_184 = arith.constant dense<0.000000e+00> : vector<8x8xf32>
    %319 = tpu.matmul %318, %302, %cst_184 {dimension_numbers = #tpu.dot_dimension_numbers<[1], [0], [0], [1], [0, 0, 1, 1], [], []>} : vector<8x32xf32>, vector<32x8xf32>, vector<8x8xf32> -> vector<8x8xf32>
    %320 = arith.truncf %319 : vector<8x8xf32> to vector<8x8xbf16>
    %321 = arith.truncf %293 : vector<8x128xf32> to vector<8x128xbf16>
    %cst_185 = arith.constant dense<0.000000e+00> : vector<8x128xf32>
    %322 = tpu.matmul %320, %321, %cst_185 {dimension_numbers = #tpu.dot_dimension_numbers<[1], [0], [0], [1], [0, 0, 1, 1], [], []>} : vector<8x8xbf16>, vector<8x128xbf16>, vector<8x128xf32> -> vector<8x128xf32>
    %c5_186 = arith.constant 5 : index
    %c0_187 = arith.constant 0 : index
    %c0_188 = arith.constant 0 : index
    %323 = vector.load %arg6[%c5_186, %c0_187, %c0_188] : memref<9x8x128xf32, #tpu.memory_space<vmem>>, vector<1x8x128xf32>
    %324 = vector.shape_cast %323 : vector<1x8x128xf32> to vector<8x128xf32>
    %325 = arith.subf %322, %324 : vector<8x128xf32>
    %326 = vector.broadcast %309 : f32 to vector<8x128xf32>
    %327 = arith.mulf %326, %325 : vector<8x128xf32>
    %328 = arith.subf %293, %327 : vector<8x128xf32>
    %cst_189 = arith.constant 9.99999968E-21 : f32
    %329 = vector.broadcast %cst_189 : f32 to vector<8x128xf32>
    %330 = arith.maximumf %328, %329 : vector<8x128xf32>
    %331 = math.log %330 : vector<8x128xf32>
    %332 = vector.broadcast %312 : f32 to vector<8x128xf32>
    %333 = arith.mulf %332, %331 : vector<8x128xf32>
    %334 = math.exp %333 : vector<8x128xf32>
    %335 = vector.broadcast %316 : vector<8x1xf32> to vector<8x128xf32>
    %336 = arith.mulf %335, %334 : vector<8x128xf32>
    %337 = arith.subf %328, %336 : vector<8x128xf32>
    %338 = vector.broadcast %314 : vector<8x1xf32> to vector<8x128xf32>
    %339 = arith.subf %328, %338 : vector<8x128xf32>
    %cst_190 = arith.constant 0.000000e+00 : f32
    %340 = vector.broadcast %cst_190 : f32 to vector<8x128xf32>
    %341 = arith.cmpf ogt, %339, %340 : vector<8x128xf32>
    %cst_191 = arith.constant 0.000000e+00 : f32
    %342 = vector.broadcast %cst_191 : f32 to vector<8x128xf32>
    %343 = arith.select %341, %337, %342 : vector<8x128xi1>, vector<8x128xf32>
    %cst_192 = arith.constant 1.000000e+00 : f32
    %344 = vector.broadcast %cst_192 : f32 to vector<8x128xf32>
    %345 = arith.minimumf %343, %344 : vector<8x128xf32>
    %cst_193 = arith.constant 0.000000e+00 : f32
    %346 = vector.broadcast %cst_193 : f32 to vector<8x128xf32>
    %347 = arith.maximumf %345, %346 : vector<8x128xf32>
    %cst_194 = arith.constant dense<0.000000e+00> : vector<128xf32>
    %348 = vector.multi_reduction <add>, %347, %cst_194 [0] : vector<8x128xf32> to vector<128xf32>
    %349 = vector.shape_cast %348 : vector<128xf32> to vector<1x128xf32>
    %cst_195 = arith.constant 9.99999974E-5 : f32
    %350 = vector.broadcast %cst_195 : f32 to vector<1x128xf32>
    %351 = arith.addf %349, %350 : vector<1x128xf32>
    %352 = tpu.reciprocal %351 {approx = true} : vector<1x128xf32> -> vector<1x128xf32>
    %353 = vector.broadcast %352 : vector<1x128xf32> to vector<8x128xf32>
    %354 = arith.mulf %347, %353 : vector<8x128xf32>
    %355 = arith.truncf %354 : vector<8x128xf32> to vector<8x128xbf16>
    %cst_196 = arith.constant dense<0.000000e+00> : vector<8x8xf32>
    %356 = tpu.matmul %355, %0, %cst_196 {dimension_numbers = #tpu.dot_dimension_numbers<[1], [0], [0], [1], [0, 0, 1, 1], [], []>} : vector<8x128xbf16>, vector<128x8xbf16>, vector<8x8xf32> -> vector<8x8xf32>
    %cst_197 = arith.constant dense<0.000000e+00> : vector<32x8xf32>
    %357 = tpu.matmul %302, %356, %cst_197 {dimension_numbers = #tpu.dot_dimension_numbers<[1], [0], [0], [1], [0, 0, 1, 1], [], []>} : vector<32x8xf32>, vector<8x8xf32>, vector<32x8xf32> -> vector<32x8xf32>
    %358 = arith.subf %357, %1 : vector<32x8xf32>
    %359 = vector.broadcast %310 : f32 to vector<32x8xf32>
    %360 = arith.mulf %359, %358 : vector<32x8xf32>
    %361 = arith.subf %302, %360 : vector<32x8xf32>
    %cst_198 = arith.constant 0.000000e+00 : f32
    %362 = vector.broadcast %cst_198 : f32 to vector<32x8xf32>
    %363 = arith.maximumf %361, %362 : vector<32x8xf32>
    %c5_199 = arith.constant 5 : index
    %c0_200 = arith.constant 0 : index
    %c0_201 = arith.constant 0 : index
    %364 = vector.load %arg11[%c5_199, %c0_200, %c0_201] : memref<9x32x8xf32, #tpu.memory_space<vmem>>, vector<1x32x8xf32>
    %365 = vector.shape_cast %364 : vector<1x32x8xf32> to vector<32x8xf32>
    %366 = vector.shape_cast %363 : vector<32x8xf32> to vector<1x32x8xf32>
    tpu.vector_store %arg11[%c5_199, %c0_200, %c0_201], %366 {strides = array<i32>} : memref<9x32x8xf32, #tpu.memory_space<vmem>>, vector<1x32x8xf32>,
    %c5_202 = arith.constant 5 : index
    %c0_203 = arith.constant 0 : index
    %c0_204 = arith.constant 0 : index
    %367 = vector.load %arg12[%c5_202, %c0_203, %c0_204] : memref<9x8x128xf32, #tpu.memory_space<vmem>>, vector<1x8x128xf32>
    %368 = vector.shape_cast %367 : vector<1x8x128xf32> to vector<8x128xf32>
    %369 = vector.shape_cast %354 : vector<8x128xf32> to vector<1x8x128xf32>
    tpu.vector_store %arg12[%c5_202, %c0_203, %c0_204], %369 {strides = array<i32>} : memref<9x8x128xf32, #tpu.memory_space<vmem>>, vector<1x8x128xf32>,
    %c6 = arith.constant 6 : index
    %370 = memref.load %arg0[%c6] : memref<9xf32, #tpu.memory_space<smem>>
    %c6_205 = arith.constant 6 : index
    %371 = memref.load %arg1[%c6_205] : memref<9xf32, #tpu.memory_space<smem>>
    %c6_206 = arith.constant 6 : index
    %372 = memref.load %arg2[%c6_206] : memref<9xf32, #tpu.memory_space<smem>>
    %cst_207 = arith.constant 1.000000e+00 : f32
    %373 = arith.subf %372, %cst_207 : f32
    %c6_208 = arith.constant 6 : index
    %c0_209 = arith.constant 0 : index
    %c0_210 = arith.constant 0 : index
    %374 = vector.load %arg3[%c6_208, %c0_209, %c0_210] : memref<9x8x1xf32, #tpu.memory_space<vmem>>, vector<1x8x1xf32>
    %375 = vector.shape_cast %374 : vector<1x8x1xf32> to vector<8x1xf32>
    %c6_211 = arith.constant 6 : index
    %c0_212 = arith.constant 0 : index
    %c0_213 = arith.constant 0 : index
    %376 = vector.load %arg4[%c6_211, %c0_212, %c0_213] : memref<9x8x1xf32, #tpu.memory_space<vmem>>, vector<1x8x1xf32>
    %377 = vector.shape_cast %376 : vector<1x8x1xf32> to vector<8x1xf32>
    %c6_214 = arith.constant 6 : index
    %c0_215 = arith.constant 0 : index
    %c0_216 = arith.constant 0 : index
    %378 = vector.load %arg5[%c6_214, %c0_215, %c0_216] : memref<9x8x32xf32, #tpu.memory_space<vmem>>, vector<1x8x32xf32>
    %379 = vector.shape_cast %378 : vector<1x8x32xf32> to vector<8x32xf32>
    %cst_217 = arith.constant dense<0.000000e+00> : vector<8x8xf32>
    %380 = tpu.matmul %379, %363, %cst_217 {dimension_numbers = #tpu.dot_dimension_numbers<[1], [0], [0], [1], [0, 0, 1, 1], [], []>} : vector<8x32xf32>, vector<32x8xf32>, vector<8x8xf32> -> vector<8x8xf32>
    %381 = arith.truncf %380 : vector<8x8xf32> to vector<8x8xbf16>
    %382 = arith.truncf %354 : vector<8x128xf32> to vector<8x128xbf16>
    %cst_218 = arith.constant dense<0.000000e+00> : vector<8x128xf32>
    %383 = tpu.matmul %381, %382, %cst_218 {dimension_numbers = #tpu.dot_dimension_numbers<[1], [0], [0], [1], [0, 0, 1, 1], [], []>} : vector<8x8xbf16>, vector<8x128xbf16>, vector<8x128xf32> -> vector<8x128xf32>
    %c6_219 = arith.constant 6 : index
    %c0_220 = arith.constant 0 : index
    %c0_221 = arith.constant 0 : index
    %384 = vector.load %arg6[%c6_219, %c0_220, %c0_221] : memref<9x8x128xf32, #tpu.memory_space<vmem>>, vector<1x8x128xf32>
    %385 = vector.shape_cast %384 : vector<1x8x128xf32> to vector<8x128xf32>
    %386 = arith.subf %383, %385 : vector<8x128xf32>
    %387 = vector.broadcast %370 : f32 to vector<8x128xf32>
    %388 = arith.mulf %387, %386 : vector<8x128xf32>
    %389 = arith.subf %354, %388 : vector<8x128xf32>
    %cst_222 = arith.constant 9.99999968E-21 : f32
    %390 = vector.broadcast %cst_222 : f32 to vector<8x128xf32>
    %391 = arith.maximumf %389, %390 : vector<8x128xf32>
    %392 = math.log %391 : vector<8x128xf32>
    %393 = vector.broadcast %373 : f32 to vector<8x128xf32>
    %394 = arith.mulf %393, %392 : vector<8x128xf32>
    %395 = math.exp %394 : vector<8x128xf32>
    %396 = vector.broadcast %377 : vector<8x1xf32> to vector<8x128xf32>
    %397 = arith.mulf %396, %395 : vector<8x128xf32>
    %398 = arith.subf %389, %397 : vector<8x128xf32>
    %399 = vector.broadcast %375 : vector<8x1xf32> to vector<8x128xf32>
    %400 = arith.subf %389, %399 : vector<8x128xf32>
    %cst_223 = arith.constant 0.000000e+00 : f32
    %401 = vector.broadcast %cst_223 : f32 to vector<8x128xf32>
    %402 = arith.cmpf ogt, %400, %401 : vector<8x128xf32>
    %cst_224 = arith.constant 0.000000e+00 : f32
    %403 = vector.broadcast %cst_224 : f32 to vector<8x128xf32>
    %404 = arith.select %402, %398, %403 : vector<8x128xi1>, vector<8x128xf32>
    %cst_225 = arith.constant 1.000000e+00 : f32
    %405 = vector.broadcast %cst_225 : f32 to vector<8x128xf32>
    %406 = arith.minimumf %404, %405 : vector<8x128xf32>
    %cst_226 = arith.constant 0.000000e+00 : f32
    %407 = vector.broadcast %cst_226 : f32 to vector<8x128xf32>
    %408 = arith.maximumf %406, %407 : vector<8x128xf32>
    %cst_227 = arith.constant dense<0.000000e+00> : vector<128xf32>
    %409 = vector.multi_reduction <add>, %408, %cst_227 [0] : vector<8x128xf32> to vector<128xf32>
    %410 = vector.shape_cast %409 : vector<128xf32> to vector<1x128xf32>
    %cst_228 = arith.constant 9.99999974E-5 : f32
    %411 = vector.broadcast %cst_228 : f32 to vector<1x128xf32>
    %412 = arith.addf %410, %411 : vector<1x128xf32>
    %413 = tpu.reciprocal %412 {approx = true} : vector<1x128xf32> -> vector<1x128xf32>
    %414 = vector.broadcast %413 : vector<1x128xf32> to vector<8x128xf32>
    %415 = arith.mulf %408, %414 : vector<8x128xf32>
    %416 = arith.truncf %415 : vector<8x128xf32> to vector<8x128xbf16>
    %cst_229 = arith.constant dense<0.000000e+00> : vector<8x8xf32>
    %417 = tpu.matmul %416, %0, %cst_229 {dimension_numbers = #tpu.dot_dimension_numbers<[1], [0], [0], [1], [0, 0, 1, 1], [], []>} : vector<8x128xbf16>, vector<128x8xbf16>, vector<8x8xf32> -> vector<8x8xf32>
    %cst_230 = arith.constant dense<0.000000e+00> : vector<32x8xf32>
    %418 = tpu.matmul %363, %417, %cst_230 {dimension_numbers = #tpu.dot_dimension_numbers<[1], [0], [0], [1], [0, 0, 1, 1], [], []>} : vector<32x8xf32>, vector<8x8xf32>, vector<32x8xf32> -> vector<32x8xf32>
    %419 = arith.subf %418, %1 : vector<32x8xf32>
    %420 = vector.broadcast %371 : f32 to vector<32x8xf32>
    %421 = arith.mulf %420, %419 : vector<32x8xf32>
    %422 = arith.subf %363, %421 : vector<32x8xf32>
    %cst_231 = arith.constant 0.000000e+00 : f32
    %423 = vector.broadcast %cst_231 : f32 to vector<32x8xf32>
    %424 = arith.maximumf %422, %423 : vector<32x8xf32>
    %c6_232 = arith.constant 6 : index
    %c0_233 = arith.constant 0 : index
    %c0_234 = arith.constant 0 : index
    %425 = vector.load %arg11[%c6_232, %c0_233, %c0_234] : memref<9x32x8xf32, #tpu.memory_space<vmem>>, vector<1x32x8xf32>
    %426 = vector.shape_cast %425 : vector<1x32x8xf32> to vector<32x8xf32>
    %427 = vector.shape_cast %424 : vector<32x8xf32> to vector<1x32x8xf32>
    tpu.vector_store %arg11[%c6_232, %c0_233, %c0_234], %427 {strides = array<i32>} : memref<9x32x8xf32, #tpu.memory_space<vmem>>, vector<1x32x8xf32>,
    %c6_235 = arith.constant 6 : index
    %c0_236 = arith.constant 0 : index
    %c0_237 = arith.constant 0 : index
    %428 = vector.load %arg12[%c6_235, %c0_236, %c0_237] : memref<9x8x128xf32, #tpu.memory_space<vmem>>, vector<1x8x128xf32>
    %429 = vector.shape_cast %428 : vector<1x8x128xf32> to vector<8x128xf32>
    %430 = vector.shape_cast %415 : vector<8x128xf32> to vector<1x8x128xf32>
    tpu.vector_store %arg12[%c6_235, %c0_236, %c0_237], %430 {strides = array<i32>} : memref<9x8x128xf32, #tpu.memory_space<vmem>>, vector<1x8x128xf32>,
    %c7 = arith.constant 7 : index
    %431 = memref.load %arg0[%c7] : memref<9xf32, #tpu.memory_space<smem>>
    %c7_238 = arith.constant 7 : index
    %432 = memref.load %arg1[%c7_238] : memref<9xf32, #tpu.memory_space<smem>>
    %c7_239 = arith.constant 7 : index
    %433 = memref.load %arg2[%c7_239] : memref<9xf32, #tpu.memory_space<smem>>
    %cst_240 = arith.constant 1.000000e+00 : f32
    %434 = arith.subf %433, %cst_240 : f32
    %c7_241 = arith.constant 7 : index
    %c0_242 = arith.constant 0 : index
    %c0_243 = arith.constant 0 : index
    %435 = vector.load %arg3[%c7_241, %c0_242, %c0_243] : memref<9x8x1xf32, #tpu.memory_space<vmem>>, vector<1x8x1xf32>
    %436 = vector.shape_cast %435 : vector<1x8x1xf32> to vector<8x1xf32>
    %c7_244 = arith.constant 7 : index
    %c0_245 = arith.constant 0 : index
    %c0_246 = arith.constant 0 : index
    %437 = vector.load %arg4[%c7_244, %c0_245, %c0_246] : memref<9x8x1xf32, #tpu.memory_space<vmem>>, vector<1x8x1xf32>
    %438 = vector.shape_cast %437 : vector<1x8x1xf32> to vector<8x1xf32>
    %c7_247 = arith.constant 7 : index
    %c0_248 = arith.constant 0 : index
    %c0_249 = arith.constant 0 : index
    %439 = vector.load %arg5[%c7_247, %c0_248, %c0_249] : memref<9x8x32xf32, #tpu.memory_space<vmem>>, vector<1x8x32xf32>
    %440 = vector.shape_cast %439 : vector<1x8x32xf32> to vector<8x32xf32>
    %cst_250 = arith.constant dense<0.000000e+00> : vector<8x8xf32>
    %441 = tpu.matmul %440, %424, %cst_250 {dimension_numbers = #tpu.dot_dimension_numbers<[1], [0], [0], [1], [0, 0, 1, 1], [], []>} : vector<8x32xf32>, vector<32x8xf32>, vector<8x8xf32> -> vector<8x8xf32>
    %442 = arith.truncf %441 : vector<8x8xf32> to vector<8x8xbf16>
    %443 = arith.truncf %415 : vector<8x128xf32> to vector<8x128xbf16>
    %cst_251 = arith.constant dense<0.000000e+00> : vector<8x128xf32>
    %444 = tpu.matmul %442, %443, %cst_251 {dimension_numbers = #tpu.dot_dimension_numbers<[1], [0], [0], [1], [0, 0, 1, 1], [], []>} : vector<8x8xbf16>, vector<8x128xbf16>, vector<8x128xf32> -> vector<8x128xf32>
    %c7_252 = arith.constant 7 : index
    %c0_253 = arith.constant 0 : index
    %c0_254 = arith.constant 0 : index
    %445 = vector.load %arg6[%c7_252, %c0_253, %c0_254] : memref<9x8x128xf32, #tpu.memory_space<vmem>>, vector<1x8x128xf32>
    %446 = vector.shape_cast %445 : vector<1x8x128xf32> to vector<8x128xf32>
    %447 = arith.subf %444, %446 : vector<8x128xf32>
    %448 = vector.broadcast %431 : f32 to vector<8x128xf32>
    %449 = arith.mulf %448, %447 : vector<8x128xf32>
    %450 = arith.subf %415, %449 : vector<8x128xf32>
    %cst_255 = arith.constant 9.99999968E-21 : f32
    %451 = vector.broadcast %cst_255 : f32 to vector<8x128xf32>
    %452 = arith.maximumf %450, %451 : vector<8x128xf32>
    %453 = math.log %452 : vector<8x128xf32>
    %454 = vector.broadcast %434 : f32 to vector<8x128xf32>
    %455 = arith.mulf %454, %453 : vector<8x128xf32>
    %456 = math.exp %455 : vector<8x128xf32>
    %457 = vector.broadcast %438 : vector<8x1xf32> to vector<8x128xf32>
    %458 = arith.mulf %457, %456 : vector<8x128xf32>
    %459 = arith.subf %450, %458 : vector<8x128xf32>
    %460 = vector.broadcast %436 : vector<8x1xf32> to vector<8x128xf32>
    %461 = arith.subf %450, %460 : vector<8x128xf32>
    %cst_256 = arith.constant 0.000000e+00 : f32
    %462 = vector.broadcast %cst_256 : f32 to vector<8x128xf32>
    %463 = arith.cmpf ogt, %461, %462 : vector<8x128xf32>
    %cst_257 = arith.constant 0.000000e+00 : f32
    %464 = vector.broadcast %cst_257 : f32 to vector<8x128xf32>
    %465 = arith.select %463, %459, %464 : vector<8x128xi1>, vector<8x128xf32>
    %cst_258 = arith.constant 1.000000e+00 : f32
    %466 = vector.broadcast %cst_258 : f32 to vector<8x128xf32>
    %467 = arith.minimumf %465, %466 : vector<8x128xf32>
    %cst_259 = arith.constant 0.000000e+00 : f32
    %468 = vector.broadcast %cst_259 : f32 to vector<8x128xf32>
    %469 = arith.maximumf %467, %468 : vector<8x128xf32>
    %cst_260 = arith.constant dense<0.000000e+00> : vector<128xf32>
    %470 = vector.multi_reduction <add>, %469, %cst_260 [0] : vector<8x128xf32> to vector<128xf32>
    %471 = vector.shape_cast %470 : vector<128xf32> to vector<1x128xf32>
    %cst_261 = arith.constant 9.99999974E-5 : f32
    %472 = vector.broadcast %cst_261 : f32 to vector<1x128xf32>
    %473 = arith.addf %471, %472 : vector<1x128xf32>
    %474 = tpu.reciprocal %473 {approx = true} : vector<1x128xf32> -> vector<1x128xf32>
    %475 = vector.broadcast %474 : vector<1x128xf32> to vector<8x128xf32>
    %476 = arith.mulf %469, %475 : vector<8x128xf32>
    %477 = arith.truncf %476 : vector<8x128xf32> to vector<8x128xbf16>
    %cst_262 = arith.constant dense<0.000000e+00> : vector<8x8xf32>
    %478 = tpu.matmul %477, %0, %cst_262 {dimension_numbers = #tpu.dot_dimension_numbers<[1], [0], [0], [1], [0, 0, 1, 1], [], []>} : vector<8x128xbf16>, vector<128x8xbf16>, vector<8x8xf32> -> vector<8x8xf32>
    %cst_263 = arith.constant dense<0.000000e+00> : vector<32x8xf32>
    %479 = tpu.matmul %424, %478, %cst_263 {dimension_numbers = #tpu.dot_dimension_numbers<[1], [0], [0], [1], [0, 0, 1, 1], [], []>} : vector<32x8xf32>, vector<8x8xf32>, vector<32x8xf32> -> vector<32x8xf32>
    %480 = arith.subf %479, %1 : vector<32x8xf32>
    %481 = vector.broadcast %432 : f32 to vector<32x8xf32>
    %482 = arith.mulf %481, %480 : vector<32x8xf32>
    %483 = arith.subf %424, %482 : vector<32x8xf32>
    %cst_264 = arith.constant 0.000000e+00 : f32
    %484 = vector.broadcast %cst_264 : f32 to vector<32x8xf32>
    %485 = arith.maximumf %483, %484 : vector<32x8xf32>
    %c7_265 = arith.constant 7 : index
    %c0_266 = arith.constant 0 : index
    %c0_267 = arith.constant 0 : index
    %486 = vector.load %arg11[%c7_265, %c0_266, %c0_267] : memref<9x32x8xf32, #tpu.memory_space<vmem>>, vector<1x32x8xf32>
    %487 = vector.shape_cast %486 : vector<1x32x8xf32> to vector<32x8xf32>
    %488 = vector.shape_cast %485 : vector<32x8xf32> to vector<1x32x8xf32>
    tpu.vector_store %arg11[%c7_265, %c0_266, %c0_267], %488 {strides = array<i32>} : memref<9x32x8xf32, #tpu.memory_space<vmem>>, vector<1x32x8xf32>,
    %c7_268 = arith.constant 7 : index
    %c0_269 = arith.constant 0 : index
    %c0_270 = arith.constant 0 : index
    %489 = vector.load %arg12[%c7_268, %c0_269, %c0_270] : memref<9x8x128xf32, #tpu.memory_space<vmem>>, vector<1x8x128xf32>
    %490 = vector.shape_cast %489 : vector<1x8x128xf32> to vector<8x128xf32>
    %491 = vector.shape_cast %476 : vector<8x128xf32> to vector<1x8x128xf32>
    tpu.vector_store %arg12[%c7_268, %c0_269, %c0_270], %491 {strides = array<i32>} : memref<9x8x128xf32, #tpu.memory_space<vmem>>, vector<1x8x128xf32>,
    %c8 = arith.constant 8 : index
    %492 = memref.load %arg0[%c8] : memref<9xf32, #tpu.memory_space<smem>>
    %c8_271 = arith.constant 8 : index
    %493 = memref.load %arg1[%c8_271] : memref<9xf32, #tpu.memory_space<smem>>
    %c8_272 = arith.constant 8 : index
    %494 = memref.load %arg2[%c8_272] : memref<9xf32, #tpu.memory_space<smem>>
    %cst_273 = arith.constant 1.000000e+00 : f32
    %495 = arith.subf %494, %cst_273 : f32
    %c8_274 = arith.constant 8 : index
    %c0_275 = arith.constant 0 : index
    %c0_276 = arith.constant 0 : index
    %496 = vector.load %arg3[%c8_274, %c0_275, %c0_276] : memref<9x8x1xf32, #tpu.memory_space<vmem>>, vector<1x8x1xf32>
    %497 = vector.shape_cast %496 : vector<1x8x1xf32> to vector<8x1xf32>
    %c8_277 = arith.constant 8 : index
    %c0_278 = arith.constant 0 : index
    %c0_279 = arith.constant 0 : index
    %498 = vector.load %arg4[%c8_277, %c0_278, %c0_279] : memref<9x8x1xf32, #tpu.memory_space<vmem>>, vector<1x8x1xf32>
    %499 = vector.shape_cast %498 : vector<1x8x1xf32> to vector<8x1xf32>
    %c8_280 = arith.constant 8 : index
    %c0_281 = arith.constant 0 : index
    %c0_282 = arith.constant 0 : index
    %500 = vector.load %arg5[%c8_280, %c0_281, %c0_282] : memref<9x8x32xf32, #tpu.memory_space<vmem>>, vector<1x8x32xf32>
    %501 = vector.shape_cast %500 : vector<1x8x32xf32> to vector<8x32xf32>
    %cst_283 = arith.constant dense<0.000000e+00> : vector<8x8xf32>
    %502 = tpu.matmul %501, %485, %cst_283 {dimension_numbers = #tpu.dot_dimension_numbers<[1], [0], [0], [1], [0, 0, 1, 1], [], []>} : vector<8x32xf32>, vector<32x8xf32>, vector<8x8xf32> -> vector<8x8xf32>
    %503 = arith.truncf %502 : vector<8x8xf32> to vector<8x8xbf16>
    %504 = arith.truncf %476 : vector<8x128xf32> to vector<8x128xbf16>
    %cst_284 = arith.constant dense<0.000000e+00> : vector<8x128xf32>
    %505 = tpu.matmul %503, %504, %cst_284 {dimension_numbers = #tpu.dot_dimension_numbers<[1], [0], [0], [1], [0, 0, 1, 1], [], []>} : vector<8x8xbf16>, vector<8x128xbf16>, vector<8x128xf32> -> vector<8x128xf32>
    %c8_285 = arith.constant 8 : index
    %c0_286 = arith.constant 0 : index
    %c0_287 = arith.constant 0 : index
    %506 = vector.load %arg6[%c8_285, %c0_286, %c0_287] : memref<9x8x128xf32, #tpu.memory_space<vmem>>, vector<1x8x128xf32>
    %507 = vector.shape_cast %506 : vector<1x8x128xf32> to vector<8x128xf32>
    %508 = arith.subf %505, %507 : vector<8x128xf32>
    %509 = vector.broadcast %492 : f32 to vector<8x128xf32>
    %510 = arith.mulf %509, %508 : vector<8x128xf32>
    %511 = arith.subf %476, %510 : vector<8x128xf32>
    %cst_288 = arith.constant 9.99999968E-21 : f32
    %512 = vector.broadcast %cst_288 : f32 to vector<8x128xf32>
    %513 = arith.maximumf %511, %512 : vector<8x128xf32>
    %514 = math.log %513 : vector<8x128xf32>
    %515 = vector.broadcast %495 : f32 to vector<8x128xf32>
    %516 = arith.mulf %515, %514 : vector<8x128xf32>
    %517 = math.exp %516 : vector<8x128xf32>
    %518 = vector.broadcast %499 : vector<8x1xf32> to vector<8x128xf32>
    %519 = arith.mulf %518, %517 : vector<8x128xf32>
    %520 = arith.subf %511, %519 : vector<8x128xf32>
    %521 = vector.broadcast %497 : vector<8x1xf32> to vector<8x128xf32>
    %522 = arith.subf %511, %521 : vector<8x128xf32>
    %cst_289 = arith.constant 0.000000e+00 : f32
    %523 = vector.broadcast %cst_289 : f32 to vector<8x128xf32>
    %524 = arith.cmpf ogt, %522, %523 : vector<8x128xf32>
    %cst_290 = arith.constant 0.000000e+00 : f32
    %525 = vector.broadcast %cst_290 : f32 to vector<8x128xf32>
    %526 = arith.select %524, %520, %525 : vector<8x128xi1>, vector<8x128xf32>
    %cst_291 = arith.constant 1.000000e+00 : f32
    %527 = vector.broadcast %cst_291 : f32 to vector<8x128xf32>
    %528 = arith.minimumf %526, %527 : vector<8x128xf32>
    %cst_292 = arith.constant 0.000000e+00 : f32
    %529 = vector.broadcast %cst_292 : f32 to vector<8x128xf32>
    %530 = arith.maximumf %528, %529 : vector<8x128xf32>
    %cst_293 = arith.constant dense<0.000000e+00> : vector<128xf32>
    %531 = vector.multi_reduction <add>, %530, %cst_293 [0] : vector<8x128xf32> to vector<128xf32>
    %532 = vector.shape_cast %531 : vector<128xf32> to vector<1x128xf32>
    %cst_294 = arith.constant 9.99999974E-5 : f32
    %533 = vector.broadcast %cst_294 : f32 to vector<1x128xf32>
    %534 = arith.addf %532, %533 : vector<1x128xf32>
    %535 = tpu.reciprocal %534 {approx = true} : vector<1x128xf32> -> vector<1x128xf32>
    %536 = vector.broadcast %535 : vector<1x128xf32> to vector<8x128xf32>
    %537 = arith.mulf %530, %536 : vector<8x128xf32>
    %538 = arith.truncf %537 : vector<8x128xf32> to vector<8x128xbf16>
    %cst_295 = arith.constant dense<0.000000e+00> : vector<8x8xf32>
    %539 = tpu.matmul %538, %0, %cst_295 {dimension_numbers = #tpu.dot_dimension_numbers<[1], [0], [0], [1], [0, 0, 1, 1], [], []>} : vector<8x128xbf16>, vector<128x8xbf16>, vector<8x8xf32> -> vector<8x8xf32>
    %cst_296 = arith.constant dense<0.000000e+00> : vector<32x8xf32>
    %540 = tpu.matmul %485, %539, %cst_296 {dimension_numbers = #tpu.dot_dimension_numbers<[1], [0], [0], [1], [0, 0, 1, 1], [], []>} : vector<32x8xf32>, vector<8x8xf32>, vector<32x8xf32> -> vector<32x8xf32>
    %541 = arith.subf %540, %1 : vector<32x8xf32>
    %542 = vector.broadcast %493 : f32 to vector<32x8xf32>
    %543 = arith.mulf %542, %541 : vector<32x8xf32>
    %544 = arith.subf %485, %543 : vector<32x8xf32>
    %cst_297 = arith.constant 0.000000e+00 : f32
    %545 = vector.broadcast %cst_297 : f32 to vector<32x8xf32>
    %546 = arith.maximumf %544, %545 : vector<32x8xf32>
    %c8_298 = arith.constant 8 : index
    %c0_299 = arith.constant 0 : index
    %c0_300 = arith.constant 0 : index
    %547 = vector.load %arg11[%c8_298, %c0_299, %c0_300] : memref<9x32x8xf32, #tpu.memory_space<vmem>>, vector<1x32x8xf32>
    %548 = vector.shape_cast %547 : vector<1x32x8xf32> to vector<32x8xf32>
    %549 = vector.shape_cast %546 : vector<32x8xf32> to vector<1x32x8xf32>
    tpu.vector_store %arg11[%c8_298, %c0_299, %c0_300], %549 {strides = array<i32>} : memref<9x32x8xf32, #tpu.memory_space<vmem>>, vector<1x32x8xf32>,
    %c8_301 = arith.constant 8 : index
    %c0_302 = arith.constant 0 : index
    %c0_303 = arith.constant 0 : index
    %550 = vector.load %arg12[%c8_301, %c0_302, %c0_303] : memref<9x8x128xf32, #tpu.memory_space<vmem>>, vector<1x8x128xf32>
    %551 = vector.shape_cast %550 : vector<1x8x128xf32> to vector<8x128xf32>
    %552 = vector.shape_cast %537 : vector<8x128xf32> to vector<1x8x128xf32>
    tpu.vector_store %arg12[%c8_301, %c0_302, %c0_303], %552 {strides = array<i32>} : memref<9x8x128xf32, #tpu.memory_space<vmem>>, vector<1x8x128xf32>,
    return
  }
}

</mosaic_0001>

<llo_original>
// kernel: mul.32
$region0: #{mul.32}
  #allocation0 [shape = 's32[1]{0}', space=sflag, size = 0x4, scoped, tag = 'scoped memory for mul.32']
  %s0 = inlined_call_operand.vmem [shape: f32[9], index: 0, kind: input, shape index: {}]
  %s1 = inlined_call_operand.vmem [shape: f32[9,8,1], index: 1, kind: output, shape index: {}]
  // Predicated region
  $region2: #{mul.32} parent=0 // pred_check
    _
  $region3: #{mul.32} parent=0 // pred_check_branch
    %3 = sbr.rel (0) target = $region5
  $region4: #{mul.32} parent=0 // pred_region
    _
  $region5: #{mul.32} parent=0 // pred_fallthru
    _
  %v4 = vld [vmem:[%s0] ss:$0 sm:$0xff]
  %5 = vst [vmem:[%s1] sm:$0xff] %v4

// kernel: mul.33
$region0: #{mul.33}
  #allocation0 [shape = 's32[1]{0}', space=sflag, size = 0x4, scoped, tag = 'scoped memory for mul.33']
  %s0 = inlined_call_operand.vmem [shape: f32[9,8,1], index: 0, kind: input, shape index: {}]
  %s1 = inlined_call_operand.vmem [shape: f32[9,8,1], index: 1, kind: input, shape index: {}]
  %s2 = inlined_call_operand.vmem [shape: f32[9,8,1], index: 2, kind: output, shape index: {}]
  %v3 = vld [vmem:[%s0] sm:$0x1]
  %v4 = vld [vmem:[%s1] sm:$0x1]
  %5 = xla_tuple %v3, %v4
  %6 = xla_tuple %5
  %v7 = vmul.f32 %v3, %v4
  %8 = xla_tuple %v7
  %9 = vst [vmem:[%s2] sm:$0x1] %v7
  %s10 = scalar_lea.vmem %s0, 1
  %v11 = vld [vmem:[%s10] sm:$0x1]
  %s12 = scalar_lea.vmem %s1, 1
  %v13 = vld [vmem:[%s12] sm:$0x1]
  %14 = xla_tuple %v11, %v13
  %15 = xla_tuple %14
  %v16 = vmul.f32 %v11, %v13
  %17 = xla_tuple %v16
  %s18 = scalar_lea.vmem %s2, 1
  %19 = vst [vmem:[%s18] sm:$0x1] %v16
  %s20 = scalar_lea.vmem %s0, 2
  %v21 = vld [vmem:[%s20] sm:$0x1]
  %s22 = scalar_lea.vmem %s1, 2
  %v23 = vld [vmem:[%s22] sm:$0x1]
  %24 = xla_tuple %v21, %v23
  %25 = xla_tuple %24
  %v26 = vmul.f32 %v21, %v23
  %27 = xla_tuple %v26
  %s28 = scalar_lea.vmem %s2, 2
  %29 = vst [vmem:[%s28] sm:$0x1] %v26
  %s30 = scalar_lea.vmem %s0, 3
  %v31 = vld [vmem:[%s30] sm:$0x1]
  %s32 = scalar_lea.vmem %s1, 3
  %v33 = vld [vmem:[%s32] sm:$0x1]
  %34 = xla_tuple %v31, %v33
  %35 = xla_tuple %34
  %v36 = vmul.f32 %v31, %v33
  %37 = xla_tuple %v36
  %s38 = scalar_lea.vmem %s2, 3
  %39 = vst [vmem:[%s38] sm:$0x1] %v36
  %s40 = scalar_lea.vmem %s0, 4
  %v41 = vld [vmem:[%s40] sm:$0x1]
  %s42 = scalar_lea.vmem %s1, 4
  %v43 = vld [vmem:[%s42] sm:$0x1]
  %44 = xla_tuple %v41, %v43
  %45 = xla_tuple %44
  %v46 = vmul.f32 %v41, %v43
  %47 = xla_tuple %v46
  %s48 = scalar_lea.vmem %s2, 4
  %49 = vst [vmem:[%s48] sm:$0x1] %v46
  %s50 = scalar_lea.vmem %s0, 5
  %v51 = vld [vmem:[%s50] sm:$0x1]
  %s52 = scalar_lea.vmem %s1, 5
  %v53 = vld [vmem:[%s52] sm:$0x1]
  %54 = xla_tuple %v51, %v53
  %55 = xla_tuple %54
  %v56 = vmul.f32 %v51, %v53
  %57 = xla_tuple %v56
  %s58 = scalar_lea.vmem %s2, 5
  %59 = vst [vmem:[%s58] sm:$0x1] %v56
  %s60 = scalar_lea.vmem %s0, 6
  %v61 = vld [vmem:[%s60] sm:$0x1]
  %s62 = scalar_lea.vmem %s1, 6
  %v63 = vld [vmem:[%s62] sm:$0x1]
  %64 = xla_tuple %v61, %v63
  %65 = xla_tuple %64
  %v66 = vmul.f32 %v61, %v63
  %67 = xla_tuple %v66
  %s68 = scalar_lea.vmem %s2, 6
  %69 = vst [vmem:[%s68] sm:$0x1] %v66
  %s70 = scalar_lea.vmem %s0, 7
  %v71 = vld [vmem:[%s70] sm:$0x1]
  %s72 = scalar_lea.vmem %s1, 7
  %v73 = vld [vmem:[%s72] sm:$0x1]
  %74 = xla_tuple %v71, %v73
  %75 = xla_tuple %74
  %v76 = vmul.f32 %v71, %v73
  %77 = xla_tuple %v76
  %s78 = scalar_lea.vmem %s2, 7
  %79 = vst [vmem:[%s78] sm:$0x1] %v76

// kernel: l1nmf_forward.1
$region0: #{l1nmf_forward.1}
  #allocation0 [shape = 'u32[]', space=smem, size = 0x4, offset = 0x4, fixed_abs, tag = 'smem constant byte address 0x4 - core index']
  #allocation1 [shape = 'u32[144,128]{1,0:T(1,128)}', space=vmem, size = 0x12000, scoped, tag = 'internal scratch']
  %s0 = inlined_call_operand.vmem [shape: f32[9], index: 0, kind: input, shape index: {}]
  %s1 = inlined_call_operand.vmem [shape: f32[9], index: 1, kind: input, shape index: {}]
  %s2 = inlined_call_operand.vmem [shape: f32[9], index: 2, kind: input, shape index: {}]
  %s3 = inlined_call_operand.vmem [shape: f32[9,8,1], index: 3, kind: input, shape index: {}]
  %s4 = inlined_call_operand.vmem [shape: f32[9,8,1], index: 4, kind: input, shape index: {}]
  %s5 = inlined_call_operand.vmem [shape: f32[9,8,32], index: 5, kind: input, shape index: {}]
  %s6 = inlined_call_operand.vmem [shape: f32[9,8,128], index: 6, kind: input, shape index: {}]
  %s7 = inlined_call_operand.vmem [shape: bf16[128,8], index: 7, kind: input, shape index: {}]
  %s8 = inlined_call_operand.vmem [shape: f32[32,8], index: 8, kind: input, shape index: {}]
  %s9 = inlined_call_operand.vmem [shape: f32[32,8], index: 9, kind: input, shape index: {}]
  %s10 = inlined_call_operand.vmem [shape: f32[8,128], index: 10, kind: input, shape index: {}]
  %s11 = inlined_call_operand.vmem [shape: f32[9,32,8], index: 11, kind: output, shape index: {0}]
  %s12 = inlined_call_operand.vmem [shape: f32[9,8,128], index: 12, kind: output, shape index: {1}]
  %13 = xla_tuple %s11, %s12
  %s14 = sld [smem:[#allocation0]]
  $region74: #{l1nmf_forward.1} parent=0
    _
  %s16 = ssub.s32 1, %s14
  %s17 = scalar_select 0, %s16, %s14
  $region1: #{l1nmf_forward.1} parent=0
    #allocation2 [shape = 'u8[512]{0}', space=smem, size = 0x200, scoped, tag = 'input window, operand 0, single buffered']
    #allocation3 [shape = 's32[1]{0}', space=sflag, size = 0x4, scoped, tag = 'scoped memory for l1nmf_forward.1']
    #allocation4 [shape = 'u8[512]{0}', space=smem, size = 0x200, scoped, tag = 'input window, operand 1, single buffered']
    #allocation5 [shape = 's32[1]{0}', space=sflag, size = 0x4, scoped, tag = 'scoped memory for l1nmf_forward.1']
    #allocation6 [shape = 'u8[512]{0}', space=smem, size = 0x200, scoped, tag = 'input window, operand 2, single buffered']
    %18 = vsyncpa [#allocation3], 0
    %19 = vsyncpa [#allocation5], 0
    // Predicated region
    $region2: #{l1nmf_forward.1} parent=1 // pred_check
      _
    $region3: #{l1nmf_forward.1} parent=1 // pred_check_branch
      %21 = sbr.rel (0) target = $region5
    $region4: #{l1nmf_forward.1} parent=1 // pred_region
      %s23 = ssub.s32 16, 16
      %24 = vsyncadd [#allocation3], %s23
      %s26 = sshll.u32 %s0, 4
      %s27 = int_to_ptr.vmem [resolvable:$true] %s26
      %29 = dma.vmem_to_smem %s27, 16, [#allocation2], [#allocation3]
    $region5: #{l1nmf_forward.1} parent=1 // pred_fallthru
      _
    // Predicated region
    $region6: #{l1nmf_forward.1} parent=1 // pred_check
      _
    $region7: #{l1nmf_forward.1} parent=1 // pred_check_branch
      %31 = sbr.rel (0) target = $region9
    $region8: #{l1nmf_forward.1} parent=1 // pred_region
      %s33 = ssub.s32 16, 16
      %34 = vsyncadd [#allocation5], %s33
      %s36 = sshll.u32 %s1, 4
      %s37 = int_to_ptr.vmem [resolvable:$true] %s36
      %39 = dma.vmem_to_smem %s37, 16, [#allocation4], [#allocation5]
    $region9: #{l1nmf_forward.1} parent=1 // pred_fallthru
      _
    // Predicated region
    $region10: #{l1nmf_forward.1} parent=1 // pred_check
      _
    $region11: #{l1nmf_forward.1} parent=1 // pred_check_branch
      %41 = sbr.rel (0) target = $region13
    $region12: #{l1nmf_forward.1} parent=1 // pred_region
      %s43 = ssub.s32 16, 16
      %44 = vsyncadd [#allocation5], %s43
      %s46 = sshll.u32 %s2, 4
      %s47 = int_to_ptr.vmem [resolvable:$true] %s46
      %49 = dma.vmem_to_smem %s47, 16, [#allocation6], [#allocation5]
    $region13: #{l1nmf_forward.1} parent=1 // pred_fallthru
      _
    // Predicated region
    $region14: #{l1nmf_forward.1} parent=1 // pred_check
      _
    $region15: #{l1nmf_forward.1} parent=1 // pred_check_branch
      %51 = sbr.rel (0) target = $region17
    $region16: #{l1nmf_forward.1} parent=1 // pred_region
      _
    $region17: #{l1nmf_forward.1} parent=1 // pred_fallthru
      _
    // Predicated region
    $region18: #{l1nmf_forward.1} parent=1 // pred_check
      _
    $region19: #{l1nmf_forward.1} parent=1 // pred_check_branch
      %53 = sbr.rel (0) target = $region21
    $region20: #{l1nmf_forward.1} parent=1 // pred_region
      _
    $region21: #{l1nmf_forward.1} parent=1 // pred_fallthru
      _
    // Predicated region
    $region22: #{l1nmf_forward.1} parent=1 // pred_check
      _
    $region23: #{l1nmf_forward.1} parent=1 // pred_check_branch
      %55 = sbr.rel (0) target = $region25
    $region24: #{l1nmf_forward.1} parent=1 // pred_region
      _
    $region25: #{l1nmf_forward.1} parent=1 // pred_fallthru
      _
    // Predicated region
    $region26: #{l1nmf_forward.1} parent=1 // pred_check
      _
    $region27: #{l1nmf_forward.1} parent=1 // pred_check_branch
      %57 = sbr.rel (0) target = $region29
    $region28: #{l1nmf_forward.1} parent=1 // pred_region
      _
    $region29: #{l1nmf_forward.1} parent=1 // pred_fallthru
      _
    // Predicated region
    $region30: #{l1nmf_forward.1} parent=1 // pred_check
      _
    $region31: #{l1nmf_forward.1} parent=1 // pred_check_branch
      %59 = sbr.rel (0) target = $region33
    $region32: #{l1nmf_forward.1} parent=1 // pred_region
      _
    $region33: #{l1nmf_forward.1} parent=1 // pred_fallthru
      _
    // Predicated region
    $region34: #{l1nmf_forward.1} parent=1 // pred_check
      _
    $region35: #{l1nmf_forward.1} parent=1 // pred_check_branch
      %61 = sbr.rel (0) target = $region37
    $region36: #{l1nmf_forward.1} parent=1 // pred_region
      _
    $region37: #{l1nmf_forward.1} parent=1 // pred_fallthru
      _
    // Predicated region
    $region38: #{l1nmf_forward.1} parent=1 // pred_check
      _
    $region39: #{l1nmf_forward.1} parent=1 // pred_check_branch
      %63 = sbr.rel (0) target = $region41
    $region40: #{l1nmf_forward.1} parent=1 // pred_region
      _
    $region41: #{l1nmf_forward.1} parent=1 // pred_fallthru
      _
    // Predicated region
    $region42: #{l1nmf_forward.1} parent=1 // pred_check
      _
    $region43: #{l1nmf_forward.1} parent=1 // pred_check_branch
      %65 = sbr.rel (0) target = $region45
    $region44: #{l1nmf_forward.1} parent=1 // pred_region
      _
    $region45: #{l1nmf_forward.1} parent=1 // pred_fallthru
      _
    // Predicated region
    $region46: #{l1nmf_forward.1} parent=1 // pred_check
      _
    $region47: #{l1nmf_forward.1} parent=1 // pred_check_branch
      %67 = sbr.rel (0) target = $region49
    $region48: #{l1nmf_forward.1} parent=1 // pred_region
      %68 = dma.done [#allocation3], 16
    $region49: #{l1nmf_forward.1} parent=1 // pred_fallthru
      _
    // Predicated region
    $region50: #{l1nmf_forward.1} parent=1 // pred_check
      _
    $region51: #{l1nmf_forward.1} parent=1 // pred_check_branch
      %70 = sbr.rel (0) target = $region53
    $region52: #{l1nmf_forward.1} parent=1 // pred_region
      %71 = dma.done [#allocation5], 16
    $region53: #{l1nmf_forward.1} parent=1 // pred_fallthru
      _
    // Predicated region
    $region54: #{l1nmf_forward.1} parent=1 // pred_check
      _
    $region55: #{l1nmf_forward.1} parent=1 // pred_check_branch
      %73 = sbr.rel (0) target = $region57
    $region56: #{l1nmf_forward.1} parent=1 // pred_region
      %74 = dma.done [#allocation5], 16
    $region57: #{l1nmf_forward.1} parent=1 // pred_fallthru
      _
    %75 = sfence
    %v77 = vld [vmem:[%s7] sm:$0xf]
    %v78 = vld [vmem:[%s7 + $0x4] sm:$0xf]
    %v79 = vld [vmem:[%s7 + $0x8] sm:$0xf]
    %v80 = vld [vmem:[%s7 + $0xc] sm:$0xf]
    %v81 = vld [vmem:[%s7 + $0x10] sm:$0xf]
    %v82 = vld [vmem:[%s7 + $0x14] sm:$0xf]
    %v83 = vld [vmem:[%s7 + $0x18] sm:$0xf]
    %v84 = vld [vmem:[%s7 + $0x1c] sm:$0xf]
    %v85 = vld [vmem:[%s7 + $0x20] sm:$0xf]
    %v86 = vld [vmem:[%s7 + $0x24] sm:$0xf]
    %v87 = vld [vmem:[%s7 + $0x28] sm:$0xf]
    %v88 = vld [vmem:[%s7 + $0x2c] sm:$0xf]
    %v89 = vld [vmem:[%s7 + $0x30] sm:$0xf]
    %v90 = vld [vmem:[%s7 + $0x34] sm:$0xf]
    %v91 = vld [vmem:[%s7 + $0x38] sm:$0xf]
    %v92 = vld [vmem:[%s7 + $0x3c] sm:$0xf]
    %v93 = vld [vmem:[%s8] sm:$0xff]
    %v94 = vld [vmem:[%s8 + $0x8] sm:$0xff]
    %v95 = vld [vmem:[%s8 + $0x10] sm:$0xff]
    %v96 = vld [vmem:[%s8 + $0x18] sm:$0xff]
    %v97 = vld [vmem:[%s9] sm:$0xff]
    %v98 = vld [vmem:[%s9 + $0x8] sm:$0xff]
    %v99 = vld [vmem:[%s9 + $0x10] sm:$0xff]
    %v100 = vld [vmem:[%s9 + $0x18] sm:$0xff]
    %v101 = vld [vmem:[%s10] sm:$0xff]
    %s102 = sld [smem:[#allocation2]]
    %s103 = sld [smem:[#allocation4]]
    %s104 = sld [smem:[#allocation6]]
    %s105 = ssub.f32 %s104, 1.0
    %v106 = vld [vmem:[%s3] sm:$0xff]
    %v107 = vld [vmem:[%s4] sm:$0xff]
    %v108 = vld [vmem:[%s5] sm:$0xff]
    %vm109 = vcmask 261120
    %v111 = vsel %vm109, %v108, 0
    %113 = vmatprep.subr.mxu0 0.0
    %114 = vmatpush1.msra.mxu0 %v97
    %115 = vmatprep.subr.mxu0 0.0
    %116 = vmatpush1.msra.mxu0 %v98
    %117 = vmatprep.subr.mxu0 0.0
    %118 = vmatpush1.msra.mxu0 %v99
    %119 = vmatprep.subr.mxu0 0.0
    %120 = vmatpush1.msra.mxu0 %v100
    %121 = vmatprep.subr.mxu0 0.0
    %122 = vmatpush1.msra.mxu0 0.0
    %123 = vmatprep.subr.mxu0 0.0
    %124 = vmatpush1.msra.mxu0 0.0
    %125 = vmatprep.subr.mxu0 0.0
    %126 = vmatpush1.msra.mxu0 0.0
    %127 = vmatprep.subr.mxu0 0.0
    %128 = vmatpush1.msra.mxu0 0.0
    %129 = vmatprep.subr.mxu0 0.0
    %130 = vmatpush1.msra.mxu0 0.0
    %131 = vmatprep.subr.mxu0 0.0
    %132 = vmatpush1.msra.mxu0 0.0
    %133 = vmatprep.subr.mxu0 0.0
    %134 = vmatpush1.msra.mxu0 0.0
    %135 = vmatprep.subr.mxu0 0.0
    %136 = vmatpush1.msra.mxu0 0.0
    %137 = vmatprep.subr.mxu0 0.0
    %138 = vmatpush1.msra.mxu0 0.0
    %139 = vmatprep.subr.mxu0 0.0
    %140 = vmatpush1.msra.mxu0 0.0
    %141 = vmatprep.subr.mxu0 0.0
    %142 = vmatpush1.msra.mxu0 0.0
    %143 = vmatprep.subr.mxu0 0.0
    %144 = vmatpush1.msra.mxu0 0.0
    %145 = vmatprep.subr.mxu0 0.0
    %146 = vmatpush1.msra.mxu0 0.0
    %147 = vmatprep.subr.mxu0 0.0
    %148 = vmatpush1.msra.mxu0 0.0
    %149 = vmatprep.subr.mxu0 0.0
    %150 = vmatpush1.msra.mxu0 0.0
    %151 = vmatprep.subr.mxu0 0.0
    %152 = vmatpush1.msra.mxu0 0.0
    %153 = vmatprep.subr.mxu0 0.0
    %154 = vmatpush1.msra.mxu0 0.0
    %155 = vmatprep.subr.mxu0 0.0
    %156 = vmatpush1.msra.mxu0 0.0
    %157 = vmatprep.subr.mxu0 0.0
    %158 = vmatpush1.msra.mxu0 0.0
    %159 = vmatprep.subr.mxu0 0.0
    %160 = vmatpush1.msra.mxu0 0.0
    %161 = vmatprep.subr.mxu0 0.0
    %162 = vmatpush1.msra.mxu0 0.0
    %163 = vmatprep.subr.mxu0 0.0
    %164 = vmatpush1.msra.mxu0 0.0
    %165 = vmatprep.subr.mxu0 0.0
    %166 = vmatpush1.msra.mxu0 0.0
    %167 = vmatprep.subr.mxu0 0.0
    %168 = vmatpush1.msra.mxu0 0.0
    %169 = vmatprep.subr.mxu0 0.0
    %170 = vmatpush1.msra.mxu0 0.0
    %171 = vmatprep.subr.mxu0 0.0
    %172 = vmatpush1.msra.mxu0 0.0
    %173 = vmatprep.subr.mxu0 0.0
    %174 = vmatpush1.msra.mxu0 0.0
    %175 = vmatprep.subr.mxu0 0.0
    %176 = vmatpush1.msra.mxu0 0.0
    %177 = vmatprep.mubr.f32.mxu0 0.0
    %178 = vmatmul.mubr.f32.gmra.mrb[0].mxu0 %v111
    %v179 = vpop.f32.mrb[0].mxu0
    %v180 = vadd.f32 0.0, %v179
    %v181 = vpop.f32.mrb[0].mxu0
    %182 = vdwg.mxu0
    %v183 = vpack.c.bf16 %v180, %v180
    %v184 = vpack.c.bf16 %v101, %v101
    %vm185 = vcmask 64512
    %v187 = vsel %vm185, %v183, 0
    %vm189 = vcmask 1043456
    %v191 = vsel %vm189, %v184, 0
    %193 = vmatprep.subr.bf16.mxu0 0
    %194 = vmatpush1.bf16.msra.mxu0 %v191
    %195 = vmatprep.subr.bf16.mxu0 0
    %196 = vmatpush1.bf16.msra.mxu0 0
    %197 = vmatprep.subr.bf16.mxu0 0
    %198 = vmatpush1.bf16.msra.mxu0 0
    %199 = vmatprep.subr.bf16.mxu0 0
    %200 = vmatpush1.bf16.msra.mxu0 0
    %201 = vmatprep.subr.bf16.mxu0 0
    %202 = vmatpush1.bf16.msra.mxu0 0
    %203 = vmatprep.subr.bf16.mxu0 0
    %204 = vmatpush1.bf16.msra.mxu0 0
    %205 = vmatprep.subr.bf16.mxu0 0
    %206 = vmatpush1.bf16.msra.mxu0 0
    %207 = vmatprep.subr.bf16.mxu0 0
    %208 = vmatpush1.bf16.msra.mxu0 0
    %209 = vmatprep.subr.bf16.mxu0 0
    %210 = vmatpush1.bf16.msra.mxu0 0
    %211 = vmatprep.subr.bf16.mxu0 0
    %212 = vmatpush1.bf16.msra.mxu0 0
    %213 = vmatprep.subr.bf16.mxu0 0
    %214 = vmatpush1.bf16.msra.mxu0 0
    %215 = vmatprep.subr.bf16.mxu0 0
    %216 = vmatpush1.bf16.msra.mxu0 0
    %217 = vmatprep.subr.bf16.mxu0 0
    %218 = vmatpush1.bf16.msra.mxu0 0
    %219 = vmatprep.subr.bf16.mxu0 0
    %220 = vmatpush1.bf16.msra.mxu0 0
    %221 = vmatprep.subr.bf16.mxu0 0
    %222 = vmatpush1.bf16.msra.mxu0 0
    %223 = vmatprep.subr.bf16.mxu0 0
    %224 = vmatpush1.bf16.msra.mxu0 0
    %225 = vmatprep.mubr.bf16.mxu0 0
    %226 = vmatmul.mubr.bf16.gmra.mrb[0].mxu0 %v187
    %v227 = vpop.f32.mrb[0].mxu0
    %v228 = vadd.f32 0.0, %v227
    %v229 = vpop.f32.mrb[0].mxu0
    %v230 = vpop.f32.mrb[0].mxu0
    %v231 = vpop.f32.mrb[0].mxu0
    %232 = vdwg.mxu0
    %v233 = vld [vmem:[%s6] sm:$0xff]
    %v234 = vsub.f32 %v228, %v233
    %v235 = vstv %s102
    %v236 = vmul.f32 %v235, %v234
    %v237 = vsub.f32 %v101, %v236
    %v238 = vmax.f32 %v237, 1e-20
    %v239 = vlog2.pop %v238
    %v240 = vmul.f32 %v239, 0.6931472
    %v241 = vstv %s105
    %v242 = vmul.f32 %v241, %v240
    %v243 = vmul.f32 %v242, 1.442695
    %v244 = vpow.pop %v243
    %246 = vset.pattern.permute.xlu0 0
    %247 = vperm.xlu0 %246, %v107
    %v248 = vpop.permute.xlu0 %247
    %v250 = vmul.f32 %v248, %v244
    %v251 = vsub.f32 %v237, %v250
    %253 = vset.pattern.permute.xlu0 0
    %254 = vperm.xlu0 %253, %v106
    %v255 = vpop.permute.xlu0 %254
    %v257 = vsub.f32 %v237, %v255
    %vm258 = vcmp.gt.f32.partialorder %v257, 0.0
    %v259 = vsel %vm258, %v251, 0.0
    %v260 = vmin.f32 %v259, 1.0
    %v261 = vmax.f32 %v260, 0.0
    %v262 = vrot.slane %v261, 4
    %v263 = vadd.f32 %v261, %v262
    %v264 = vrot.slane %v263, 2
    %v265 = vadd.f32 %v263, %v264
    %v266 = vrot.slane %v265, 1
    %v267 = vadd.f32 %v265, %v266
    %v268 = vadd.f32 %v267, 0.0001
    %v269 = vrcp.pop %v268
    %v270 = vmul.f32 %v261, %v269
    %v271 = vpack.c.bf16 %v270, %v270
    %v288 = vunpack.c.l.b16 %v77
    %v289 = vunpack.c.l.b16 %v78
    %v290 = vunpack.c.l.b16 %v79
    %v291 = vunpack.c.l.b16 %v80
    %v292 = vunpack.c.l.b16 %v81
    %v293 = vunpack.c.l.b16 %v82
    %v294 = vunpack.c.l.b16 %v83
    %v295 = vunpack.c.l.b16 %v84
    %v296 = vunpack.c.l.b16 %v85
    %v297 = vunpack.c.l.b16 %v86
    %v298 = vunpack.c.l.b16 %v87
    %v299 = vunpack.c.l.b16 %v88
    %v300 = vunpack.c.l.b16 %v89
    %v301 = vunpack.c.l.b16 %v90
    %v302 = vunpack.c.l.b16 %v91
    %v303 = vunpack.c.l.b16 %v92
    %v304 = vpack.c.b16 %v289, %v288
    %v305 = vpack.c.b16 %v291, %v290
    %v306 = vpack.c.b16 %v293, %v292
    %v307 = vpack.c.b16 %v295, %v294
    %v308 = vpack.c.b16 %v297, %v296
    %v309 = vpack.c.b16 %v299, %v298
    %v310 = vpack.c.b16 %v301, %v300
    %v311 = vpack.c.b16 %v303, %v302
    %320 = vmatprep.subr.bf16.mxu0 0
    %321 = vmatpush1.bf16.msra.mxu0 %v304
    %322 = vmatprep.subr.bf16.mxu0 0
    %323 = vmatpush1.bf16.msra.mxu0 %v305
    %324 = vmatprep.subr.bf16.mxu0 0
    %325 = vmatpush1.bf16.msra.mxu0 %v306
    %326 = vmatprep.subr.bf16.mxu0 0
    %327 = vmatpush1.bf16.msra.mxu0 %v307
    %328 = vmatprep.subr.bf16.mxu0 0
    %329 = vmatpush1.bf16.msra.mxu0 %v308
    %330 = vmatprep.subr.bf16.mxu0 0
    %331 = vmatpush1.bf16.msra.mxu0 %v309
    %332 = vmatprep.subr.bf16.mxu0 0
    %333 = vmatpush1.bf16.msra.mxu0 %v310
    %334 = vmatprep.subr.bf16.mxu0 0
    %335 = vmatpush1.bf16.msra.mxu0 %v311
    %336 = vmatprep.subr.bf16.mxu0 0
    %337 = vmatpush1.bf16.msra.mxu0 0
    %338 = vmatprep.subr.bf16.mxu0 0
    %339 = vmatpush1.bf16.msra.mxu0 0
    %340 = vmatprep.subr.bf16.mxu0 0
    %341 = vmatpush1.bf16.msra.mxu0 0
    %342 = vmatprep.subr.bf16.mxu0 0
    %343 = vmatpush1.bf16.msra.mxu0 0
    %344 = vmatprep.subr.bf16.mxu0 0
    %345 = vmatpush1.bf16.msra.mxu0 0
    %346 = vmatprep.subr.bf16.mxu0 0
    %347 = vmatpush1.bf16.msra.mxu0 0
    %348 = vmatprep.subr.bf16.mxu0 0
    %349 = vmatpush1.bf16.msra.mxu0 0
    %350 = vmatprep.subr.bf16.mxu0 0
    %351 = vmatpush1.bf16.msra.mxu0 0
    %352 = vmatprep.mubr.bf16.mxu0 0
    %353 = vmatmul.mubr.bf16.gmra.mrb[0].mxu0 %v271
    %v354 = vpop.f32.mrb[0].mxu0
    %v355 = vadd.f32 0.0, %v354
    %v356 = vpop.f32.mrb[0].mxu0
    %v357 = vpop.f32.mrb[0].mxu0
    %v358 = vpop.f32.mrb[0].mxu0
    %359 = vdwg.mxu0
    %v361 = vsel %vm185, %v97, 0
    %v364 = vsel %vm185, %v98, 0
    %v367 = vsel %vm185, %v99, 0
    %v370 = vsel %vm185, %v100, 0
    %372 = vmatprep.subr.mxu0 0.0
    %373 = vmatpush1.msra.mxu0 %v355
    %374 = vmatprep.subr.mxu0 0.0
    %375 = vmatpush1.msra.mxu0 0.0
    %376 = vmatprep.subr.mxu0 0.0
    %377 = vmatpush1.msra.mxu0 0.0
    %378 = vmatprep.subr.mxu0 0.0
    %379 = vmatpush1.msra.mxu0 0.0
    %380 = vmatprep.subr.mxu0 0.0
    %381 = vmatpush1.msra.mxu0 0.0
    %382 = vmatprep.subr.mxu0 0.0
    %383 = vmatpush1.msra.mxu0 0.0
    %384 = vmatprep.subr.mxu0 0.0
    %385 = vmatpush1.msra.mxu0 0.0
    %386 = vmatprep.subr.mxu0 0.0
    %387 = vmatpush1.msra.mxu0 0.0
    %388 = vmatprep.subr.mxu0 0.0
    %389 = vmatpush1.msra.mxu0 0.0
    %390 = vmatprep.subr.mxu0 0.0
    %391 = vmatpush1.msra.mxu0 0.0
    %392 = vmatprep.subr.mxu0 0.0
    %393 = vmatpush1.msra.mxu0 0.0
    %394 = vmatprep.subr.mxu0 0.0
    %395 = vmatpush1.msra.mxu0 0.0
    %396 = vmatprep.subr.mxu0 0.0
    %397 = vmatpush1.msra.mxu0 0.0
    %398 = vmatprep.subr.mxu0 0.0
    %399 = vmatpush1.msra.mxu0 0.0
    %400 = vmatprep.subr.mxu0 0.0
    %401 = vmatpush1.msra.mxu0 0.0
    %402 = vmatprep.subr.mxu0 0.0
    %403 = vmatpush1.msra.mxu0 0.0
    %404 = vmatprep.subr.mxu0 0.0
    %405 = vmatpush1.msra.mxu0 0.0
    %406 = vmatprep.subr.mxu0 0.0
    %407 = vmatpush1.msra.mxu0 0.0
    %408 = vmatprep.subr.mxu0 0.0
    %409 = vmatpush1.msra.mxu0 0.0
    %410 = vmatprep.subr.mxu0 0.0
    %411 = vmatpush1.msra.mxu0 0.0
    %412 = vmatprep.subr.mxu0 0.0
    %413 = vmatpush1.msra.mxu0 0.0
    %414 = vmatprep.subr.mxu0 0.0
    %415 = vmatpush1.msra.mxu0 0.0
    %416 = vmatprep.subr.mxu0 0.0
    %417 = vmatpush1.msra.mxu0 0.0
    %418 = vmatprep.subr.mxu0 0.0
    %419 = vmatpush1.msra.mxu0 0.0
    %420 = vmatprep.subr.mxu0 0.0
    %421 = vmatpush1.msra.mxu0 0.0
    %422 = vmatprep.subr.mxu0 0.0
    %423 = vmatpush1.msra.mxu0 0.0
    %424 = vmatprep.subr.mxu0 0.0
    %425 = vmatpush1.msra.mxu0 0.0
    %426 = vmatprep.subr.mxu0 0.0
    %427 = vmatpush1.msra.mxu0 0.0
    %428 = vmatprep.subr.mxu0 0.0
    %429 = vmatpush1.msra.mxu0 0.0
    %430 = vmatprep.subr.mxu0 0.0
    %431 = vmatpush1.msra.mxu0 0.0
    %432 = vmatprep.subr.mxu0 0.0
    %433 = vmatpush1.msra.mxu0 0.0
    %434 = vmatprep.subr.mxu0 0.0
    %435 = vmatpush1.msra.mxu0 0.0
    %436 = vmatprep.mubr.f32.mxu0 0.0
    %437 = vmatmul.mubr.f32.gmra.mrb[0].mxu0 %v361
    %v438 = vpop.f32.mrb[0].mxu0
    %v439 = vadd.f32 0.0, %v438
    %v440 = vpop.f32.mrb[0].mxu0
    %441 = vmatprep.mubr.f32.mxu0 0.0
    %442 = vmatmul.mubr.f32.gmra.mrb[0].mxu0 %v364
    %v443 = vpop.f32.mrb[0].mxu0
    %v444 = vadd.f32 0.0, %v443
    %v445 = vpop.f32.mrb[0].mxu0
    %446 = vmatprep.mubr.f32.mxu0 0.0
    %447 = vmatmul.mubr.f32.gmra.mrb[0].mxu0 %v367
    %v448 = vpop.f32.mrb[0].mxu0
    %v449 = vadd.f32 0.0, %v448
    %v450 = vpop.f32.mrb[0].mxu0
    %451 = vmatprep.mubr.f32.mxu0 0.0
    %452 = vmatmul.mubr.f32.gmra.mrb[0].mxu0 %v370
    %v453 = vpop.f32.mrb[0].mxu0
    %v454 = vadd.f32 0.0, %v453
    %v455 = vpop.f32.mrb[0].mxu0
    %456 = vdwg.mxu0
    %v457 = vsub.f32 %v439, %v93
    %v458 = vsub.f32 %v444, %v94
    %v459 = vsub.f32 %v449, %v95
    %v460 = vsub.f32 %v454, %v96
    %v461 = vstv %s103
    %v462 = vmul.f32 %v461, %v457
    %v463 = vmul.f32 %v461, %v458
    %v464 = vmul.f32 %v461, %v459
    %v465 = vmul.f32 %v461, %v460
    %v466 = vsub.f32 %v97, %v462
    %v467 = vsub.f32 %v98, %v463
    %v468 = vsub.f32 %v99, %v464
    %v469 = vsub.f32 %v100, %v465
    %v470 = vmax.f32 %v466, 0.0
    %v471 = vmax.f32 %v467, 0.0
    %v472 = vmax.f32 %v468, 0.0
    %v473 = vmax.f32 %v469, 0.0
    %474 = vst.msk [vmem:[%s11] sm:$0xff] %vm185, %v470
    %475 = vst.msk [vmem:[%s11 + $0x8] sm:$0xff] %vm185, %v471
    %476 = vst.msk [vmem:[%s11 + $0x10] sm:$0xff] %vm185, %v472
    %477 = vst.msk [vmem:[%s11 + $0x18] sm:$0xff] %vm185, %v473
    %478 = vst [vmem:[%s12] sm:$0xff] %v270
    %s479 = sld [smem:[#allocation2 + $0x1]]
    %s480 = sld [smem:[#allocation4 + $0x1]]
    %s481 = sld [smem:[#allocation6 + $0x1]]
    %s482 = ssub.f32 %s481, 1.0
    %s483 = scalar_lea.vmem %s3, 8
    %v484 = vld [vmem:[%s483] sm:$0xff]
    %s485 = scalar_lea.vmem %s4, 8
    %v486 = vld [vmem:[%s485] sm:$0xff]
    %s487 = scalar_lea.vmem %s5, 8
    %v488 = vld [vmem:[%s487] sm:$0xff]
    %v490 = vsel %vm109, %v488, 0
    %492 = vmatprep.subr.mxu0 0.0
    %493 = vmatpush1.msra.mxu0 %v470
    %494 = vmatprep.subr.mxu0 0.0
    %495 = vmatpush1.msra.mxu0 %v471
    %496 = vmatprep.subr.mxu0 0.0
    %497 = vmatpush1.msra.mxu0 %v472
    %498 = vmatprep.subr.mxu0 0.0
    %499 = vmatpush1.msra.mxu0 %v473
    %500 = vmatprep.subr.mxu0 0.0
    %501 = vmatpush1.msra.mxu0 0.0
    %502 = vmatprep.subr.mxu0 0.0
    %503 = vmatpush1.msra.mxu0 0.0
    %504 = vmatprep.subr.mxu0 0.0
    %505 = vmatpush1.msra.mxu0 0.0
    %506 = vmatprep.subr.mxu0 0.0
    %507 = vmatpush1.msra.mxu0 0.0
    %508 = vmatprep.subr.mxu0 0.0
    %509 = vmatpush1.msra.mxu0 0.0
    %510 = vmatprep.subr.mxu0 0.0
    %511 = vmatpush1.msra.mxu0 0.0
    %512 = vmatprep.subr.mxu0 0.0
    %513 = vmatpush1.msra.mxu0 0.0
    %514 = vmatprep.subr.mxu0 0.0
    %515 = vmatpush1.msra.mxu0 0.0
    %516 = vmatprep.subr.mxu0 0.0
    %517 = vmatpush1.msra.mxu0 0.0
    %518 = vmatprep.subr.mxu0 0.0
    %519 = vmatpush1.msra.mxu0 0.0
    %520 = vmatprep.subr.mxu0 0.0
    %521 = vmatpush1.msra.mxu0 0.0
    %522 = vmatprep.subr.mxu0 0.0
    %523 = vmatpush1.msra.mxu0 0.0
    %524 = vmatprep.subr.mxu0 0.0
    %525 = vmatpush1.msra.mxu0 0.0
    %526 = vmatprep.subr.mxu0 0.0
    %527 = vmatpush1.msra.mxu0 0.0
    %528 = vmatprep.subr.mxu0 0.0
    %529 = vmatpush1.msra.mxu0 0.0
    %530 = vmatprep.subr.mxu0 0.0
    %531 = vmatpush1.msra.mxu0 0.0
    %532 = vmatprep.subr.mxu0 0.0
    %533 = vmatpush1.msra.mxu0 0.0
    %534 = vmatprep.subr.mxu0 0.0
    %535 = vmatpush1.msra.mxu0 0.0
    %536 = vmatprep.subr.mxu0 0.0
    %537 = vmatpush1.msra.mxu0 0.0
    %538 = vmatprep.subr.mxu0 0.0
    %539 = vmatpush1.msra.mxu0 0.0
    %540 = vmatprep.subr.mxu0 0.0
    %541 = vmatpush1.msra.mxu0 0.0
    %542 = vmatprep.subr.mxu0 0.0
    %543 = vmatpush1.msra.mxu0 0.0
    %544 = vmatprep.subr.mxu0 0.0
    %545 = vmatpush1.msra.mxu0 0.0
    %546 = vmatprep.subr.mxu0 0.0
    %547 = vmatpush1.msra.mxu0 0.0
    %548 = vmatprep.subr.mxu0 0.0
    %549 = vmatpush1.msra.mxu0 0.0
    %550 = vmatprep.subr.mxu0 0.0
    %551 = vmatpush1.msra.mxu0 0.0
    %552 = vmatprep.subr.mxu0 0.0
    %553 = vmatpush1.msra.mxu0 0.0
    %554 = vmatprep.subr.mxu0 0.0
    %555 = vmatpush1.msra.mxu0 0.0
    %556 = vmatprep.mubr.f32.mxu0 0.0
    %557 = vmatmul.mubr.f32.gmra.mrb[0].mxu0 %v490
    %v558 = vpop.f32.mrb[0].mxu0
    %v559 = vadd.f32 0.0, %v558
    %v560 = vpop.f32.mrb[0].mxu0
    %561 = vdwg.mxu0
    %v562 = vpack.c.bf16 %v559, %v559
    %v564 = vsel %vm185, %v562, 0
    %v567 = vsel %vm189, %v271, 0
    %569 = vmatprep.subr.bf16.mxu0 0
    %570 = vmatpush1.bf16.msra.mxu0 %v567
    %571 = vmatprep.subr.bf16.mxu0 0
    %572 = vmatpush1.bf16.msra.mxu0 0
    %573 = vmatprep.subr.bf16.mxu0 0
    %574 = vmatpush1.bf16.msra.mxu0 0
    %575 = vmatprep.subr.bf16.mxu0 0
    %576 = vmatpush1.bf16.msra.mxu0 0
    %577 = vmatprep.subr.bf16.mxu0 0
    %578 = vmatpush1.bf16.msra.mxu0 0
    %579 = vmatprep.subr.bf16.mxu0 0
    %580 = vmatpush1.bf16.msra.mxu0 0
    %581 = vmatprep.subr.bf16.mxu0 0
    %582 = vmatpush1.bf16.msra.mxu0 0
    %583 = vmatprep.subr.bf16.mxu0 0
    %584 = vmatpush1.bf16.msra.mxu0 0
    %585 = vmatprep.subr.bf16.mxu0 0
    %586 = vmatpush1.bf16.msra.mxu0 0
    %587 = vmatprep.subr.bf16.mxu0 0
    %588 = vmatpush1.bf16.msra.mxu0 0
    %589 = vmatprep.subr.bf16.mxu0 0
    %590 = vmatpush1.bf16.msra.mxu0 0
    %591 = vmatprep.subr.bf16.mxu0 0
    %592 = vmatpush1.bf16.msra.mxu0 0
    %593 = vmatprep.subr.bf16.mxu0 0
    %594 = vmatpush1.bf16.msra.mxu0 0
    %595 = vmatprep.subr.bf16.mxu0 0
    %596 = vmatpush1.bf16.msra.mxu0 0
    %597 = vmatprep.subr.bf16.mxu0 0
    %598 = vmatpush1.bf16.msra.mxu0 0
    %599 = vmatprep.subr.bf16.mxu0 0
    %600 = vmatpush1.bf16.msra.mxu0 0
    %601 = vmatprep.mubr.bf16.mxu0 0
    %602 = vmatmul.mubr.bf16.gmra.mrb[0].mxu0 %v564
    %v603 = vpop.f32.mrb[0].mxu0
    %v604 = vadd.f32 0.0, %v603
    %v605 = vpop.f32.mrb[0].mxu0
    %v606 = vpop.f32.mrb[0].mxu0
    %v607 = vpop.f32.mrb[0].mxu0
    %608 = vdwg.mxu0
    %s609 = scalar_lea.vmem %s6, 8
    %v610 = vld [vmem:[%s609] sm:$0xff]
    %v611 = vsub.f32 %v604, %v610
    %v612 = vstv %s479
    %v613 = vmul.f32 %v612, %v611
    %v614 = vsub.f32 %v270, %v613
    %v615 = vmax.f32 %v614, 1e-20
    %v616 = vlog2.pop %v615
    %v617 = vmul.f32 %v616, 0.6931472
    %v618 = vstv %s482
    %v619 = vmul.f32 %v618, %v617
    %v620 = vmul.f32 %v619, 1.442695
    %v621 = vpow.pop %v620
    %623 = vset.pattern.permute.xlu0 0
    %624 = vperm.xlu0 %623, %v486
    %v625 = vpop.permute.xlu0 %624
    %v627 = vmul.f32 %v625, %v621
    %v628 = vsub.f32 %v614, %v627
    %630 = vset.pattern.permute.xlu0 0
    %631 = vperm.xlu0 %630, %v484
    %v632 = vpop.permute.xlu0 %631
    %v634 = vsub.f32 %v614, %v632
    %vm635 = vcmp.gt.f32.partialorder %v634, 0.0
    %v636 = vsel %vm635, %v628, 0.0
    %v637 = vmin.f32 %v636, 1.0
    %v638 = vmax.f32 %v637, 0.0
    %v639 = vrot.slane %v638, 4
    %v640 = vadd.f32 %v638, %v639
    %v641 = vrot.slane %v640, 2
    %v642 = vadd.f32 %v640, %v641
    %v643 = vrot.slane %v642, 1
    %v644 = vadd.f32 %v642, %v643
    %v645 = vadd.f32 %v644, 0.0001
    %v646 = vrcp.pop %v645
    %v647 = vmul.f32 %v638, %v646
    %v648 = vpack.c.bf16 %v647, %v647
    %649 = vmatprep.subr.bf16.mxu0 0
    %650 = vmatpush1.bf16.msra.mxu0 %v304
    %651 = vmatprep.subr.bf16.mxu0 0
    %652 = vmatpush1.bf16.msra.mxu0 %v305
    %653 = vmatprep.subr.bf16.mxu0 0
    %654 = vmatpush1.bf16.msra.mxu0 %v306
    %655 = vmatprep.subr.bf16.mxu0 0
    %656 = vmatpush1.bf16.msra.mxu0 %v307
    %657 = vmatprep.subr.bf16.mxu0 0
    %658 = vmatpush1.bf16.msra.mxu0 %v308
    %659 = vmatprep.subr.bf16.mxu0 0
    %660 = vmatpush1.bf16.msra.mxu0 %v309
    %661 = vmatprep.subr.bf16.mxu0 0
    %662 = vmatpush1.bf16.msra.mxu0 %v310
    %663 = vmatprep.subr.bf16.mxu0 0
    %664 = vmatpush1.bf16.msra.mxu0 %v311
    %665 = vmatprep.subr.bf16.mxu0 0
    %666 = vmatpush1.bf16.msra.mxu0 0
    %667 = vmatprep.subr.bf16.mxu0 0
    %668 = vmatpush1.bf16.msra.mxu0 0
    %669 = vmatprep.subr.bf16.mxu0 0
    %670 = vmatpush1.bf16.msra.mxu0 0
    %671 = vmatprep.subr.bf16.mxu0 0
    %672 = vmatpush1.bf16.msra.mxu0 0
    %673 = vmatprep.subr.bf16.mxu0 0
    %674 = vmatpush1.bf16.msra.mxu0 0
    %675 = vmatprep.subr.bf16.mxu0 0
    %676 = vmatpush1.bf16.msra.mxu0 0
    %677 = vmatprep.subr.bf16.mxu0 0
    %678 = vmatpush1.bf16.msra.mxu0 0
    %679 = vmatprep.subr.bf16.mxu0 0
    %680 = vmatpush1.bf16.msra.mxu0 0
    %681 = vmatprep.mubr.bf16.mxu0 0
    %682 = vmatmul.mubr.bf16.gmra.mrb[0].mxu0 %v648
    %v683 = vpop.f32.mrb[0].mxu0
    %v684 = vadd.f32 0.0, %v683
    %v685 = vpop.f32.mrb[0].mxu0
    %v686 = vpop.f32.mrb[0].mxu0
    %v687 = vpop.f32.mrb[0].mxu0
    %688 = vdwg.mxu0
    %v690 = vsel %vm185, %v470, 0
    %v693 = vsel %vm185, %v471, 0
    %v696 = vsel %vm185, %v472, 0
    %v699 = vsel %vm185, %v473, 0
    %701 = vmatprep.subr.mxu0 0.0
    %702 = vmatpush1.msra.mxu0 %v684
    %703 = vmatprep.subr.mxu0 0.0
    %704 = vmatpush1.msra.mxu0 0.0
    %705 = vmatprep.subr.mxu0 0.0
    %706 = vmatpush1.msra.mxu0 0.0
    %707 = vmatprep.subr.mxu0 0.0
    %708 = vmatpush1.msra.mxu0 0.0
    %709 = vmatprep.subr.mxu0 0.0
    %710 = vmatpush1.msra.mxu0 0.0
    %711 = vmatprep.subr.mxu0 0.0
    %712 = vmatpush1.msra.mxu0 0.0
    %713 = vmatprep.subr.mxu0 0.0
    %714 = vmatpush1.msra.mxu0 0.0
    %715 = vmatprep.subr.mxu0 0.0
    %716 = vmatpush1.msra.mxu0 0.0
    %717 = vmatprep.subr.mxu0 0.0
    %718 = vmatpush1.msra.mxu0 0.0
    %719 = vmatprep.subr.mxu0 0.0
    %720 = vmatpush1.msra.mxu0 0.0
    %721 = vmatprep.subr.mxu0 0.0
    %722 = vmatpush1.msra.mxu0 0.0
    %723 = vmatprep.subr.mxu0 0.0
    %724 = vmatpush1.msra.mxu0 0.0
    %725 = vmatprep.subr.mxu0 0.0
    %726 = vmatpush1.msra.mxu0 0.0
    %727 = vmatprep.subr.mxu0 0.0
    %728 = vmatpush1.msra.mxu0 0.0
    %729 = vmatprep.subr.mxu0 0.0
    %730 = vmatpush1.msra.mxu0 0.0
    %731 = vmatprep.subr.mxu0 0.0
    %732 = vmatpush1.msra.mxu0 0.0
    %733 = vmatprep.subr.mxu0 0.0
    %734 = vmatpush1.msra.mxu0 0.0
    %735 = vmatprep.subr.mxu0 0.0
    %736 = vmatpush1.msra.mxu0 0.0
    %737 = vmatprep.subr.mxu0 0.0
    %738 = vmatpush1.msra.mxu0 0.0
    %739 = vmatprep.subr.mxu0 0.0
    %740 = vmatpush1.msra.mxu0 0.0
    %741 = vmatprep.subr.mxu0 0.0
    %742 = vmatpush1.msra.mxu0 0.0
    %743 = vmatprep.subr.mxu0 0.0
    %744 = vmatpush1.msra.mxu0 0.0
    %745 = vmatprep.subr.mxu0 0.0
    %746 = vmatpush1.msra.mxu0 0.0
    %747 = vmatprep.subr.mxu0 0.0
    %748 = vmatpush1.msra.mxu0 0.0
    %749 = vmatprep.subr.mxu0 0.0
    %750 = vmatpush1.msra.mxu0 0.0
    %751 = vmatprep.subr.mxu0 0.0
    %752 = vmatpush1.msra.mxu0 0.0
    %753 = vmatprep.subr.mxu0 0.0
    %754 = vmatpush1.msra.mxu0 0.0
    %755 = vmatprep.subr.mxu0 0.0
    %756 = vmatpush1.msra.mxu0 0.0
    %757 = vmatprep.subr.mxu0 0.0
    %758 = vmatpush1.msra.mxu0 0.0
    %759 = vmatprep.subr.mxu0 0.0
    %760 = vmatpush1.msra.mxu0 0.0
    %761 = vmatprep.subr.mxu0 0.0
    %762 = vmatpush1.msra.mxu0 0.0
    %763 = vmatprep.subr.mxu0 0.0
    %764 = vmatpush1.msra.mxu0 0.0
    %765 = vmatprep.mubr.f32.mxu0 0.0
    %766 = vmatmul.mubr.f32.gmra.mrb[0].mxu0 %v690
    %v767 = vpop.f32.mrb[0].mxu0
    %v768 = vadd.f32 0.0, %v767
    %v769 = vpop.f32.mrb[0].mxu0
    %770 = vmatprep.mubr.f32.mxu0 0.0
    %771 = vmatmul.mubr.f32.gmra.mrb[0].mxu0 %v693
    %v772 = vpop.f32.mrb[0].mxu0
    %v773 = vadd.f32 0.0, %v772
    %v774 = vpop.f32.mrb[0].mxu0
    %775 = vmatprep.mubr.f32.mxu0 0.0
    %776 = vmatmul.mubr.f32.gmra.mrb[0].mxu0 %v696
    %v777 = vpop.f32.mrb[0].mxu0
    %v778 = vadd.f32 0.0, %v777
    %v779 = vpop.f32.mrb[0].mxu0
    %780 = vmatprep.mubr.f32.mxu0 0.0
    %781 = vmatmul.mubr.f32.gmra.mrb[0].mxu0 %v699
    %v782 = vpop.f32.mrb[0].mxu0
    %v783 = vadd.f32 0.0, %v782
    %v784 = vpop.f32.mrb[0].mxu0
    %785 = vdwg.mxu0
    %v786 = vsub.f32 %v768, %v93
    %v787 = vsub.f32 %v773, %v94
    %v788 = vsub.f32 %v778, %v95
    %v789 = vsub.f32 %v783, %v96
    %v790 = vstv %s480
    %v791 = vmul.f32 %v790, %v786
    %v792 = vmul.f32 %v790, %v787
    %v793 = vmul.f32 %v790, %v788
    %v794 = vmul.f32 %v790, %v789
    %v795 = vsub.f32 %v470, %v791
    %v796 = vsub.f32 %v471, %v792
    %v797 = vsub.f32 %v472, %v793
    %v798 = vsub.f32 %v473, %v794
    %v799 = vmax.f32 %v795, 0.0
    %v800 = vmax.f32 %v796, 0.0
    %v801 = vmax.f32 %v797, 0.0
    %v802 = vmax.f32 %v798, 0.0
    %s803 = scalar_lea.vmem %s11, 32
    %804 = vst.msk [vmem:[%s803] sm:$0xff] %vm185, %v799
    %805 = vst.msk [vmem:[%s803 + $0x8] sm:$0xff] %vm185, %v800
    %806 = vst.msk [vmem:[%s803 + $0x10] sm:$0xff] %vm185, %v801
    %807 = vst.msk [vmem:[%s803 + $0x18] sm:$0xff] %vm185, %v802
    %s808 = scalar_lea.vmem %s12, 8
    %809 = vst [vmem:[%s808] sm:$0xff] %v647
    %s810 = sld [smem:[#allocation2 + $0x2]]
    %s811 = sld [smem:[#allocation4 + $0x2]]
    %s812 = sld [smem:[#allocation6 + $0x2]]
    %s813 = ssub.f32 %s812, 1.0
    %s814 = scalar_lea.vmem %s3, 16
    %v815 = vld [vmem:[%s814] sm:$0xff]
    %s816 = scalar_lea.vmem %s4, 16
    %v817 = vld [vmem:[%s816] sm:$0xff]
    %s818 = scalar_lea.vmem %s5, 16
    %v819 = vld [vmem:[%s818] sm:$0xff]
    %v821 = vsel %vm109, %v819, 0
    %823 = vmatprep.subr.mxu0 0.0
    %824 = vmatpush1.msra.mxu0 %v799
    %825 = vmatprep.subr.mxu0 0.0
    %826 = vmatpush1.msra.mxu0 %v800
    %827 = vmatprep.subr.mxu0 0.0
    %828 = vmatpush1.msra.mxu0 %v801
    %829 = vmatprep.subr.mxu0 0.0
    %830 = vmatpush1.msra.mxu0 %v802
    %831 = vmatprep.subr.mxu0 0.0
    %832 = vmatpush1.msra.mxu0 0.0
    %833 = vmatprep.subr.mxu0 0.0
    %834 = vmatpush1.msra.mxu0 0.0
    %835 = vmatprep.subr.mxu0 0.0
    %836 = vmatpush1.msra.mxu0 0.0
    %837 = vmatprep.subr.mxu0 0.0
    %838 = vmatpush1.msra.mxu0 0.0
    %839 = vmatprep.subr.mxu0 0.0
    %840 = vmatpush1.msra.mxu0 0.0
    %841 = vmatprep.subr.mxu0 0.0
    %842 = vmatpush1.msra.mxu0 0.0
    %843 = vmatprep.subr.mxu0 0.0
    %844 = vmatpush1.msra.mxu0 0.0
    %845 = vmatprep.subr.mxu0 0.0
    %846 = vmatpush1.msra.mxu0 0.0
    %847 = vmatprep.subr.mxu0 0.0
    %848 = vmatpush1.msra.mxu0 0.0
    %849 = vmatprep.subr.mxu0 0.0
    %850 = vmatpush1.msra.mxu0 0.0
    %851 = vmatprep.subr.mxu0 0.0
    %852 = vmatpush1.msra.mxu0 0.0
    %853 = vmatprep.subr.mxu0 0.0
    %854 = vmatpush1.msra.mxu0 0.0
    %855 = vmatprep.subr.mxu0 0.0
    %856 = vmatpush1.msra.mxu0 0.0
    %857 = vmatprep.subr.mxu0 0.0
    %858 = vmatpush1.msra.mxu0 0.0
    %859 = vmatprep.subr.mxu0 0.0
    %860 = vmatpush1.msra.mxu0 0.0
    %861 = vmatprep.subr.mxu0 0.0
    %862 = vmatpush1.msra.mxu0 0.0
    %863 = vmatprep.subr.mxu0 0.0
    %864 = vmatpush1.msra.mxu0 0.0
    %865 = vmatprep.subr.mxu0 0.0
    %866 = vmatpush1.msra.mxu0 0.0
    %867 = vmatprep.subr.mxu0 0.0
    %868 = vmatpush1.msra.mxu0 0.0
    %869 = vmatprep.subr.mxu0 0.0
    %870 = vmatpush1.msra.mxu0 0.0
    %871 = vmatprep.subr.mxu0 0.0
    %872 = vmatpush1.msra.mxu0 0.0
    %873 = vmatprep.subr.mxu0 0.0
    %874 = vmatpush1.msra.mxu0 0.0
    %875 = vmatprep.subr.mxu0 0.0
    %876 = vmatpush1.msra.mxu0 0.0
    %877 = vmatprep.subr.mxu0 0.0
    %878 = vmatpush1.msra.mxu0 0.0
    %879 = vmatprep.subr.mxu0 0.0
    %880 = vmatpush1.msra.mxu0 0.0
    %881 = vmatprep.subr.mxu0 0.0
    %882 = vmatpush1.msra.mxu0 0.0
    %883 = vmatprep.subr.mxu0 0.0
    %884 = vmatpush1.msra.mxu0 0.0
    %885 = vmatprep.subr.mxu0 0.0
    %886 = vmatpush1.msra.mxu0 0.0
    %887 = vmatprep.mubr.f32.mxu0 0.0
    %888 = vmatmul.mubr.f32.gmra.mrb[0].mxu0 %v821
    %v889 = vpop.f32.mrb[0].mxu0
    %v890 = vadd.f32 0.0, %v889
    %v891 = vpop.f32.mrb[0].mxu0
    %892 = vdwg.mxu0
    %v893 = vpack.c.bf16 %v890, %v890
    %v895 = vsel %vm185, %v893, 0
    %v898 = vsel %vm189, %v648, 0
    %900 = vmatprep.subr.bf16.mxu0 0
    %901 = vmatpush1.bf16.msra.mxu0 %v898
    %902 = vmatprep.subr.bf16.mxu0 0
    %903 = vmatpush1.bf16.msra.mxu0 0
    %904 = vmatprep.subr.bf16.mxu0 0
    %905 = vmatpush1.bf16.msra.mxu0 0
    %906 = vmatprep.subr.bf16.mxu0 0
    %907 = vmatpush1.bf16.msra.mxu0 0
    %908 = vmatprep.subr.bf16.mxu0 0
    %909 = vmatpush1.bf16.msra.mxu0 0
    %910 = vmatprep.subr.bf16.mxu0 0
    %911 = vmatpush1.bf16.msra.mxu0 0
    %912 = vmatprep.subr.bf16.mxu0 0
    %913 = vmatpush1.bf16.msra.mxu0 0
    %914 = vmatprep.subr.bf16.mxu0 0
    %915 = vmatpush1.bf16.msra.mxu0 0
    %916 = vmatprep.subr.bf16.mxu0 0
    %917 = vmatpush1.bf16.msra.mxu0 0
    %918 = vmatprep.subr.bf16.mxu0 0
    %919 = vmatpush1.bf16.msra.mxu0 0
    %920 = vmatprep.subr.bf16.mxu0 0
    %921 = vmatpush1.bf16.msra.mxu0 0
    %922 = vmatprep.subr.bf16.mxu0 0
    %923 = vmatpush1.bf16.msra.mxu0 0
    %924 = vmatprep.subr.bf16.mxu0 0
    %925 = vmatpush1.bf16.msra.mxu0 0
    %926 = vmatprep.subr.bf16.mxu0 0
    %927 = vmatpush1.bf16.msra.mxu0 0
    %928 = vmatprep.subr.bf16.mxu0 0
    %929 = vmatpush1.bf16.msra.mxu0 0
    %930 = vmatprep.subr.bf16.mxu0 0
    %931 = vmatpush1.bf16.msra.mxu0 0
    %932 = vmatprep.mubr.bf16.mxu0 0
    %933 = vmatmul.mubr.bf16.gmra.mrb[0].mxu0 %v895
    %v934 = vpop.f32.mrb[0].mxu0
    %v935 = vadd.f32 0.0, %v934
    %v936 = vpop.f32.mrb[0].mxu0
    %v937 = vpop.f32.mrb[0].mxu0
    %v938 = vpop.f32.mrb[0].mxu0
    %939 = vdwg.mxu0
    %s940 = scalar_lea.vmem %s6, 16
    %v941 = vld [vmem:[%s940] sm:$0xff]
    %v942 = vsub.f32 %v935, %v941
    %v943 = vstv %s810
    %v944 = vmul.f32 %v943, %v942
    %v945 = vsub.f32 %v647, %v944
    %v946 = vmax.f32 %v945, 1e-20
    %v947 = vlog2.pop %v946
    %v948 = vmul.f32 %v947, 0.6931472
    %v949 = vstv %s813
    %v950 = vmul.f32 %v949, %v948
    %v951 = vmul.f32 %v950, 1.442695
    %v952 = vpow.pop %v951
    %954 = vset.pattern.permute.xlu0 0
    %955 = vperm.xlu0 %954, %v817
    %v956 = vpop.permute.xlu0 %955
    %v958 = vmul.f32 %v956, %v952
    %v959 = vsub.f32 %v945, %v958
    %961 = vset.pattern.permute.xlu0 0
    %962 = vperm.xlu0 %961, %v815
    %v963 = vpop.permute.xlu0 %962
    %v965 = vsub.f32 %v945, %v963
    %vm966 = vcmp.gt.f32.partialorder %v965, 0.0
    %v967 = vsel %vm966, %v959, 0.0
    %v968 = vmin.f32 %v967, 1.0
    %v969 = vmax.f32 %v968, 0.0
    %v970 = vrot.slane %v969, 4
    %v971 = vadd.f32 %v969, %v970
    %v972 = vrot.slane %v971, 2
    %v973 = vadd.f32 %v971, %v972
    %v974 = vrot.slane %v973, 1
    %v975 = vadd.f32 %v973, %v974
    %v976 = vadd.f32 %v975, 0.0001
    %v977 = vrcp.pop %v976
    %v978 = vmul.f32 %v969, %v977
    %v979 = vpack.c.bf16 %v978, %v978
    %980 = vmatprep.subr.bf16.mxu0 0
    %981 = vmatpush1.bf16.msra.mxu0 %v304
    %982 = vmatprep.subr.bf16.mxu0 0
    %983 = vmatpush1.bf16.msra.mxu0 %v305
    %984 = vmatprep.subr.bf16.mxu0 0
    %985 = vmatpush1.bf16.msra.mxu0 %v306
    %986 = vmatprep.subr.bf16.mxu0 0
    %987 = vmatpush1.bf16.msra.mxu0 %v307
    %988 = vmatprep.subr.bf16.mxu0 0
    %989 = vmatpush1.bf16.msra.mxu0 %v308
    %990 = vmatprep.subr.bf16.mxu0 0
    %991 = vmatpush1.bf16.msra.mxu0 %v309
    %992 = vmatprep.subr.bf16.mxu0 0
    %993 = vmatpush1.bf16.msra.mxu0 %v310
    %994 = vmatprep.subr.bf16.mxu0 0
    %995 = vmatpush1.bf16.msra.mxu0 %v311
    %996 = vmatprep.subr.bf16.mxu0 0
    %997 = vmatpush1.bf16.msra.mxu0 0
    %998 = vmatprep.subr.bf16.mxu0 0
    %999 = vmatpush1.bf16.msra.mxu0 0
    %1000 = vmatprep.subr.bf16.mxu0 0
    %1001 = vmatpush1.bf16.msra.mxu0 0
    %1002 = vmatprep.subr.bf16.mxu0 0
    %1003 = vmatpush1.bf16.msra.mxu0 0
    %1004 = vmatprep.subr.bf16.mxu0 0
    %1005 = vmatpush1.bf16.msra.mxu0 0
    %1006 = vmatprep.subr.bf16.mxu0 0
    %1007 = vmatpush1.bf16.msra.mxu0 0
    %1008 = vmatprep.subr.bf16.mxu0 0
    %1009 = vmatpush1.bf16.msra.mxu0 0
    %1010 = vmatprep.subr.bf16.mxu0 0
    %1011 = vmatpush1.bf16.msra.mxu0 0
    %1012 = vmatprep.mubr.bf16.mxu0 0
    %1013 = vmatmul.mubr.bf16.gmra.mrb[0].mxu0 %v979
    %v1014 = vpop.f32.mrb[0].mxu0
    %v1015 = vadd.f32 0.0, %v1014
    %v1016 = vpop.f32.mrb[0].mxu0
    %v1017 = vpop.f32.mrb[0].mxu0
    %v1018 = vpop.f32.mrb[0].mxu0
    %1019 = vdwg.mxu0
    %v1021 = vsel %vm185, %v799, 0
    %v1024 = vsel %vm185, %v800, 0
    %v1027 = vsel %vm185, %v801, 0
    %v1030 = vsel %vm185, %v802, 0
    %1032 = vmatprep.subr.mxu0 0.0
    %1033 = vmatpush1.msra.mxu0 %v1015
    %1034 = vmatprep.subr.mxu0 0.0
    %1035 = vmatpush1.msra.mxu0 0.0
    %1036 = vmatprep.subr.mxu0 0.0
    %1037 = vmatpush1.msra.mxu0 0.0
    %1038 = vmatprep.subr.mxu0 0.0
    %1039 = vmatpush1.msra.mxu0 0.0
    %1040 = vmatprep.subr.mxu0 0.0
    %1041 = vmatpush1.msra.mxu0 0.0
    %1042 = vmatprep.subr.mxu0 0.0
    %1043 = vmatpush1.msra.mxu0 0.0
    %1044 = vmatprep.subr.mxu0 0.0
    %1045 = vmatpush1.msra.mxu0 0.0
    %1046 = vmatprep.subr.mxu0 0.0
    %1047 = vmatpush1.msra.mxu0 0.0
    %1048 = vmatprep.subr.mxu0 0.0
    %1049 = vmatpush1.msra.mxu0 0.0
    %1050 = vmatprep.subr.mxu0 0.0
    %1051 = vmatpush1.msra.mxu0 0.0
    %1052 = vmatprep.subr.mxu0 0.0
    %1053 = vmatpush1.msra.mxu0 0.0
    %1054 = vmatprep.subr.mxu0 0.0
    %1055 = vmatpush1.msra.mxu0 0.0
    %1056 = vmatprep.subr.mxu0 0.0
    %1057 = vmatpush1.msra.mxu0 0.0
    %1058 = vmatprep.subr.mxu0 0.0
    %1059 = vmatpush1.msra.mxu0 0.0
    %1060 = vmatprep.subr.mxu0 0.0
    %1061 = vmatpush1.msra.mxu0 0.0
    %1062 = vmatprep.subr.mxu0 0.0
    %1063 = vmatpush1.msra.mxu0 0.0
    %1064 = vmatprep.subr.mxu0 0.0
    %1065 = vmatpush1.msra.mxu0 0.0
    %1066 = vmatprep.subr.mxu0 0.0
    %1067 = vmatpush1.msra.mxu0 0.0
    %1068 = vmatprep.subr.mxu0 0.0
    %1069 = vmatpush1.msra.mxu0 0.0
    %1070 = vmatprep.subr.mxu0 0.0
    %1071 = vmatpush1.msra.mxu0 0.0
    %1072 = vmatprep.subr.mxu0 0.0
    %1073 = vmatpush1.msra.mxu0 0.0
    %1074 = vmatprep.subr.mxu0 0.0
    %1075 = vmatpush1.msra.mxu0 0.0
    %1076 = vmatprep.subr.mxu0 0.0
    %1077 = vmatpush1.msra.mxu0 0.0
    %1078 = vmatprep.subr.mxu0 0.0
    %1079 = vmatpush1.msra.mxu0 0.0
    %1080 = vmatprep.subr.mxu0 0.0
    %1081 = vmatpush1.msra.mxu0 0.0
    %1082 = vmatprep.subr.mxu0 0.0
    %1083 = vmatpush1.msra.mxu0 0.0
    %1084 = vmatprep.subr.mxu0 0.0
    %1085 = vmatpush1.msra.mxu0 0.0
    %1086 = vmatprep.subr.mxu0 0.0
    %1087 = vmatpush1.msra.mxu0 0.0
    %1088 = vmatprep.subr.mxu0 0.0
    %1089 = vmatpush1.msra.mxu0 0.0
    %1090 = vmatprep.subr.mxu0 0.0
    %1091 = vmatpush1.msra.mxu0 0.0
    %1092 = vmatprep.subr.mxu0 0.0
    %1093 = vmatpush1.msra.mxu0 0.0
    %1094 = vmatprep.subr.mxu0 0.0
    %1095 = vmatpush1.msra.mxu0 0.0
    %1096 = vmatprep.mubr.f32.mxu0 0.0
    %1097 = vmatmul.mubr.f32.gmra.mrb[0].mxu0 %v1021
    %v1098 = vpop.f32.mrb[0].mxu0
    %v1099 = vadd.f32 0.0, %v1098
    %v1100 = vpop.f32.mrb[0].mxu0
    %1101 = vmatprep.mubr.f32.mxu0 0.0
    %1102 = vmatmul.mubr.f32.gmra.mrb[0].mxu0 %v1024
    %v1103 = vpop.f32.mrb[0].mxu0
    %v1104 = vadd.f32 0.0, %v1103
    %v1105 = vpop.f32.mrb[0].mxu0
    %1106 = vmatprep.mubr.f32.mxu0 0.0
    %1107 = vmatmul.mubr.f32.gmra.mrb[0].mxu0 %v1027
    %v1108 = vpop.f32.mrb[0].mxu0
    %v1109 = vadd.f32 0.0, %v1108
    %v1110 = vpop.f32.mrb[0].mxu0
    %1111 = vmatprep.mubr.f32.mxu0 0.0
    %1112 = vmatmul.mubr.f32.gmra.mrb[0].mxu0 %v1030
    %v1113 = vpop.f32.mrb[0].mxu0
    %v1114 = vadd.f32 0.0, %v1113
    %v1115 = vpop.f32.mrb[0].mxu0
    %1116 = vdwg.mxu0
    %v1117 = vsub.f32 %v1099, %v93
    %v1118 = vsub.f32 %v1104, %v94
    %v1119 = vsub.f32 %v1109, %v95
    %v1120 = vsub.f32 %v1114, %v96
    %v1121 = vstv %s811
    %v1122 = vmul.f32 %v1121, %v1117
    %v1123 = vmul.f32 %v1121, %v1118
    %v1124 = vmul.f32 %v1121, %v1119
    %v1125 = vmul.f32 %v1121, %v1120
    %v1126 = vsub.f32 %v799, %v1122
    %v1127 = vsub.f32 %v800, %v1123
    %v1128 = vsub.f32 %v801, %v1124
    %v1129 = vsub.f32 %v802, %v1125
    %v1130 = vmax.f32 %v1126, 0.0
    %v1131 = vmax.f32 %v1127, 0.0
    %v1132 = vmax.f32 %v1128, 0.0
    %v1133 = vmax.f32 %v1129, 0.0
    %s1134 = scalar_lea.vmem %s11, 64
    %1135 = vst.msk [vmem:[%s1134] sm:$0xff] %vm185, %v1130
    %1136 = vst.msk [vmem:[%s1134 + $0x8] sm:$0xff] %vm185, %v1131
    %1137 = vst.msk [vmem:[%s1134 + $0x10] sm:$0xff] %vm185, %v1132
    %1138 = vst.msk [vmem:[%s1134 + $0x18] sm:$0xff] %vm185, %v1133
    %s1139 = scalar_lea.vmem %s12, 16
    %1140 = vst [vmem:[%s1139] sm:$0xff] %v978
    %s1141 = sld [smem:[#allocation2 + $0x3]]
    %s1142 = sld [smem:[#allocation4 + $0x3]]
    %s1143 = sld [smem:[#allocation6 + $0x3]]
    %s1144 = ssub.f32 %s1143, 1.0
    %s1145 = scalar_lea.vmem %s3, 24
    %v1146 = vld [vmem:[%s1145] sm:$0xff]
    %s1147 = scalar_lea.vmem %s4, 24
    %v1148 = vld [vmem:[%s1147] sm:$0xff]
    %s1149 = scalar_lea.vmem %s5, 24
    %v1150 = vld [vmem:[%s1149] sm:$0xff]
    %v1152 = vsel %vm109, %v1150, 0
    %1154 = vmatprep.subr.mxu0 0.0
    %1155 = vmatpush1.msra.mxu0 %v1130
    %1156 = vmatprep.subr.mxu0 0.0
    %1157 = vmatpush1.msra.mxu0 %v1131
    %1158 = vmatprep.subr.mxu0 0.0
    %1159 = vmatpush1.msra.mxu0 %v1132
    %1160 = vmatprep.subr.mxu0 0.0
    %1161 = vmatpush1.msra.mxu0 %v1133
    %1162 = vmatprep.subr.mxu0 0.0
    %1163 = vmatpush1.msra.mxu0 0.0
    %1164 = vmatprep.subr.mxu0 0.0
    %1165 = vmatpush1.msra.mxu0 0.0
    %1166 = vmatprep.subr.mxu0 0.0
    %1167 = vmatpush1.msra.mxu0 0.0
    %1168 = vmatprep.subr.mxu0 0.0
    %1169 = vmatpush1.msra.mxu0 0.0
    %1170 = vmatprep.subr.mxu0 0.0
    %1171 = vmatpush1.msra.mxu0 0.0
    %1172 = vmatprep.subr.mxu0 0.0
    %1173 = vmatpush1.msra.mxu0 0.0
    %1174 = vmatprep.subr.mxu0 0.0
    %1175 = vmatpush1.msra.mxu0 0.0
    %1176 = vmatprep.subr.mxu0 0.0
    %1177 = vmatpush1.msra.mxu0 0.0
    %1178 = vmatprep.subr.mxu0 0.0
    %1179 = vmatpush1.msra.mxu0 0.0
    %1180 = vmatprep.subr.mxu0 0.0
    %1181 = vmatpush1.msra.mxu0 0.0
    %1182 = vmatprep.subr.mxu0 0.0
    %1183 = vmatpush1.msra.mxu0 0.0
    %1184 = vmatprep.subr.mxu0 0.0
    %1185 = vmatpush1.msra.mxu0 0.0
    %1186 = vmatprep.subr.mxu0 0.0
    %1187 = vmatpush1.msra.mxu0 0.0
    %1188 = vmatprep.subr.mxu0 0.0
    %1189 = vmatpush1.msra.mxu0 0.0
    %1190 = vmatprep.subr.mxu0 0.0
    %1191 = vmatpush1.msra.mxu0 0.0
    %1192 = vmatprep.subr.mxu0 0.0
    %1193 = vmatpush1.msra.mxu0 0.0
    %1194 = vmatprep.subr.mxu0 0.0
    %1195 = vmatpush1.msra.mxu0 0.0
    %1196 = vmatprep.subr.mxu0 0.0
    %1197 = vmatpush1.msra.mxu0 0.0
    %1198 = vmatprep.subr.mxu0 0.0
    %1199 = vmatpush1.msra.mxu0 0.0
    %1200 = vmatprep.subr.mxu0 0.0
    %1201 = vmatpush1.msra.mxu0 0.0
    %1202 = vmatprep.subr.mxu0 0.0
    %1203 = vmatpush1.msra.mxu0 0.0
    %1204 = vmatprep.subr.mxu0 0.0
    %1205 = vmatpush1.msra.mxu0 0.0
    %1206 = vmatprep.subr.mxu0 0.0
    %1207 = vmatpush1.msra.mxu0 0.0
    %1208 = vmatprep.subr.mxu0 0.0
    %1209 = vmatpush1.msra.mxu0 0.0
    %1210 = vmatprep.subr.mxu0 0.0
    %1211 = vmatpush1.msra.mxu0 0.0
    %1212 = vmatprep.subr.mxu0 0.0
    %1213 = vmatpush1.msra.mxu0 0.0
    %1214 = vmatprep.subr.mxu0 0.0
    %1215 = vmatpush1.msra.mxu0 0.0
    %1216 = vmatprep.subr.mxu0 0.0
    %1217 = vmatpush1.msra.mxu0 0.0
    %1218 = vmatprep.mubr.f32.mxu0 0.0
    %1219 = vmatmul.mubr.f32.gmra.mrb[0].mxu0 %v1152
    %v1220 = vpop.f32.mrb[0].mxu0
    %v1221 = vadd.f32 0.0, %v1220
    %v1222 = vpop.f32.mrb[0].mxu0
    %1223 = vdwg.mxu0
    %v1224 = vpack.c.bf16 %v1221, %v1221
    %v1226 = vsel %vm185, %v1224, 0
    %v1229 = vsel %vm189, %v979, 0
    %1231 = vmatprep.subr.bf16.mxu0 0
    %1232 = vmatpush1.bf16.msra.mxu0 %v1229
    %1233 = vmatprep.subr.bf16.mxu0 0
    %1234 = vmatpush1.bf16.msra.mxu0 0
    %1235 = vmatprep.subr.bf16.mxu0 0
    %1236 = vmatpush1.bf16.msra.mxu0 0
    %1237 = vmatprep.subr.bf16.mxu0 0
    %1238 = vmatpush1.bf16.msra.mxu0 0
    %1239 = vmatprep.subr.bf16.mxu0 0
    %1240 = vmatpush1.bf16.msra.mxu0 0
    %1241 = vmatprep.subr.bf16.mxu0 0
    %1242 = vmatpush1.bf16.msra.mxu0 0
    %1243 = vmatprep.subr.bf16.mxu0 0
    %1244 = vmatpush1.bf16.msra.mxu0 0
    %1245 = vmatprep.subr.bf16.mxu0 0
    %1246 = vmatpush1.bf16.msra.mxu0 0
    %1247 = vmatprep.subr.bf16.mxu0 0
    %1248 = vmatpush1.bf16.msra.mxu0 0
    %1249 = vmatprep.subr.bf16.mxu0 0
    %1250 = vmatpush1.bf16.msra.mxu0 0
    %1251 = vmatprep.subr.bf16.mxu0 0
    %1252 = vmatpush1.bf16.msra.mxu0 0
    %1253 = vmatprep.subr.bf16.mxu0 0
    %1254 = vmatpush1.bf16.msra.mxu0 0
    %1255 = vmatprep.subr.bf16.mxu0 0
    %1256 = vmatpush1.bf16.msra.mxu0 0
    %1257 = vmatprep.subr.bf16.mxu0 0
    %1258 = vmatpush1.bf16.msra.mxu0 0
    %1259 = vmatprep.subr.bf16.mxu0 0
    %1260 = vmatpush1.bf16.msra.mxu0 0
    %1261 = vmatprep.subr.bf16.mxu0 0
    %1262 = vmatpush1.bf16.msra.mxu0 0
    %1263 = vmatprep.mubr.bf16.mxu0 0
    %1264 = vmatmul.mubr.bf16.gmra.mrb[0].mxu0 %v1226
    %v1265 = vpop.f32.mrb[0].mxu0
    %v1266 = vadd.f32 0.0, %v1265
    %v1267 = vpop.f32.mrb[0].mxu0
    %v1268 = vpop.f32.mrb[0].mxu0
    %v1269 = vpop.f32.mrb[0].mxu0
    %1270 = vdwg.mxu0
    %s1271 = scalar_lea.vmem %s6, 24
    %v1272 = vld [vmem:[%s1271] sm:$0xff]
    %v1273 = vsub.f32 %v1266, %v1272
    %v1274 = vstv %s1141
    %v1275 = vmul.f32 %v1274, %v1273
    %v1276 = vsub.f32 %v978, %v1275
    %v1277 = vmax.f32 %v1276, 1e-20
    %v1278 = vlog2.pop %v1277
    %v1279 = vmul.f32 %v1278, 0.6931472
    %v1280 = vstv %s1144
    %v1281 = vmul.f32 %v1280, %v1279
    %v1282 = vmul.f32 %v1281, 1.442695
    %v1283 = vpow.pop %v1282
    %1285 = vset.pattern.permute.xlu0 0
    %1286 = vperm.xlu0 %1285, %v1148
    %v1287 = vpop.permute.xlu0 %1286
    %v1289 = vmul.f32 %v1287, %v1283
    %v1290 = vsub.f32 %v1276, %v1289
    %1292 = vset.pattern.permute.xlu0 0
    %1293 = vperm.xlu0 %1292, %v1146
    %v1294 = vpop.permute.xlu0 %1293
    %v1296 = vsub.f32 %v1276, %v1294
    %vm1297 = vcmp.gt.f32.partialorder %v1296, 0.0
    %v1298 = vsel %vm1297, %v1290, 0.0
    %v1299 = vmin.f32 %v1298, 1.0
    %v1300 = vmax.f32 %v1299, 0.0
    %v1301 = vrot.slane %v1300, 4
    %v1302 = vadd.f32 %v1300, %v1301
    %v1303 = vrot.slane %v1302, 2
    %v1304 = vadd.f32 %v1302, %v1303
    %v1305 = vrot.slane %v1304, 1
    %v1306 = vadd.f32 %v1304, %v1305
    %v1307 = vadd.f32 %v1306, 0.0001
    %v1308 = vrcp.pop %v1307
    %v1309 = vmul.f32 %v1300, %v1308
    %v1310 = vpack.c.bf16 %v1309, %v1309
    %1311 = vmatprep.subr.bf16.mxu0 0
    %1312 = vmatpush1.bf16.msra.mxu0 %v304
    %1313 = vmatprep.subr.bf16.mxu0 0
    %1314 = vmatpush1.bf16.msra.mxu0 %v305
    %1315 = vmatprep.subr.bf16.mxu0 0
    %1316 = vmatpush1.bf16.msra.mxu0 %v306
    %1317 = vmatprep.subr.bf16.mxu0 0
    %1318 = vmatpush1.bf16.msra.mxu0 %v307
    %1319 = vmatprep.subr.bf16.mxu0 0
    %1320 = vmatpush1.bf16.msra.mxu0 %v308
    %1321 = vmatprep.subr.bf16.mxu0 0
    %1322 = vmatpush1.bf16.msra.mxu0 %v309
    %1323 = vmatprep.subr.bf16.mxu0 0
    %1324 = vmatpush1.bf16.msra.mxu0 %v310
    %1325 = vmatprep.subr.bf16.mxu0 0
    %1326 = vmatpush1.bf16.msra.mxu0 %v311
    %1327 = vmatprep.subr.bf16.mxu0 0
    %1328 = vmatpush1.bf16.msra.mxu0 0
    %1329 = vmatprep.subr.bf16.mxu0 0
    %1330 = vmatpush1.bf16.msra.mxu0 0
    %1331 = vmatprep.subr.bf16.mxu0 0
    %1332 = vmatpush1.bf16.msra.mxu0 0
    %1333 = vmatprep.subr.bf16.mxu0 0
    %1334 = vmatpush1.bf16.msra.mxu0 0
    %1335 = vmatprep.subr.bf16.mxu0 0
    %1336 = vmatpush1.bf16.msra.mxu0 0
    %1337 = vmatprep.subr.bf16.mxu0 0
    %1338 = vmatpush1.bf16.msra.mxu0 0
    %1339 = vmatprep.subr.bf16.mxu0 0
    %1340 = vmatpush1.bf16.msra.mxu0 0
    %1341 = vmatprep.subr.bf16.mxu0 0
    %1342 = vmatpush1.bf16.msra.mxu0 0
    %1343 = vmatprep.mubr.bf16.mxu0 0
    %1344 = vmatmul.mubr.bf16.gmra.mrb[0].mxu0 %v1310
    %v1345 = vpop.f32.mrb[0].mxu0
    %v1346 = vadd.f32 0.0, %v1345
    %v1347 = vpop.f32.mrb[0].mxu0
    %v1348 = vpop.f32.mrb[0].mxu0
    %v1349 = vpop.f32.mrb[0].mxu0
    %1350 = vdwg.mxu0
    %v1352 = vsel %vm185, %v1130, 0
    %v1355 = vsel %vm185, %v1131, 0
    %v1358 = vsel %vm185, %v1132, 0
    %v1361 = vsel %vm185, %v1133, 0
    %1363 = vmatprep.subr.mxu0 0.0
    %1364 = vmatpush1.msra.mxu0 %v1346
    %1365 = vmatprep.subr.mxu0 0.0
    %1366 = vmatpush1.msra.mxu0 0.0
    %1367 = vmatprep.subr.mxu0 0.0
    %1368 = vmatpush1.msra.mxu0 0.0
    %1369 = vmatprep.subr.mxu0 0.0
    %1370 = vmatpush1.msra.mxu0 0.0
    %1371 = vmatprep.subr.mxu0 0.0
    %1372 = vmatpush1.msra.mxu0 0.0
    %1373 = vmatprep.subr.mxu0 0.0
    %1374 = vmatpush1.msra.mxu0 0.0
    %1375 = vmatprep.subr.mxu0 0.0
    %1376 = vmatpush1.msra.mxu0 0.0
    %1377 = vmatprep.subr.mxu0 0.0
    %1378 = vmatpush1.msra.mxu0 0.0
    %1379 = vmatprep.subr.mxu0 0.0
    %1380 = vmatpush1.msra.mxu0 0.0
    %1381 = vmatprep.subr.mxu0 0.0
    %1382 = vmatpush1.msra.mxu0 0.0
    %1383 = vmatprep.subr.mxu0 0.0
    %1384 = vmatpush1.msra.mxu0 0.0
    %1385 = vmatprep.subr.mxu0 0.0
    %1386 = vmatpush1.msra.mxu0 0.0
    %1387 = vmatprep.subr.mxu0 0.0
    %1388 = vmatpush1.msra.mxu0 0.0
    %1389 = vmatprep.subr.mxu0 0.0
    %1390 = vmatpush1.msra.mxu0 0.0
    %1391 = vmatprep.subr.mxu0 0.0
    %1392 = vmatpush1.msra.mxu0 0.0
    %1393 = vmatprep.subr.mxu0 0.0
    %1394 = vmatpush1.msra.mxu0 0.0
    %1395 = vmatprep.subr.mxu0 0.0
    %1396 = vmatpush1.msra.mxu0 0.0
    %1397 = vmatprep.subr.mxu0 0.0
    %1398 = vmatpush1.msra.mxu0 0.0
    %1399 = vmatprep.subr.mxu0 0.0
    %1400 = vmatpush1.msra.mxu0 0.0
    %1401 = vmatprep.subr.mxu0 0.0
    %1402 = vmatpush1.msra.mxu0 0.0
    %1403 = vmatprep.subr.mxu0 0.0
    %1404 = vmatpush1.msra.mxu0 0.0
    %1405 = vmatprep.subr.mxu0 0.0
    %1406 = vmatpush1.msra.mxu0 0.0
    %1407 = vmatprep.subr.mxu0 0.0
    %1408 = vmatpush1.msra.mxu0 0.0
    %1409 = vmatprep.subr.mxu0 0.0
    %1410 = vmatpush1.msra.mxu0 0.0
    %1411 = vmatprep.subr.mxu0 0.0
    %1412 = vmatpush1.msra.mxu0 0.0
    %1413 = vmatprep.subr.mxu0 0.0
    %1414 = vmatpush1.msra.mxu0 0.0
    %1415 = vmatprep.subr.mxu0 0.0
    %1416 = vmatpush1.msra.mxu0 0.0
    %1417 = vmatprep.subr.mxu0 0.0
    %1418 = vmatpush1.msra.mxu0 0.0
    %1419 = vmatprep.subr.mxu0 0.0
    %1420 = vmatpush1.msra.mxu0 0.0
    %1421 = vmatprep.subr.mxu0 0.0
    %1422 = vmatpush1.msra.mxu0 0.0
    %1423 = vmatprep.subr.mxu0 0.0
    %1424 = vmatpush1.msra.mxu0 0.0
    %1425 = vmatprep.subr.mxu0 0.0
    %1426 = vmatpush1.msra.mxu0 0.0
    %1427 = vmatprep.mubr.f32.mxu0 0.0
    %1428 = vmatmul.mubr.f32.gmra.mrb[0].mxu0 %v1352
    %v1429 = vpop.f32.mrb[0].mxu0
    %v1430 = vadd.f32 0.0, %v1429
    %v1431 = vpop.f32.mrb[0].mxu0
    %1432 = vmatprep.mubr.f32.mxu0 0.0
    %1433 = vmatmul.mubr.f32.gmra.mrb[0].mxu0 %v1355
    %v1434 = vpop.f32.mrb[0].mxu0
    %v1435 = vadd.f32 0.0, %v1434
    %v1436 = vpop.f32.mrb[0].mxu0
    %1437 = vmatprep.mubr.f32.mxu0 0.0
    %1438 = vmatmul.mubr.f32.gmra.mrb[0].mxu0 %v1358
    %v1439 = vpop.f32.mrb[0].mxu0
    %v1440 = vadd.f32 0.0, %v1439
    %v1441 = vpop.f32.mrb[0].mxu0
    %1442 = vmatprep.mubr.f32.mxu0 0.0
    %1443 = vmatmul.mubr.f32.gmra.mrb[0].mxu0 %v1361
    %v1444 = vpop.f32.mrb[0].mxu0
    %v1445 = vadd.f32 0.0, %v1444
    %v1446 = vpop.f32.mrb[0].mxu0
    %1447 = vdwg.mxu0
    %v1448 = vsub.f32 %v1430, %v93
    %v1449 = vsub.f32 %v1435, %v94
    %v1450 = vsub.f32 %v1440, %v95
    %v1451 = vsub.f32 %v1445, %v96
    %v1452 = vstv %s1142
    %v1453 = vmul.f32 %v1452, %v1448
    %v1454 = vmul.f32 %v1452, %v1449
    %v1455 = vmul.f32 %v1452, %v1450
    %v1456 = vmul.f32 %v1452, %v1451
    %v1457 = vsub.f32 %v1130, %v1453
    %v1458 = vsub.f32 %v1131, %v1454
    %v1459 = vsub.f32 %v1132, %v1455
    %v1460 = vsub.f32 %v1133, %v1456
    %v1461 = vmax.f32 %v1457, 0.0
    %v1462 = vmax.f32 %v1458, 0.0
    %v1463 = vmax.f32 %v1459, 0.0
    %v1464 = vmax.f32 %v1460, 0.0
    %s1465 = scalar_lea.vmem %s11, 96
    %1466 = vst.msk [vmem:[%s1465] sm:$0xff] %vm185, %v1461
    %1467 = vst.msk [vmem:[%s1465 + $0x8] sm:$0xff] %vm185, %v1462
    %1468 = vst.msk [vmem:[%s1465 + $0x10] sm:$0xff] %vm185, %v1463
    %1469 = vst.msk [vmem:[%s1465 + $0x18] sm:$0xff] %vm185, %v1464
    %s1470 = scalar_lea.vmem %s12, 24
    %1471 = vst [vmem:[%s1470] sm:$0xff] %v1309
    %s1472 = sld [smem:[#allocation2 + $0x4]]
    %s1473 = sld [smem:[#allocation4 + $0x4]]
    %s1474 = sld [smem:[#allocation6 + $0x4]]
    %s1475 = ssub.f32 %s1474, 1.0
    %s1476 = scalar_lea.vmem %s3, 32
    %v1477 = vld [vmem:[%s1476] sm:$0xff]
    %s1478 = scalar_lea.vmem %s4, 32
    %v1479 = vld [vmem:[%s1478] sm:$0xff]
    %s1480 = scalar_lea.vmem %s5, 32
    %v1481 = vld [vmem:[%s1480] sm:$0xff]
    %v1483 = vsel %vm109, %v1481, 0
    %1485 = vmatprep.subr.mxu0 0.0
    %1486 = vmatpush1.msra.mxu0 %v1461
    %1487 = vmatprep.subr.mxu0 0.0
    %1488 = vmatpush1.msra.mxu0 %v1462
    %1489 = vmatprep.subr.mxu0 0.0
    %1490 = vmatpush1.msra.mxu0 %v1463
    %1491 = vmatprep.subr.mxu0 0.0
    %1492 = vmatpush1.msra.mxu0 %v1464
    %1493 = vmatprep.subr.mxu0 0.0
    %1494 = vmatpush1.msra.mxu0 0.0
    %1495 = vmatprep.subr.mxu0 0.0
    %1496 = vmatpush1.msra.mxu0 0.0
    %1497 = vmatprep.subr.mxu0 0.0
    %1498 = vmatpush1.msra.mxu0 0.0
    %1499 = vmatprep.subr.mxu0 0.0
    %1500 = vmatpush1.msra.mxu0 0.0
    %1501 = vmatprep.subr.mxu0 0.0
    %1502 = vmatpush1.msra.mxu0 0.0
    %1503 = vmatprep.subr.mxu0 0.0
    %1504 = vmatpush1.msra.mxu0 0.0
    %1505 = vmatprep.subr.mxu0 0.0
    %1506 = vmatpush1.msra.mxu0 0.0
    %1507 = vmatprep.subr.mxu0 0.0
    %1508 = vmatpush1.msra.mxu0 0.0
    %1509 = vmatprep.subr.mxu0 0.0
    %1510 = vmatpush1.msra.mxu0 0.0
    %1511 = vmatprep.subr.mxu0 0.0
    %1512 = vmatpush1.msra.mxu0 0.0
    %1513 = vmatprep.subr.mxu0 0.0
    %1514 = vmatpush1.msra.mxu0 0.0
    %1515 = vmatprep.subr.mxu0 0.0
    %1516 = vmatpush1.msra.mxu0 0.0
    %1517 = vmatprep.subr.mxu0 0.0
    %1518 = vmatpush1.msra.mxu0 0.0
    %1519 = vmatprep.subr.mxu0 0.0
    %1520 = vmatpush1.msra.mxu0 0.0
    %1521 = vmatprep.subr.mxu0 0.0
    %1522 = vmatpush1.msra.mxu0 0.0
    %1523 = vmatprep.subr.mxu0 0.0
    %1524 = vmatpush1.msra.mxu0 0.0
    %1525 = vmatprep.subr.mxu0 0.0
    %1526 = vmatpush1.msra.mxu0 0.0
    %1527 = vmatprep.subr.mxu0 0.0
    %1528 = vmatpush1.msra.mxu0 0.0
    %1529 = vmatprep.subr.mxu0 0.0
    %1530 = vmatpush1.msra.mxu0 0.0
    %1531 = vmatprep.subr.mxu0 0.0
    %1532 = vmatpush1.msra.mxu0 0.0
    %1533 = vmatprep.subr.mxu0 0.0
    %1534 = vmatpush1.msra.mxu0 0.0
    %1535 = vmatprep.subr.mxu0 0.0
    %1536 = vmatpush1.msra.mxu0 0.0
    %1537 = vmatprep.subr.mxu0 0.0
    %1538 = vmatpush1.msra.mxu0 0.0
    %1539 = vmatprep.subr.mxu0 0.0
    %1540 = vmatpush1.msra.mxu0 0.0
    %1541 = vmatprep.subr.mxu0 0.0
    %1542 = vmatpush1.msra.mxu0 0.0
    %1543 = vmatprep.subr.mxu0 0.0
    %1544 = vmatpush1.msra.mxu0 0.0
    %1545 = vmatprep.subr.mxu0 0.0
    %1546 = vmatpush1.msra.mxu0 0.0
    %1547 = vmatprep.subr.mxu0 0.0
    %1548 = vmatpush1.msra.mxu0 0.0
    %1549 = vmatprep.mubr.f32.mxu0 0.0
    %1550 = vmatmul.mubr.f32.gmra.mrb[0].mxu0 %v1483
    %v1551 = vpop.f32.mrb[0].mxu0
    %v1552 = vadd.f32 0.0, %v1551
    %v1553 = vpop.f32.mrb[0].mxu0
    %1554 = vdwg.mxu0
    %v1555 = vpack.c.bf16 %v1552, %v1552
    %v1557 = vsel %vm185, %v1555, 0
    %v1560 = vsel %vm189, %v1310, 0
    %1562 = vmatprep.subr.bf16.mxu0 0
    %1563 = vmatpush1.bf16.msra.mxu0 %v1560
    %1564 = vmatprep.subr.bf16.mxu0 0
    %1565 = vmatpush1.bf16.msra.mxu0 0
    %1566 = vmatprep.subr.bf16.mxu0 0
    %1567 = vmatpush1.bf16.msra.mxu0 0
    %1568 = vmatprep.subr.bf16.mxu0 0
    %1569 = vmatpush1.bf16.msra.mxu0 0
    %1570 = vmatprep.subr.bf16.mxu0 0
    %1571 = vmatpush1.bf16.msra.mxu0 0
    %1572 = vmatprep.subr.bf16.mxu0 0
    %1573 = vmatpush1.bf16.msra.mxu0 0
    %1574 = vmatprep.subr.bf16.mxu0 0
    %1575 = vmatpush1.bf16.msra.mxu0 0
    %1576 = vmatprep.subr.bf16.mxu0 0
    %1577 = vmatpush1.bf16.msra.mxu0 0
    %1578 = vmatprep.subr.bf16.mxu0 0
    %1579 = vmatpush1.bf16.msra.mxu0 0
    %1580 = vmatprep.subr.bf16.mxu0 0
    %1581 = vmatpush1.bf16.msra.mxu0 0
    %1582 = vmatprep.subr.bf16.mxu0 0
    %1583 = vmatpush1.bf16.msra.mxu0 0
    %1584 = vmatprep.subr.bf16.mxu0 0
    %1585 = vmatpush1.bf16.msra.mxu0 0
    %1586 = vmatprep.subr.bf16.mxu0 0
    %1587 = vmatpush1.bf16.msra.mxu0 0
    %1588 = vmatprep.subr.bf16.mxu0 0
    %1589 = vmatpush1.bf16.msra.mxu0 0
    %1590 = vmatprep.subr.bf16.mxu0 0
    %1591 = vmatpush1.bf16.msra.mxu0 0
    %1592 = vmatprep.subr.bf16.mxu0 0
    %1593 = vmatpush1.bf16.msra.mxu0 0
    %1594 = vmatprep.mubr.bf16.mxu0 0
    %1595 = vmatmul.mubr.bf16.gmra.mrb[0].mxu0 %v1557
    %v1596 = vpop.f32.mrb[0].mxu0
    %v1597 = vadd.f32 0.0, %v1596
    %v1598 = vpop.f32.mrb[0].mxu0
    %v1599 = vpop.f32.mrb[0].mxu0
    %v1600 = vpop.f32.mrb[0].mxu0
    %1601 = vdwg.mxu0
    %s1602 = scalar_lea.vmem %s6, 32
    %v1603 = vld [vmem:[%s1602] sm:$0xff]
    %v1604 = vsub.f32 %v1597, %v1603
    %v1605 = vstv %s1472
    %v1606 = vmul.f32 %v1605, %v1604
    %v1607 = vsub.f32 %v1309, %v1606
    %v1608 = vmax.f32 %v1607, 1e-20
    %v1609 = vlog2.pop %v1608
    %v1610 = vmul.f32 %v1609, 0.6931472
    %v1611 = vstv %s1475
    %v1612 = vmul.f32 %v1611, %v1610
    %v1613 = vmul.f32 %v1612, 1.442695
    %v1614 = vpow.pop %v1613
    %1616 = vset.pattern.permute.xlu0 0
    %1617 = vperm.xlu0 %1616, %v1479
    %v1618 = vpop.permute.xlu0 %1617
    %v1620 = vmul.f32 %v1618, %v1614
    %v1621 = vsub.f32 %v1607, %v1620
    %1623 = vset.pattern.permute.xlu0 0
    %1624 = vperm.xlu0 %1623, %v1477
    %v1625 = vpop.permute.xlu0 %1624
    %v1627 = vsub.f32 %v1607, %v1625
    %vm1628 = vcmp.gt.f32.partialorder %v1627, 0.0
    %v1629 = vsel %vm1628, %v1621, 0.0
    %v1630 = vmin.f32 %v1629, 1.0
    %v1631 = vmax.f32 %v1630, 0.0
    %v1632 = vrot.slane %v1631, 4
    %v1633 = vadd.f32 %v1631, %v1632
    %v1634 = vrot.slane %v1633, 2
    %v1635 = vadd.f32 %v1633, %v1634
    %v1636 = vrot.slane %v1635, 1
    %v1637 = vadd.f32 %v1635, %v1636
    %v1638 = vadd.f32 %v1637, 0.0001
    %v1639 = vrcp.pop %v1638
    %v1640 = vmul.f32 %v1631, %v1639
    %v1641 = vpack.c.bf16 %v1640, %v1640
    %1642 = vmatprep.subr.bf16.mxu0 0
    %1643 = vmatpush1.bf16.msra.mxu0 %v304
    %1644 = vmatprep.subr.bf16.mxu0 0
    %1645 = vmatpush1.bf16.msra.mxu0 %v305
    %1646 = vmatprep.subr.bf16.mxu0 0
    %1647 = vmatpush1.bf16.msra.mxu0 %v306
    %1648 = vmatprep.subr.bf16.mxu0 0
    %1649 = vmatpush1.bf16.msra.mxu0 %v307
    %1650 = vmatprep.subr.bf16.mxu0 0
    %1651 = vmatpush1.bf16.msra.mxu0 %v308
    %1652 = vmatprep.subr.bf16.mxu0 0
    %1653 = vmatpush1.bf16.msra.mxu0 %v309
    %1654 = vmatprep.subr.bf16.mxu0 0
    %1655 = vmatpush1.bf16.msra.mxu0 %v310
    %1656 = vmatprep.subr.bf16.mxu0 0
    %1657 = vmatpush1.bf16.msra.mxu0 %v311
    %1658 = vmatprep.subr.bf16.mxu0 0
    %1659 = vmatpush1.bf16.msra.mxu0 0
    %1660 = vmatprep.subr.bf16.mxu0 0
    %1661 = vmatpush1.bf16.msra.mxu0 0
    %1662 = vmatprep.subr.bf16.mxu0 0
    %1663 = vmatpush1.bf16.msra.mxu0 0
    %1664 = vmatprep.subr.bf16.mxu0 0
    %1665 = vmatpush1.bf16.msra.mxu0 0
    %1666 = vmatprep.subr.bf16.mxu0 0
    %1667 = vmatpush1.bf16.msra.mxu0 0
    %1668 = vmatprep.subr.bf16.mxu0 0
    %1669 = vmatpush1.bf16.msra.mxu0 0
    %1670 = vmatprep.subr.bf16.mxu0 0
    %1671 = vmatpush1.bf16.msra.mxu0 0
    %1672 = vmatprep.subr.bf16.mxu0 0
    %1673 = vmatpush1.bf16.msra.mxu0 0
    %1674 = vmatprep.mubr.bf16.mxu0 0
    %1675 = vmatmul.mubr.bf16.gmra.mrb[0].mxu0 %v1641
    %v1676 = vpop.f32.mrb[0].mxu0
    %v1677 = vadd.f32 0.0, %v1676
    %v1678 = vpop.f32.mrb[0].mxu0
    %v1679 = vpop.f32.mrb[0].mxu0
    %v1680 = vpop.f32.mrb[0].mxu0
    %1681 = vdwg.mxu0
    %v1683 = vsel %vm185, %v1461, 0
    %v1686 = vsel %vm185, %v1462, 0
    %v1689 = vsel %vm185, %v1463, 0
    %v1692 = vsel %vm185, %v1464, 0
    %1694 = vmatprep.subr.mxu0 0.0
    %1695 = vmatpush1.msra.mxu0 %v1677
    %1696 = vmatprep.subr.mxu0 0.0
    %1697 = vmatpush1.msra.mxu0 0.0
    %1698 = vmatprep.subr.mxu0 0.0
    %1699 = vmatpush1.msra.mxu0 0.0
    %1700 = vmatprep.subr.mxu0 0.0
    %1701 = vmatpush1.msra.mxu0 0.0
    %1702 = vmatprep.subr.mxu0 0.0
    %1703 = vmatpush1.msra.mxu0 0.0
    %1704 = vmatprep.subr.mxu0 0.0
    %1705 = vmatpush1.msra.mxu0 0.0
    %1706 = vmatprep.subr.mxu0 0.0
    %1707 = vmatpush1.msra.mxu0 0.0
    %1708 = vmatprep.subr.mxu0 0.0
    %1709 = vmatpush1.msra.mxu0 0.0
    %1710 = vmatprep.subr.mxu0 0.0
    %1711 = vmatpush1.msra.mxu0 0.0
    %1712 = vmatprep.subr.mxu0 0.0
    %1713 = vmatpush1.msra.mxu0 0.0
    %1714 = vmatprep.subr.mxu0 0.0
    %1715 = vmatpush1.msra.mxu0 0.0
    %1716 = vmatprep.subr.mxu0 0.0
    %1717 = vmatpush1.msra.mxu0 0.0
    %1718 = vmatprep.subr.mxu0 0.0
    %1719 = vmatpush1.msra.mxu0 0.0
    %1720 = vmatprep.subr.mxu0 0.0
    %1721 = vmatpush1.msra.mxu0 0.0
    %1722 = vmatprep.subr.mxu0 0.0
    %1723 = vmatpush1.msra.mxu0 0.0
    %1724 = vmatprep.subr.mxu0 0.0
    %1725 = vmatpush1.msra.mxu0 0.0
    %1726 = vmatprep.subr.mxu0 0.0
    %1727 = vmatpush1.msra.mxu0 0.0
    %1728 = vmatprep.subr.mxu0 0.0
    %1729 = vmatpush1.msra.mxu0 0.0
    %1730 = vmatprep.subr.mxu0 0.0
    %1731 = vmatpush1.msra.mxu0 0.0
    %1732 = vmatprep.subr.mxu0 0.0
    %1733 = vmatpush1.msra.mxu0 0.0
    %1734 = vmatprep.subr.mxu0 0.0
    %1735 = vmatpush1.msra.mxu0 0.0
    %1736 = vmatprep.subr.mxu0 0.0
    %1737 = vmatpush1.msra.mxu0 0.0
    %1738 = vmatprep.subr.mxu0 0.0
    %1739 = vmatpush1.msra.mxu0 0.0
    %1740 = vmatprep.subr.mxu0 0.0
    %1741 = vmatpush1.msra.mxu0 0.0
    %1742 = vmatprep.subr.mxu0 0.0
    %1743 = vmatpush1.msra.mxu0 0.0
    %1744 = vmatprep.subr.mxu0 0.0
    %1745 = vmatpush1.msra.mxu0 0.0
    %1746 = vmatprep.subr.mxu0 0.0
    %1747 = vmatpush1.msra.mxu0 0.0
    %1748 = vmatprep.subr.mxu0 0.0
    %1749 = vmatpush1.msra.mxu0 0.0
    %1750 = vmatprep.subr.mxu0 0.0
    %1751 = vmatpush1.msra.mxu0 0.0
    %1752 = vmatprep.subr.mxu0 0.0
    %1753 = vmatpush1.msra.mxu0 0.0
    %1754 = vmatprep.subr.mxu0 0.0
    %1755 = vmatpush1.msra.mxu0 0.0
    %1756 = vmatprep.subr.mxu0 0.0
    %1757 = vmatpush1.msra.mxu0 0.0
    %1758 = vmatprep.mubr.f32.mxu0 0.0
    %1759 = vmatmul.mubr.f32.gmra.mrb[0].mxu0 %v1683
    %v1760 = vpop.f32.mrb[0].mxu0
    %v1761 = vadd.f32 0.0, %v1760
    %v1762 = vpop.f32.mrb[0].mxu0
    %1763 = vmatprep.mubr.f32.mxu0 0.0
    %1764 = vmatmul.mubr.f32.gmra.mrb[0].mxu0 %v1686
    %v1765 = vpop.f32.mrb[0].mxu0
    %v1766 = vadd.f32 0.0, %v1765
    %v1767 = vpop.f32.mrb[0].mxu0
    %1768 = vmatprep.mubr.f32.mxu0 0.0
    %1769 = vmatmul.mubr.f32.gmra.mrb[0].mxu0 %v1689
    %v1770 = vpop.f32.mrb[0].mxu0
    %v1771 = vadd.f32 0.0, %v1770
    %v1772 = vpop.f32.mrb[0].mxu0
    %1773 = vmatprep.mubr.f32.mxu0 0.0
    %1774 = vmatmul.mubr.f32.gmra.mrb[0].mxu0 %v1692
    %v1775 = vpop.f32.mrb[0].mxu0
    %v1776 = vadd.f32 0.0, %v1775
    %v1777 = vpop.f32.mrb[0].mxu0
    %1778 = vdwg.mxu0
    %v1779 = vsub.f32 %v1761, %v93
    %v1780 = vsub.f32 %v1766, %v94
    %v1781 = vsub.f32 %v1771, %v95
    %v1782 = vsub.f32 %v1776, %v96
    %v1783 = vstv %s1473
    %v1784 = vmul.f32 %v1783, %v1779
    %v1785 = vmul.f32 %v1783, %v1780
    %v1786 = vmul.f32 %v1783, %v1781
    %v1787 = vmul.f32 %v1783, %v1782
    %v1788 = vsub.f32 %v1461, %v1784
    %v1789 = vsub.f32 %v1462, %v1785
    %v1790 = vsub.f32 %v1463, %v1786
    %v1791 = vsub.f32 %v1464, %v1787
    %v1792 = vmax.f32 %v1788, 0.0
    %v1793 = vmax.f32 %v1789, 0.0
    %v1794 = vmax.f32 %v1790, 0.0
    %v1795 = vmax.f32 %v1791, 0.0
    %s1796 = scalar_lea.vmem %s11, 128
    %1797 = vst.msk [vmem:[%s1796] sm:$0xff] %vm185, %v1792
    %1798 = vst.msk [vmem:[%s1796 + $0x8] sm:$0xff] %vm185, %v1793
    %1799 = vst.msk [vmem:[%s1796 + $0x10] sm:$0xff] %vm185, %v1794
    %1800 = vst.msk [vmem:[%s1796 + $0x18] sm:$0xff] %vm185, %v1795
    %s1801 = scalar_lea.vmem %s12, 32
    %1802 = vst [vmem:[%s1801] sm:$0xff] %v1640
    %s1803 = sld [smem:[#allocation2 + $0x5]]
    %s1804 = sld [smem:[#allocation4 + $0x5]]
    %s1805 = sld [smem:[#allocation6 + $0x5]]
    %s1806 = ssub.f32 %s1805, 1.0
    %s1807 = scalar_lea.vmem %s3, 40
    %v1808 = vld [vmem:[%s1807] sm:$0xff]
    %s1809 = scalar_lea.vmem %s4, 40
    %v1810 = vld [vmem:[%s1809] sm:$0xff]
    %s1811 = scalar_lea.vmem %s5, 40
    %v1812 = vld [vmem:[%s1811] sm:$0xff]
    %v1814 = vsel %vm109, %v1812, 0
    %1816 = vmatprep.subr.mxu0 0.0
    %1817 = vmatpush1.msra.mxu0 %v1792
    %1818 = vmatprep.subr.mxu0 0.0
    %1819 = vmatpush1.msra.mxu0 %v1793
    %1820 = vmatprep.subr.mxu0 0.0
    %1821 = vmatpush1.msra.mxu0 %v1794
    %1822 = vmatprep.subr.mxu0 0.0
    %1823 = vmatpush1.msra.mxu0 %v1795
    %1824 = vmatprep.subr.mxu0 0.0
    %1825 = vmatpush1.msra.mxu0 0.0
    %1826 = vmatprep.subr.mxu0 0.0
    %1827 = vmatpush1.msra.mxu0 0.0
    %1828 = vmatprep.subr.mxu0 0.0
    %1829 = vmatpush1.msra.mxu0 0.0
    %1830 = vmatprep.subr.mxu0 0.0
    %1831 = vmatpush1.msra.mxu0 0.0
    %1832 = vmatprep.subr.mxu0 0.0
    %1833 = vmatpush1.msra.mxu0 0.0
    %1834 = vmatprep.subr.mxu0 0.0
    %1835 = vmatpush1.msra.mxu0 0.0
    %1836 = vmatprep.subr.mxu0 0.0
    %1837 = vmatpush1.msra.mxu0 0.0
    %1838 = vmatprep.subr.mxu0 0.0
    %1839 = vmatpush1.msra.mxu0 0.0
    %1840 = vmatprep.subr.mxu0 0.0
    %1841 = vmatpush1.msra.mxu0 0.0
    %1842 = vmatprep.subr.mxu0 0.0
    %1843 = vmatpush1.msra.mxu0 0.0
    %1844 = vmatprep.subr.mxu0 0.0
    %1845 = vmatpush1.msra.mxu0 0.0
    %1846 = vmatprep.subr.mxu0 0.0
    %1847 = vmatpush1.msra.mxu0 0.0
    %1848 = vmatprep.subr.mxu0 0.0
    %1849 = vmatpush1.msra.mxu0 0.0
    %1850 = vmatprep.subr.mxu0 0.0
    %1851 = vmatpush1.msra.mxu0 0.0
    %1852 = vmatprep.subr.mxu0 0.0
    %1853 = vmatpush1.msra.mxu0 0.0
    %1854 = vmatprep.subr.mxu0 0.0
    %1855 = vmatpush1.msra.mxu0 0.0
    %1856 = vmatprep.subr.mxu0 0.0
    %1857 = vmatpush1.msra.mxu0 0.0
    %1858 = vmatprep.subr.mxu0 0.0
    %1859 = vmatpush1.msra.mxu0 0.0
    %1860 = vmatprep.subr.mxu0 0.0
    %1861 = vmatpush1.msra.mxu0 0.0
    %1862 = vmatprep.subr.mxu0 0.0
    %1863 = vmatpush1.msra.mxu0 0.0
    %1864 = vmatprep.subr.mxu0 0.0
    %1865 = vmatpush1.msra.mxu0 0.0
    %1866 = vmatprep.subr.mxu0 0.0
    %1867 = vmatpush1.msra.mxu0 0.0
    %1868 = vmatprep.subr.mxu0 0.0
    %1869 = vmatpush1.msra.mxu0 0.0
    %1870 = vmatprep.subr.mxu0 0.0
    %1871 = vmatpush1.msra.mxu0 0.0
    %1872 = vmatprep.subr.mxu0 0.0
    %1873 = vmatpush1.msra.mxu0 0.0
    %1874 = vmatprep.subr.mxu0 0.0
    %1875 = vmatpush1.msra.mxu0 0.0
    %1876 = vmatprep.subr.mxu0 0.0
    %1877 = vmatpush1.msra.mxu0 0.0
    %1878 = vmatprep.subr.mxu0 0.0
    %1879 = vmatpush1.msra.mxu0 0.0
    %1880 = vmatprep.mubr.f32.mxu0 0.0
    %1881 = vmatmul.mubr.f32.gmra.mrb[0].mxu0 %v1814
    %v1882 = vpop.f32.mrb[0].mxu0
    %v1883 = vadd.f32 0.0, %v1882
    %v1884 = vpop.f32.mrb[0].mxu0
    %1885 = vdwg.mxu0
    %v1886 = vpack.c.bf16 %v1883, %v1883
    %v1888 = vsel %vm185, %v1886, 0
    %v1891 = vsel %vm189, %v1641, 0
    %1893 = vmatprep.subr.bf16.mxu0 0
    %1894 = vmatpush1.bf16.msra.mxu0 %v1891
    %1895 = vmatprep.subr.bf16.mxu0 0
    %1896 = vmatpush1.bf16.msra.mxu0 0
    %1897 = vmatprep.subr.bf16.mxu0 0
    %1898 = vmatpush1.bf16.msra.mxu0 0
    %1899 = vmatprep.subr.bf16.mxu0 0
    %1900 = vmatpush1.bf16.msra.mxu0 0
    %1901 = vmatprep.subr.bf16.mxu0 0
    %1902 = vmatpush1.bf16.msra.mxu0 0
    %1903 = vmatprep.subr.bf16.mxu0 0
    %1904 = vmatpush1.bf16.msra.mxu0 0
    %1905 = vmatprep.subr.bf16.mxu0 0
    %1906 = vmatpush1.bf16.msra.mxu0 0
    %1907 = vmatprep.subr.bf16.mxu0 0
    %1908 = vmatpush1.bf16.msra.mxu0 0
    %1909 = vmatprep.subr.bf16.mxu0 0
    %1910 = vmatpush1.bf16.msra.mxu0 0
    %1911 = vmatprep.subr.bf16.mxu0 0
    %1912 = vmatpush1.bf16.msra.mxu0 0
    %1913 = vmatprep.subr.bf16.mxu0 0
    %1914 = vmatpush1.bf16.msra.mxu0 0
    %1915 = vmatprep.subr.bf16.mxu0 0
    %1916 = vmatpush1.bf16.msra.mxu0 0
    %1917 = vmatprep.subr.bf16.mxu0 0
    %1918 = vmatpush1.bf16.msra.mxu0 0
    %1919 = vmatprep.subr.bf16.mxu0 0
    %1920 = vmatpush1.bf16.msra.mxu0 0
    %1921 = vmatprep.subr.bf16.mxu0 0
    %1922 = vmatpush1.bf16.msra.mxu0 0
    %1923 = vmatprep.subr.bf16.mxu0 0
    %1924 = vmatpush1.bf16.msra.mxu0 0
    %1925 = vmatprep.mubr.bf16.mxu0 0
    %1926 = vmatmul.mubr.bf16.gmra.mrb[0].mxu0 %v1888
    %v1927 = vpop.f32.mrb[0].mxu0
    %v1928 = vadd.f32 0.0, %v1927
    %v1929 = vpop.f32.mrb[0].mxu0
    %v1930 = vpop.f32.mrb[0].mxu0
    %v1931 = vpop.f32.mrb[0].mxu0
    %1932 = vdwg.mxu0
    %s1933 = scalar_lea.vmem %s6, 40
    %v1934 = vld [vmem:[%s1933] sm:$0xff]
    %v1935 = vsub.f32 %v1928, %v1934
    %v1936 = vstv %s1803
    %v1937 = vmul.f32 %v1936, %v1935
    %v1938 = vsub.f32 %v1640, %v1937
    %v1939 = vmax.f32 %v1938, 1e-20
    %v1940 = vlog2.pop %v1939
    %v1941 = vmul.f32 %v1940, 0.6931472
    %v1942 = vstv %s1806
    %v1943 = vmul.f32 %v1942, %v1941
    %v1944 = vmul.f32 %v1943, 1.442695
    %v1945 = vpow.pop %v1944
    %1947 = vset.pattern.permute.xlu0 0
    %1948 = vperm.xlu0 %1947, %v1810
    %v1949 = vpop.permute.xlu0 %1948
    %v1951 = vmul.f32 %v1949, %v1945
    %v1952 = vsub.f32 %v1938, %v1951
    %1954 = vset.pattern.permute.xlu0 0
    %1955 = vperm.xlu0 %1954, %v1808
    %v1956 = vpop.permute.xlu0 %1955
    %v1958 = vsub.f32 %v1938, %v1956
    %vm1959 = vcmp.gt.f32.partialorder %v1958, 0.0
    %v1960 = vsel %vm1959, %v1952, 0.0
    %v1961 = vmin.f32 %v1960, 1.0
    %v1962 = vmax.f32 %v1961, 0.0
    %v1963 = vrot.slane %v1962, 4
    %v1964 = vadd.f32 %v1962, %v1963
    %v1965 = vrot.slane %v1964, 2
    %v1966 = vadd.f32 %v1964, %v1965
    %v1967 = vrot.slane %v1966, 1
    %v1968 = vadd.f32 %v1966, %v1967
    %v1969 = vadd.f32 %v1968, 0.0001
    %v1970 = vrcp.pop %v1969
    %v1971 = vmul.f32 %v1962, %v1970
    %v1972 = vpack.c.bf16 %v1971, %v1971
    %1973 = vmatprep.subr.bf16.mxu0 0
    %1974 = vmatpush1.bf16.msra.mxu0 %v304
    %1975 = vmatprep.subr.bf16.mxu0 0
    %1976 = vmatpush1.bf16.msra.mxu0 %v305
    %1977 = vmatprep.subr.bf16.mxu0 0
    %1978 = vmatpush1.bf16.msra.mxu0 %v306
    %1979 = vmatprep.subr.bf16.mxu0 0
    %1980 = vmatpush1.bf16.msra.mxu0 %v307
    %1981 = vmatprep.subr.bf16.mxu0 0
    %1982 = vmatpush1.bf16.msra.mxu0 %v308
    %1983 = vmatprep.subr.bf16.mxu0 0
    %1984 = vmatpush1.bf16.msra.mxu0 %v309
    %1985 = vmatprep.subr.bf16.mxu0 0
    %1986 = vmatpush1.bf16.msra.mxu0 %v310
    %1987 = vmatprep.subr.bf16.mxu0 0
    %1988 = vmatpush1.bf16.msra.mxu0 %v311
    %1989 = vmatprep.subr.bf16.mxu0 0
    %1990 = vmatpush1.bf16.msra.mxu0 0
    %1991 = vmatprep.subr.bf16.mxu0 0
    %1992 = vmatpush1.bf16.msra.mxu0 0
    %1993 = vmatprep.subr.bf16.mxu0 0
    %1994 = vmatpush1.bf16.msra.mxu0 0
    %1995 = vmatprep.subr.bf16.mxu0 0
    %1996 = vmatpush1.bf16.msra.mxu0 0
    %1997 = vmatprep.subr.bf16.mxu0 0
    %1998 = vmatpush1.bf16.msra.mxu0 0
    %1999 = vmatprep.subr.bf16.mxu0 0
    %2000 = vmatpush1.bf16.msra.mxu0 0
    %2001 = vmatprep.subr.bf16.mxu0 0
    %2002 = vmatpush1.bf16.msra.mxu0 0
    %2003 = vmatprep.subr.bf16.mxu0 0
    %2004 = vmatpush1.bf16.msra.mxu0 0
    %2005 = vmatprep.mubr.bf16.mxu0 0
    %2006 = vmatmul.mubr.bf16.gmra.mrb[0].mxu0 %v1972
    %v2007 = vpop.f32.mrb[0].mxu0
    %v2008 = vadd.f32 0.0, %v2007
    %v2009 = vpop.f32.mrb[0].mxu0
    %v2010 = vpop.f32.mrb[0].mxu0
    %v2011 = vpop.f32.mrb[0].mxu0
    %2012 = vdwg.mxu0
    %v2014 = vsel %vm185, %v1792, 0
    %v2017 = vsel %vm185, %v1793, 0
    %v2020 = vsel %vm185, %v1794, 0
    %v2023 = vsel %vm185, %v1795, 0
    %2025 = vmatprep.subr.mxu0 0.0
    %2026 = vmatpush1.msra.mxu0 %v2008
    %2027 = vmatprep.subr.mxu0 0.0
    %2028 = vmatpush1.msra.mxu0 0.0
    %2029 = vmatprep.subr.mxu0 0.0
    %2030 = vmatpush1.msra.mxu0 0.0
    %2031 = vmatprep.subr.mxu0 0.0
    %2032 = vmatpush1.msra.mxu0 0.0
    %2033 = vmatprep.subr.mxu0 0.0
    %2034 = vmatpush1.msra.mxu0 0.0
    %2035 = vmatprep.subr.mxu0 0.0
    %2036 = vmatpush1.msra.mxu0 0.0
    %2037 = vmatprep.subr.mxu0 0.0
    %2038 = vmatpush1.msra.mxu0 0.0
    %2039 = vmatprep.subr.mxu0 0.0
    %2040 = vmatpush1.msra.mxu0 0.0
    %2041 = vmatprep.subr.mxu0 0.0
    %2042 = vmatpush1.msra.mxu0 0.0
    %2043 = vmatprep.subr.mxu0 0.0
    %2044 = vmatpush1.msra.mxu0 0.0
    %2045 = vmatprep.subr.mxu0 0.0
    %2046 = vmatpush1.msra.mxu0 0.0
    %2047 = vmatprep.subr.mxu0 0.0
    %2048 = vmatpush1.msra.mxu0 0.0
    %2049 = vmatprep.subr.mxu0 0.0
    %2050 = vmatpush1.msra.mxu0 0.0
    %2051 = vmatprep.subr.mxu0 0.0
    %2052 = vmatpush1.msra.mxu0 0.0
    %2053 = vmatprep.subr.mxu0 0.0
    %2054 = vmatpush1.msra.mxu0 0.0
    %2055 = vmatprep.subr.mxu0 0.0
    %2056 = vmatpush1.msra.mxu0 0.0
    %2057 = vmatprep.subr.mxu0 0.0
    %2058 = vmatpush1.msra.mxu0 0.0
    %2059 = vmatprep.subr.mxu0 0.0
    %2060 = vmatpush1.msra.mxu0 0.0
    %2061 = vmatprep.subr.mxu0 0.0
    %2062 = vmatpush1.msra.mxu0 0.0
    %2063 = vmatprep.subr.mxu0 0.0
    %2064 = vmatpush1.msra.mxu0 0.0
    %2065 = vmatprep.subr.mxu0 0.0
    %2066 = vmatpush1.msra.mxu0 0.0
    %2067 = vmatprep.subr.mxu0 0.0
    %2068 = vmatpush1.msra.mxu0 0.0
    %2069 = vmatprep.subr.mxu0 0.0
    %2070 = vmatpush1.msra.mxu0 0.0
    %2071 = vmatprep.subr.mxu0 0.0
    %2072 = vmatpush1.msra.mxu0 0.0
    %2073 = vmatprep.subr.mxu0 0.0
    %2074 = vmatpush1.msra.mxu0 0.0
    %2075 = vmatprep.subr.mxu0 0.0
    %2076 = vmatpush1.msra.mxu0 0.0
    %2077 = vmatprep.subr.mxu0 0.0
    %2078 = vmatpush1.msra.mxu0 0.0
    %2079 = vmatprep.subr.mxu0 0.0
    %2080 = vmatpush1.msra.mxu0 0.0
    %2081 = vmatprep.subr.mxu0 0.0
    %2082 = vmatpush1.msra.mxu0 0.0
    %2083 = vmatprep.subr.mxu0 0.0
    %2084 = vmatpush1.msra.mxu0 0.0
    %2085 = vmatprep.subr.mxu0 0.0
    %2086 = vmatpush1.msra.mxu0 0.0
    %2087 = vmatprep.subr.mxu0 0.0
    %2088 = vmatpush1.msra.mxu0 0.0
    %2089 = vmatprep.mubr.f32.mxu0 0.0
    %2090 = vmatmul.mubr.f32.gmra.mrb[0].mxu0 %v2014
    %v2091 = vpop.f32.mrb[0].mxu0
    %v2092 = vadd.f32 0.0, %v2091
    %v2093 = vpop.f32.mrb[0].mxu0
    %2094 = vmatprep.mubr.f32.mxu0 0.0
    %2095 = vmatmul.mubr.f32.gmra.mrb[0].mxu0 %v2017
    %v2096 = vpop.f32.mrb[0].mxu0
    %v2097 = vadd.f32 0.0, %v2096
    %v2098 = vpop.f32.mrb[0].mxu0
    %2099 = vmatprep.mubr.f32.mxu0 0.0
    %2100 = vmatmul.mubr.f32.gmra.mrb[0].mxu0 %v2020
    %v2101 = vpop.f32.mrb[0].mxu0
    %v2102 = vadd.f32 0.0, %v2101
    %v2103 = vpop.f32.mrb[0].mxu0
    %2104 = vmatprep.mubr.f32.mxu0 0.0
    %2105 = vmatmul.mubr.f32.gmra.mrb[0].mxu0 %v2023
    %v2106 = vpop.f32.mrb[0].mxu0
    %v2107 = vadd.f32 0.0, %v2106
    %v2108 = vpop.f32.mrb[0].mxu0
    %2109 = vdwg.mxu0
    %v2110 = vsub.f32 %v2092, %v93
    %v2111 = vsub.f32 %v2097, %v94
    %v2112 = vsub.f32 %v2102, %v95
    %v2113 = vsub.f32 %v2107, %v96
    %v2114 = vstv %s1804
    %v2115 = vmul.f32 %v2114, %v2110
    %v2116 = vmul.f32 %v2114, %v2111
    %v2117 = vmul.f32 %v2114, %v2112
    %v2118 = vmul.f32 %v2114, %v2113
    %v2119 = vsub.f32 %v1792, %v2115
    %v2120 = vsub.f32 %v1793, %v2116
    %v2121 = vsub.f32 %v1794, %v2117
    %v2122 = vsub.f32 %v1795, %v2118
    %v2123 = vmax.f32 %v2119, 0.0
    %v2124 = vmax.f32 %v2120, 0.0
    %v2125 = vmax.f32 %v2121, 0.0
    %v2126 = vmax.f32 %v2122, 0.0
    %s2127 = scalar_lea.vmem %s11, 160
    %2128 = vst.msk [vmem:[%s2127] sm:$0xff] %vm185, %v2123
    %2129 = vst.msk [vmem:[%s2127 + $0x8] sm:$0xff] %vm185, %v2124
    %2130 = vst.msk [vmem:[%s2127 + $0x10] sm:$0xff] %vm185, %v2125
    %2131 = vst.msk [vmem:[%s2127 + $0x18] sm:$0xff] %vm185, %v2126
    %s2132 = scalar_lea.vmem %s12, 40
    %2133 = vst [vmem:[%s2132] sm:$0xff] %v1971
    %s2134 = sld [smem:[#allocation2 + $0x6]]
    %s2135 = sld [smem:[#allocation4 + $0x6]]
    %s2136 = sld [smem:[#allocation6 + $0x6]]
    %s2137 = ssub.f32 %s2136, 1.0
    %s2138 = scalar_lea.vmem %s3, 48
    %v2139 = vld [vmem:[%s2138] sm:$0xff]
    %s2140 = scalar_lea.vmem %s4, 48
    %v2141 = vld [vmem:[%s2140] sm:$0xff]
    %s2142 = scalar_lea.vmem %s5, 48
    %v2143 = vld [vmem:[%s2142] sm:$0xff]
    %v2145 = vsel %vm109, %v2143, 0
    %2147 = vmatprep.subr.mxu0 0.0
    %2148 = vmatpush1.msra.mxu0 %v2123
    %2149 = vmatprep.subr.mxu0 0.0
    %2150 = vmatpush1.msra.mxu0 %v2124
    %2151 = vmatprep.subr.mxu0 0.0
    %2152 = vmatpush1.msra.mxu0 %v2125
    %2153 = vmatprep.subr.mxu0 0.0
    %2154 = vmatpush1.msra.mxu0 %v2126
    %2155 = vmatprep.subr.mxu0 0.0
    %2156 = vmatpush1.msra.mxu0 0.0
    %2157 = vmatprep.subr.mxu0 0.0
    %2158 = vmatpush1.msra.mxu0 0.0
    %2159 = vmatprep.subr.mxu0 0.0
    %2160 = vmatpush1.msra.mxu0 0.0
    %2161 = vmatprep.subr.mxu0 0.0
    %2162 = vmatpush1.msra.mxu0 0.0
    %2163 = vmatprep.subr.mxu0 0.0
    %2164 = vmatpush1.msra.mxu0 0.0
    %2165 = vmatprep.subr.mxu0 0.0
    %2166 = vmatpush1.msra.mxu0 0.0
    %2167 = vmatprep.subr.mxu0 0.0
    %2168 = vmatpush1.msra.mxu0 0.0
    %2169 = vmatprep.subr.mxu0 0.0
    %2170 = vmatpush1.msra.mxu0 0.0
    %2171 = vmatprep.subr.mxu0 0.0
    %2172 = vmatpush1.msra.mxu0 0.0
    %2173 = vmatprep.subr.mxu0 0.0
    %2174 = vmatpush1.msra.mxu0 0.0
    %2175 = vmatprep.subr.mxu0 0.0
    %2176 = vmatpush1.msra.mxu0 0.0
    %2177 = vmatprep.subr.mxu0 0.0
    %2178 = vmatpush1.msra.mxu0 0.0
    %2179 = vmatprep.subr.mxu0 0.0
    %2180 = vmatpush1.msra.mxu0 0.0
    %2181 = vmatprep.subr.mxu0 0.0
    %2182 = vmatpush1.msra.mxu0 0.0
    %2183 = vmatprep.subr.mxu0 0.0
    %2184 = vmatpush1.msra.mxu0 0.0
    %2185 = vmatprep.subr.mxu0 0.0
    %2186 = vmatpush1.msra.mxu0 0.0
    %2187 = vmatprep.subr.mxu0 0.0
    %2188 = vmatpush1.msra.mxu0 0.0
    %2189 = vmatprep.subr.mxu0 0.0
    %2190 = vmatpush1.msra.mxu0 0.0
    %2191 = vmatprep.subr.mxu0 0.0
    %2192 = vmatpush1.msra.mxu0 0.0
    %2193 = vmatprep.subr.mxu0 0.0
    %2194 = vmatpush1.msra.mxu0 0.0
    %2195 = vmatprep.subr.mxu0 0.0
    %2196 = vmatpush1.msra.mxu0 0.0
    %2197 = vmatprep.subr.mxu0 0.0
    %2198 = vmatpush1.msra.mxu0 0.0
    %2199 = vmatprep.subr.mxu0 0.0
    %2200 = vmatpush1.msra.mxu0 0.0
    %2201 = vmatprep.subr.mxu0 0.0
    %2202 = vmatpush1.msra.mxu0 0.0
    %2203 = vmatprep.subr.mxu0 0.0
    %2204 = vmatpush1.msra.mxu0 0.0
    %2205 = vmatprep.subr.mxu0 0.0
    %2206 = vmatpush1.msra.mxu0 0.0
    %2207 = vmatprep.subr.mxu0 0.0
    %2208 = vmatpush1.msra.mxu0 0.0
    %2209 = vmatprep.subr.mxu0 0.0
    %2210 = vmatpush1.msra.mxu0 0.0
    %2211 = vmatprep.mubr.f32.mxu0 0.0
    %2212 = vmatmul.mubr.f32.gmra.mrb[0].mxu0 %v2145
    %v2213 = vpop.f32.mrb[0].mxu0
    %v2214 = vadd.f32 0.0, %v2213
    %v2215 = vpop.f32.mrb[0].mxu0
    %2216 = vdwg.mxu0
    %v2217 = vpack.c.bf16 %v2214, %v2214
    %v2219 = vsel %vm185, %v2217, 0
    %v2222 = vsel %vm189, %v1972, 0
    %2224 = vmatprep.subr.bf16.mxu0 0
    %2225 = vmatpush1.bf16.msra.mxu0 %v2222
    %2226 = vmatprep.subr.bf16.mxu0 0
    %2227 = vmatpush1.bf16.msra.mxu0 0
    %2228 = vmatprep.subr.bf16.mxu0 0
    %2229 = vmatpush1.bf16.msra.mxu0 0
    %2230 = vmatprep.subr.bf16.mxu0 0
    %2231 = vmatpush1.bf16.msra.mxu0 0
    %2232 = vmatprep.subr.bf16.mxu0 0
    %2233 = vmatpush1.bf16.msra.mxu0 0
    %2234 = vmatprep.subr.bf16.mxu0 0
    %2235 = vmatpush1.bf16.msra.mxu0 0
    %2236 = vmatprep.subr.bf16.mxu0 0
    %2237 = vmatpush1.bf16.msra.mxu0 0
    %2238 = vmatprep.subr.bf16.mxu0 0
    %2239 = vmatpush1.bf16.msra.mxu0 0
    %2240 = vmatprep.subr.bf16.mxu0 0
    %2241 = vmatpush1.bf16.msra.mxu0 0
    %2242 = vmatprep.subr.bf16.mxu0 0
    %2243 = vmatpush1.bf16.msra.mxu0 0
    %2244 = vmatprep.subr.bf16.mxu0 0
    %2245 = vmatpush1.bf16.msra.mxu0 0
    %2246 = vmatprep.subr.bf16.mxu0 0
    %2247 = vmatpush1.bf16.msra.mxu0 0
    %2248 = vmatprep.subr.bf16.mxu0 0
    %2249 = vmatpush1.bf16.msra.mxu0 0
    %2250 = vmatprep.subr.bf16.mxu0 0
    %2251 = vmatpush1.bf16.msra.mxu0 0
    %2252 = vmatprep.subr.bf16.mxu0 0
    %2253 = vmatpush1.bf16.msra.mxu0 0
    %2254 = vmatprep.subr.bf16.mxu0 0
    %2255 = vmatpush1.bf16.msra.mxu0 0
    %2256 = vmatprep.mubr.bf16.mxu0 0
    %2257 = vmatmul.mubr.bf16.gmra.mrb[0].mxu0 %v2219
    %v2258 = vpop.f32.mrb[0].mxu0
    %v2259 = vadd.f32 0.0, %v2258
    %v2260 = vpop.f32.mrb[0].mxu0
    %v2261 = vpop.f32.mrb[0].mxu0
    %v2262 = vpop.f32.mrb[0].mxu0
    %2263 = vdwg.mxu0
    %s2264 = scalar_lea.vmem %s6, 48
    %v2265 = vld [vmem:[%s2264] sm:$0xff]
    %v2266 = vsub.f32 %v2259, %v2265
    %v2267 = vstv %s2134
    %v2268 = vmul.f32 %v2267, %v2266
    %v2269 = vsub.f32 %v1971, %v2268
    %v2270 = vmax.f32 %v2269, 1e-20
    %v2271 = vlog2.pop %v2270
    %v2272 = vmul.f32 %v2271, 0.6931472
    %v2273 = vstv %s2137
    %v2274 = vmul.f32 %v2273, %v2272
    %v2275 = vmul.f32 %v2274, 1.442695
    %v2276 = vpow.pop %v2275
    %2278 = vset.pattern.permute.xlu0 0
    %2279 = vperm.xlu0 %2278, %v2141
    %v2280 = vpop.permute.xlu0 %2279
    %v2282 = vmul.f32 %v2280, %v2276
    %v2283 = vsub.f32 %v2269, %v2282
    %2285 = vset.pattern.permute.xlu0 0
    %2286 = vperm.xlu0 %2285, %v2139
    %v2287 = vpop.permute.xlu0 %2286
    %v2289 = vsub.f32 %v2269, %v2287
    %vm2290 = vcmp.gt.f32.partialorder %v2289, 0.0
    %v2291 = vsel %vm2290, %v2283, 0.0
    %v2292 = vmin.f32 %v2291, 1.0
    %v2293 = vmax.f32 %v2292, 0.0
    %v2294 = vrot.slane %v2293, 4
    %v2295 = vadd.f32 %v2293, %v2294
    %v2296 = vrot.slane %v2295, 2
    %v2297 = vadd.f32 %v2295, %v2296
    %v2298 = vrot.slane %v2297, 1
    %v2299 = vadd.f32 %v2297, %v2298
    %v2300 = vadd.f32 %v2299, 0.0001
    %v2301 = vrcp.pop %v2300
    %v2302 = vmul.f32 %v2293, %v2301
    %v2303 = vpack.c.bf16 %v2302, %v2302
    %2304 = vmatprep.subr.bf16.mxu0 0
    %2305 = vmatpush1.bf16.msra.mxu0 %v304
    %2306 = vmatprep.subr.bf16.mxu0 0
    %2307 = vmatpush1.bf16.msra.mxu0 %v305
    %2308 = vmatprep.subr.bf16.mxu0 0
    %2309 = vmatpush1.bf16.msra.mxu0 %v306
    %2310 = vmatprep.subr.bf16.mxu0 0
    %2311 = vmatpush1.bf16.msra.mxu0 %v307
    %2312 = vmatprep.subr.bf16.mxu0 0
    %2313 = vmatpush1.bf16.msra.mxu0 %v308
    %2314 = vmatprep.subr.bf16.mxu0 0
    %2315 = vmatpush1.bf16.msra.mxu0 %v309
    %2316 = vmatprep.subr.bf16.mxu0 0
    %2317 = vmatpush1.bf16.msra.mxu0 %v310
    %2318 = vmatprep.subr.bf16.mxu0 0
    %2319 = vmatpush1.bf16.msra.mxu0 %v311
    %2320 = vmatprep.subr.bf16.mxu0 0
    %2321 = vmatpush1.bf16.msra.mxu0 0
    %2322 = vmatprep.subr.bf16.mxu0 0
    %2323 = vmatpush1.bf16.msra.mxu0 0
    %2324 = vmatprep.subr.bf16.mxu0 0
    %2325 = vmatpush1.bf16.msra.mxu0 0
    %2326 = vmatprep.subr.bf16.mxu0 0
    %2327 = vmatpush1.bf16.msra.mxu0 0
    %2328 = vmatprep.subr.bf16.mxu0 0
    %2329 = vmatpush1.bf16.msra.mxu0 0
    %2330 = vmatprep.subr.bf16.mxu0 0
    %2331 = vmatpush1.bf16.msra.mxu0 0
    %2332 = vmatprep.subr.bf16.mxu0 0
    %2333 = vmatpush1.bf16.msra.mxu0 0
    %2334 = vmatprep.subr.bf16.mxu0 0
    %2335 = vmatpush1.bf16.msra.mxu0 0
    %2336 = vmatprep.mubr.bf16.mxu0 0
    %2337 = vmatmul.mubr.bf16.gmra.mrb[0].mxu0 %v2303
    %v2338 = vpop.f32.mrb[0].mxu0
    %v2339 = vadd.f32 0.0, %v2338
    %v2340 = vpop.f32.mrb[0].mxu0
    %v2341 = vpop.f32.mrb[0].mxu0
    %v2342 = vpop.f32.mrb[0].mxu0
    %2343 = vdwg.mxu0
    %v2345 = vsel %vm185, %v2123, 0
    %v2348 = vsel %vm185, %v2124, 0
    %v2351 = vsel %vm185, %v2125, 0
    %v2354 = vsel %vm185, %v2126, 0
    %2356 = vmatprep.subr.mxu0 0.0
    %2357 = vmatpush1.msra.mxu0 %v2339
    %2358 = vmatprep.subr.mxu0 0.0
    %2359 = vmatpush1.msra.mxu0 0.0
    %2360 = vmatprep.subr.mxu0 0.0
    %2361 = vmatpush1.msra.mxu0 0.0
    %2362 = vmatprep.subr.mxu0 0.0
    %2363 = vmatpush1.msra.mxu0 0.0
    %2364 = vmatprep.subr.mxu0 0.0
    %2365 = vmatpush1.msra.mxu0 0.0
    %2366 = vmatprep.subr.mxu0 0.0
    %2367 = vmatpush1.msra.mxu0 0.0
    %2368 = vmatprep.subr.mxu0 0.0
    %2369 = vmatpush1.msra.mxu0 0.0
    %2370 = vmatprep.subr.mxu0 0.0
    %2371 = vmatpush1.msra.mxu0 0.0
    %2372 = vmatprep.subr.mxu0 0.0
    %2373 = vmatpush1.msra.mxu0 0.0
    %2374 = vmatprep.subr.mxu0 0.0
    %2375 = vmatpush1.msra.mxu0 0.0
    %2376 = vmatprep.subr.mxu0 0.0
    %2377 = vmatpush1.msra.mxu0 0.0
    %2378 = vmatprep.subr.mxu0 0.0
    %2379 = vmatpush1.msra.mxu0 0.0
    %2380 = vmatprep.subr.mxu0 0.0
    %2381 = vmatpush1.msra.mxu0 0.0
    %2382 = vmatprep.subr.mxu0 0.0
    %2383 = vmatpush1.msra.mxu0 0.0
    %2384 = vmatprep.subr.mxu0 0.0
    %2385 = vmatpush1.msra.mxu0 0.0
    %2386 = vmatprep.subr.mxu0 0.0
    %2387 = vmatpush1.msra.mxu0 0.0
    %2388 = vmatprep.subr.mxu0 0.0
    %2389 = vmatpush1.msra.mxu0 0.0
    %2390 = vmatprep.subr.mxu0 0.0
    %2391 = vmatpush1.msra.mxu0 0.0
    %2392 = vmatprep.subr.mxu0 0.0
    %2393 = vmatpush1.msra.mxu0 0.0
    %2394 = vmatprep.subr.mxu0 0.0
    %2395 = vmatpush1.msra.mxu0 0.0
    %2396 = vmatprep.subr.mxu0 0.0
    %2397 = vmatpush1.msra.mxu0 0.0
    %2398 = vmatprep.subr.mxu0 0.0
    %2399 = vmatpush1.msra.mxu0 0.0
    %2400 = vmatprep.subr.mxu0 0.0
    %2401 = vmatpush1.msra.mxu0 0.0
    %2402 = vmatprep.subr.mxu0 0.0
    %2403 = vmatpush1.msra.mxu0 0.0
    %2404 = vmatprep.subr.mxu0 0.0
    %2405 = vmatpush1.msra.mxu0 0.0
    %2406 = vmatprep.subr.mxu0 0.0
    %2407 = vmatpush1.msra.mxu0 0.0
    %2408 = vmatprep.subr.mxu0 0.0
    %2409 = vmatpush1.msra.mxu0 0.0
    %2410 = vmatprep.subr.mxu0 0.0
    %2411 = vmatpush1.msra.mxu0 0.0
    %2412 = vmatprep.subr.mxu0 0.0
    %2413 = vmatpush1.msra.mxu0 0.0
    %2414 = vmatprep.subr.mxu0 0.0
    %2415 = vmatpush1.msra.mxu0 0.0
    %2416 = vmatprep.subr.mxu0 0.0
    %2417 = vmatpush1.msra.mxu0 0.0
    %2418 = vmatprep.subr.mxu0 0.0
    %2419 = vmatpush1.msra.mxu0 0.0
    %2420 = vmatprep.mubr.f32.mxu0 0.0
    %2421 = vmatmul.mubr.f32.gmra.mrb[0].mxu0 %v2345
    %v2422 = vpop.f32.mrb[0].mxu0
    %v2423 = vadd.f32 0.0, %v2422
    %v2424 = vpop.f32.mrb[0].mxu0
    %2425 = vmatprep.mubr.f32.mxu0 0.0
    %2426 = vmatmul.mubr.f32.gmra.mrb[0].mxu0 %v2348
    %v2427 = vpop.f32.mrb[0].mxu0
    %v2428 = vadd.f32 0.0, %v2427
    %v2429 = vpop.f32.mrb[0].mxu0
    %2430 = vmatprep.mubr.f32.mxu0 0.0
    %2431 = vmatmul.mubr.f32.gmra.mrb[0].mxu0 %v2351
    %v2432 = vpop.f32.mrb[0].mxu0
    %v2433 = vadd.f32 0.0, %v2432
    %v2434 = vpop.f32.mrb[0].mxu0
    %2435 = vmatprep.mubr.f32.mxu0 0.0
    %2436 = vmatmul.mubr.f32.gmra.mrb[0].mxu0 %v2354
    %v2437 = vpop.f32.mrb[0].mxu0
    %v2438 = vadd.f32 0.0, %v2437
    %v2439 = vpop.f32.mrb[0].mxu0
    %2440 = vdwg.mxu0
    %v2441 = vsub.f32 %v2423, %v93
    %v2442 = vsub.f32 %v2428, %v94
    %v2443 = vsub.f32 %v2433, %v95
    %v2444 = vsub.f32 %v2438, %v96
    %v2445 = vstv %s2135
    %v2446 = vmul.f32 %v2445, %v2441
    %v2447 = vmul.f32 %v2445, %v2442
    %v2448 = vmul.f32 %v2445, %v2443
    %v2449 = vmul.f32 %v2445, %v2444
    %v2450 = vsub.f32 %v2123, %v2446
    %v2451 = vsub.f32 %v2124, %v2447
    %v2452 = vsub.f32 %v2125, %v2448
    %v2453 = vsub.f32 %v2126, %v2449
    %v2454 = vmax.f32 %v2450, 0.0
    %v2455 = vmax.f32 %v2451, 0.0
    %v2456 = vmax.f32 %v2452, 0.0
    %v2457 = vmax.f32 %v2453, 0.0
    %s2458 = scalar_lea.vmem %s11, 192
    %2459 = vst.msk [vmem:[%s2458] sm:$0xff] %vm185, %v2454
    %2460 = vst.msk [vmem:[%s2458 + $0x8] sm:$0xff] %vm185, %v2455
    %2461 = vst.msk [vmem:[%s2458 + $0x10] sm:$0xff] %vm185, %v2456
    %2462 = vst.msk [vmem:[%s2458 + $0x18] sm:$0xff] %vm185, %v2457
    %s2463 = scalar_lea.vmem %s12, 48
    %2464 = vst [vmem:[%s2463] sm:$0xff] %v2302
    %s2465 = sld [smem:[#allocation2 + $0x7]]
    %s2466 = sld [smem:[#allocation4 + $0x7]]
    %s2467 = sld [smem:[#allocation6 + $0x7]]
    %s2468 = ssub.f32 %s2467, 1.0
    %s2469 = scalar_lea.vmem %s3, 56
    %v2470 = vld [vmem:[%s2469] sm:$0xff]
    %s2471 = scalar_lea.vmem %s4, 56
    %v2472 = vld [vmem:[%s2471] sm:$0xff]
    %s2473 = scalar_lea.vmem %s5, 56
    %v2474 = vld [vmem:[%s2473] sm:$0xff]
    %v2476 = vsel %vm109, %v2474, 0
    %2478 = vmatprep.subr.mxu0 0.0
    %2479 = vmatpush1.msra.mxu0 %v2454
    %2480 = vmatprep.subr.mxu0 0.0
    %2481 = vmatpush1.msra.mxu0 %v2455
    %2482 = vmatprep.subr.mxu0 0.0
    %2483 = vmatpush1.msra.mxu0 %v2456
    %2484 = vmatprep.subr.mxu0 0.0
    %2485 = vmatpush1.msra.mxu0 %v2457
    %2486 = vmatprep.subr.mxu0 0.0
    %2487 = vmatpush1.msra.mxu0 0.0
    %2488 = vmatprep.subr.mxu0 0.0
    %2489 = vmatpush1.msra.mxu0 0.0
    %2490 = vmatprep.subr.mxu0 0.0
    %2491 = vmatpush1.msra.mxu0 0.0
    %2492 = vmatprep.subr.mxu0 0.0
    %2493 = vmatpush1.msra.mxu0 0.0
    %2494 = vmatprep.subr.mxu0 0.0
    %2495 = vmatpush1.msra.mxu0 0.0
    %2496 = vmatprep.subr.mxu0 0.0
    %2497 = vmatpush1.msra.mxu0 0.0
    %2498 = vmatprep.subr.mxu0 0.0
    %2499 = vmatpush1.msra.mxu0 0.0
    %2500 = vmatprep.subr.mxu0 0.0
    %2501 = vmatpush1.msra.mxu0 0.0
    %2502 = vmatprep.subr.mxu0 0.0
    %2503 = vmatpush1.msra.mxu0 0.0
    %2504 = vmatprep.subr.mxu0 0.0
    %2505 = vmatpush1.msra.mxu0 0.0
    %2506 = vmatprep.subr.mxu0 0.0
    %2507 = vmatpush1.msra.mxu0 0.0
    %2508 = vmatprep.subr.mxu0 0.0
    %2509 = vmatpush1.msra.mxu0 0.0
    %2510 = vmatprep.subr.mxu0 0.0
    %2511 = vmatpush1.msra.mxu0 0.0
    %2512 = vmatprep.subr.mxu0 0.0
    %2513 = vmatpush1.msra.mxu0 0.0
    %2514 = vmatprep.subr.mxu0 0.0
    %2515 = vmatpush1.msra.mxu0 0.0
    %2516 = vmatprep.subr.mxu0 0.0
    %2517 = vmatpush1.msra.mxu0 0.0
    %2518 = vmatprep.subr.mxu0 0.0
    %2519 = vmatpush1.msra.mxu0 0.0
    %2520 = vmatprep.subr.mxu0 0.0
    %2521 = vmatpush1.msra.mxu0 0.0
    %2522 = vmatprep.subr.mxu0 0.0
    %2523 = vmatpush1.msra.mxu0 0.0
    %2524 = vmatprep.subr.mxu0 0.0
    %2525 = vmatpush1.msra.mxu0 0.0
    %2526 = vmatprep.subr.mxu0 0.0
    %2527 = vmatpush1.msra.mxu0 0.0
    %2528 = vmatprep.subr.mxu0 0.0
    %2529 = vmatpush1.msra.mxu0 0.0
    %2530 = vmatprep.subr.mxu0 0.0
    %2531 = vmatpush1.msra.mxu0 0.0
    %2532 = vmatprep.subr.mxu0 0.0
    %2533 = vmatpush1.msra.mxu0 0.0
    %2534 = vmatprep.subr.mxu0 0.0
    %2535 = vmatpush1.msra.mxu0 0.0
    %2536 = vmatprep.subr.mxu0 0.0
    %2537 = vmatpush1.msra.mxu0 0.0
    %2538 = vmatprep.subr.mxu0 0.0
    %2539 = vmatpush1.msra.mxu0 0.0
    %2540 = vmatprep.subr.mxu0 0.0
    %2541 = vmatpush1.msra.mxu0 0.0
    %2542 = vmatprep.mubr.f32.mxu0 0.0
    %2543 = vmatmul.mubr.f32.gmra.mrb[0].mxu0 %v2476
    %v2544 = vpop.f32.mrb[0].mxu0
    %v2545 = vadd.f32 0.0, %v2544
    %v2546 = vpop.f32.mrb[0].mxu0
    %2547 = vdwg.mxu0
    %v2548 = vpack.c.bf16 %v2545, %v2545
    %v2550 = vsel %vm185, %v2548, 0
    %v2553 = vsel %vm189, %v2303, 0
    %2555 = vmatprep.subr.bf16.mxu0 0
    %2556 = vmatpush1.bf16.msra.mxu0 %v2553
    %2557 = vmatprep.subr.bf16.mxu0 0
    %2558 = vmatpush1.bf16.msra.mxu0 0
    %2559 = vmatprep.subr.bf16.mxu0 0
    %2560 = vmatpush1.bf16.msra.mxu0 0
    %2561 = vmatprep.subr.bf16.mxu0 0
    %2562 = vmatpush1.bf16.msra.mxu0 0
    %2563 = vmatprep.subr.bf16.mxu0 0
    %2564 = vmatpush1.bf16.msra.mxu0 0
    %2565 = vmatprep.subr.bf16.mxu0 0
    %2566 = vmatpush1.bf16.msra.mxu0 0
    %2567 = vmatprep.subr.bf16.mxu0 0
    %2568 = vmatpush1.bf16.msra.mxu0 0
    %2569 = vmatprep.subr.bf16.mxu0 0
    %2570 = vmatpush1.bf16.msra.mxu0 0
    %2571 = vmatprep.subr.bf16.mxu0 0
    %2572 = vmatpush1.bf16.msra.mxu0 0
    %2573 = vmatprep.subr.bf16.mxu0 0
    %2574 = vmatpush1.bf16.msra.mxu0 0
    %2575 = vmatprep.subr.bf16.mxu0 0
    %2576 = vmatpush1.bf16.msra.mxu0 0
    %2577 = vmatprep.subr.bf16.mxu0 0
    %2578 = vmatpush1.bf16.msra.mxu0 0
    %2579 = vmatprep.subr.bf16.mxu0 0
    %2580 = vmatpush1.bf16.msra.mxu0 0
    %2581 = vmatprep.subr.bf16.mxu0 0
    %2582 = vmatpush1.bf16.msra.mxu0 0
    %2583 = vmatprep.subr.bf16.mxu0 0
    %2584 = vmatpush1.bf16.msra.mxu0 0
    %2585 = vmatprep.subr.bf16.mxu0 0
    %2586 = vmatpush1.bf16.msra.mxu0 0
    %2587 = vmatprep.mubr.bf16.mxu0 0
    %2588 = vmatmul.mubr.bf16.gmra.mrb[0].mxu0 %v2550
    %v2589 = vpop.f32.mrb[0].mxu0
    %v2590 = vadd.f32 0.0, %v2589
    %v2591 = vpop.f32.mrb[0].mxu0
    %v2592 = vpop.f32.mrb[0].mxu0
    %v2593 = vpop.f32.mrb[0].mxu0
    %2594 = vdwg.mxu0
    %s2595 = scalar_lea.vmem %s6, 56
    %v2596 = vld [vmem:[%s2595] sm:$0xff]
    %v2597 = vsub.f32 %v2590, %v2596
    %v2598 = vstv %s2465
    %v2599 = vmul.f32 %v2598, %v2597
    %v2600 = vsub.f32 %v2302, %v2599
    %v2601 = vmax.f32 %v2600, 1e-20
    %v2602 = vlog2.pop %v2601
    %v2603 = vmul.f32 %v2602, 0.6931472
    %v2604 = vstv %s2468
    %v2605 = vmul.f32 %v2604, %v2603
    %v2606 = vmul.f32 %v2605, 1.442695
    %v2607 = vpow.pop %v2606
    %2609 = vset.pattern.permute.xlu0 0
    %2610 = vperm.xlu0 %2609, %v2472
    %v2611 = vpop.permute.xlu0 %2610
    %v2613 = vmul.f32 %v2611, %v2607
    %v2614 = vsub.f32 %v2600, %v2613
    %2616 = vset.pattern.permute.xlu0 0
    %2617 = vperm.xlu0 %2616, %v2470
    %v2618 = vpop.permute.xlu0 %2617
    %v2620 = vsub.f32 %v2600, %v2618
    %vm2621 = vcmp.gt.f32.partialorder %v2620, 0.0
    %v2622 = vsel %vm2621, %v2614, 0.0
    %v2623 = vmin.f32 %v2622, 1.0
    %v2624 = vmax.f32 %v2623, 0.0
    %v2625 = vrot.slane %v2624, 4
    %v2626 = vadd.f32 %v2624, %v2625
    %v2627 = vrot.slane %v2626, 2
    %v2628 = vadd.f32 %v2626, %v2627
    %v2629 = vrot.slane %v2628, 1
    %v2630 = vadd.f32 %v2628, %v2629
    %v2631 = vadd.f32 %v2630, 0.0001
    %v2632 = vrcp.pop %v2631
    %v2633 = vmul.f32 %v2624, %v2632
    %v2634 = vpack.c.bf16 %v2633, %v2633
    %2635 = vmatprep.subr.bf16.mxu0 0
    %2636 = vmatpush1.bf16.msra.mxu0 %v304
    %2637 = vmatprep.subr.bf16.mxu0 0
    %2638 = vmatpush1.bf16.msra.mxu0 %v305
    %2639 = vmatprep.subr.bf16.mxu0 0
    %2640 = vmatpush1.bf16.msra.mxu0 %v306
    %2641 = vmatprep.subr.bf16.mxu0 0
    %2642 = vmatpush1.bf16.msra.mxu0 %v307
    %2643 = vmatprep.subr.bf16.mxu0 0
    %2644 = vmatpush1.bf16.msra.mxu0 %v308
    %2645 = vmatprep.subr.bf16.mxu0 0
    %2646 = vmatpush1.bf16.msra.mxu0 %v309
    %2647 = vmatprep.subr.bf16.mxu0 0
    %2648 = vmatpush1.bf16.msra.mxu0 %v310
    %2649 = vmatprep.subr.bf16.mxu0 0
    %2650 = vmatpush1.bf16.msra.mxu0 %v311
    %2651 = vmatprep.subr.bf16.mxu0 0
    %2652 = vmatpush1.bf16.msra.mxu0 0
    %2653 = vmatprep.subr.bf16.mxu0 0
    %2654 = vmatpush1.bf16.msra.mxu0 0
    %2655 = vmatprep.subr.bf16.mxu0 0
    %2656 = vmatpush1.bf16.msra.mxu0 0
    %2657 = vmatprep.subr.bf16.mxu0 0
    %2658 = vmatpush1.bf16.msra.mxu0 0
    %2659 = vmatprep.subr.bf16.mxu0 0
    %2660 = vmatpush1.bf16.msra.mxu0 0
    %2661 = vmatprep.subr.bf16.mxu0 0
    %2662 = vmatpush1.bf16.msra.mxu0 0
    %2663 = vmatprep.subr.bf16.mxu0 0
    %2664 = vmatpush1.bf16.msra.mxu0 0
    %2665 = vmatprep.subr.bf16.mxu0 0
    %2666 = vmatpush1.bf16.msra.mxu0 0
    %2667 = vmatprep.mubr.bf16.mxu0 0
    %2668 = vmatmul.mubr.bf16.gmra.mrb[0].mxu0 %v2634
    %v2669 = vpop.f32.mrb[0].mxu0
    %v2670 = vadd.f32 0.0, %v2669
    %v2671 = vpop.f32.mrb[0].mxu0
    %v2672 = vpop.f32.mrb[0].mxu0
    %v2673 = vpop.f32.mrb[0].mxu0
    %2674 = vdwg.mxu0
    %v2676 = vsel %vm185, %v2454, 0
    %v2679 = vsel %vm185, %v2455, 0
    %v2682 = vsel %vm185, %v2456, 0
    %v2685 = vsel %vm185, %v2457, 0
    %2687 = vmatprep.subr.mxu0 0.0
    %2688 = vmatpush1.msra.mxu0 %v2670
    %2689 = vmatprep.subr.mxu0 0.0
    %2690 = vmatpush1.msra.mxu0 0.0
    %2691 = vmatprep.subr.mxu0 0.0
    %2692 = vmatpush1.msra.mxu0 0.0
    %2693 = vmatprep.subr.mxu0 0.0
    %2694 = vmatpush1.msra.mxu0 0.0
    %2695 = vmatprep.subr.mxu0 0.0
    %2696 = vmatpush1.msra.mxu0 0.0
    %2697 = vmatprep.subr.mxu0 0.0
    %2698 = vmatpush1.msra.mxu0 0.0
    %2699 = vmatprep.subr.mxu0 0.0
    %2700 = vmatpush1.msra.mxu0 0.0
    %2701 = vmatprep.subr.mxu0 0.0
    %2702 = vmatpush1.msra.mxu0 0.0
    %2703 = vmatprep.subr.mxu0 0.0
    %2704 = vmatpush1.msra.mxu0 0.0
    %2705 = vmatprep.subr.mxu0 0.0
    %2706 = vmatpush1.msra.mxu0 0.0
    %2707 = vmatprep.subr.mxu0 0.0
    %2708 = vmatpush1.msra.mxu0 0.0
    %2709 = vmatprep.subr.mxu0 0.0
    %2710 = vmatpush1.msra.mxu0 0.0
    %2711 = vmatprep.subr.mxu0 0.0
    %2712 = vmatpush1.msra.mxu0 0.0
    %2713 = vmatprep.subr.mxu0 0.0
    %2714 = vmatpush1.msra.mxu0 0.0
    %2715 = vmatprep.subr.mxu0 0.0
    %2716 = vmatpush1.msra.mxu0 0.0
    %2717 = vmatprep.subr.mxu0 0.0
    %2718 = vmatpush1.msra.mxu0 0.0
    %2719 = vmatprep.subr.mxu0 0.0
    %2720 = vmatpush1.msra.mxu0 0.0
    %2721 = vmatprep.subr.mxu0 0.0
    %2722 = vmatpush1.msra.mxu0 0.0
    %2723 = vmatprep.subr.mxu0 0.0
    %2724 = vmatpush1.msra.mxu0 0.0
    %2725 = vmatprep.subr.mxu0 0.0
    %2726 = vmatpush1.msra.mxu0 0.0
    %2727 = vmatprep.subr.mxu0 0.0
    %2728 = vmatpush1.msra.mxu0 0.0
    %2729 = vmatprep.subr.mxu0 0.0
    %2730 = vmatpush1.msra.mxu0 0.0
    %2731 = vmatprep.subr.mxu0 0.0
    %2732 = vmatpush1.msra.mxu0 0.0
    %2733 = vmatprep.subr.mxu0 0.0
    %2734 = vmatpush1.msra.mxu0 0.0
    %2735 = vmatprep.subr.mxu0 0.0
    %2736 = vmatpush1.msra.mxu0 0.0
    %2737 = vmatprep.subr.mxu0 0.0
    %2738 = vmatpush1.msra.mxu0 0.0
    %2739 = vmatprep.subr.mxu0 0.0
    %2740 = vmatpush1.msra.mxu0 0.0
    %2741 = vmatprep.subr.mxu0 0.0
    %2742 = vmatpush1.msra.mxu0 0.0
    %2743 = vmatprep.subr.mxu0 0.0
    %2744 = vmatpush1.msra.mxu0 0.0
    %2745 = vmatprep.subr.mxu0 0.0
    %2746 = vmatpush1.msra.mxu0 0.0
    %2747 = vmatprep.subr.mxu0 0.0
    %2748 = vmatpush1.msra.mxu0 0.0
    %2749 = vmatprep.subr.mxu0 0.0
    %2750 = vmatpush1.msra.mxu0 0.0
    %2751 = vmatprep.mubr.f32.mxu0 0.0
    %2752 = vmatmul.mubr.f32.gmra.mrb[0].mxu0 %v2676
    %v2753 = vpop.f32.mrb[0].mxu0
    %v2754 = vadd.f32 0.0, %v2753
    %v2755 = vpop.f32.mrb[0].mxu0
    %2756 = vmatprep.mubr.f32.mxu0 0.0
    %2757 = vmatmul.mubr.f32.gmra.mrb[0].mxu0 %v2679
    %v2758 = vpop.f32.mrb[0].mxu0
    %v2759 = vadd.f32 0.0, %v2758
    %v2760 = vpop.f32.mrb[0].mxu0
    %2761 = vmatprep.mubr.f32.mxu0 0.0
    %2762 = vmatmul.mubr.f32.gmra.mrb[0].mxu0 %v2682
    %v2763 = vpop.f32.mrb[0].mxu0
    %v2764 = vadd.f32 0.0, %v2763
    %v2765 = vpop.f32.mrb[0].mxu0
    %2766 = vmatprep.mubr.f32.mxu0 0.0
    %2767 = vmatmul.mubr.f32.gmra.mrb[0].mxu0 %v2685
    %v2768 = vpop.f32.mrb[0].mxu0
    %v2769 = vadd.f32 0.0, %v2768
    %v2770 = vpop.f32.mrb[0].mxu0
    %2771 = vdwg.mxu0
    %v2772 = vsub.f32 %v2754, %v93
    %v2773 = vsub.f32 %v2759, %v94
    %v2774 = vsub.f32 %v2764, %v95
    %v2775 = vsub.f32 %v2769, %v96
    %v2776 = vstv %s2466
    %v2777 = vmul.f32 %v2776, %v2772
    %v2778 = vmul.f32 %v2776, %v2773
    %v2779 = vmul.f32 %v2776, %v2774
    %v2780 = vmul.f32 %v2776, %v2775
    %v2781 = vsub.f32 %v2454, %v2777
    %v2782 = vsub.f32 %v2455, %v2778
    %v2783 = vsub.f32 %v2456, %v2779
    %v2784 = vsub.f32 %v2457, %v2780
    %v2785 = vmax.f32 %v2781, 0.0
    %v2786 = vmax.f32 %v2782, 0.0
    %v2787 = vmax.f32 %v2783, 0.0
    %v2788 = vmax.f32 %v2784, 0.0
    %s2789 = scalar_lea.vmem %s11, 224
    %2790 = vst.msk [vmem:[%s2789] sm:$0xff] %vm185, %v2785
    %2791 = vst.msk [vmem:[%s2789 + $0x8] sm:$0xff] %vm185, %v2786
    %2792 = vst.msk [vmem:[%s2789 + $0x10] sm:$0xff] %vm185, %v2787
    %2793 = vst.msk [vmem:[%s2789 + $0x18] sm:$0xff] %vm185, %v2788
    %s2794 = scalar_lea.vmem %s12, 56
    %2795 = vst [vmem:[%s2794] sm:$0xff] %v2633
    %s2796 = sld [smem:[#allocation2 + $0x8]]
    %s2797 = sld [smem:[#allocation4 + $0x8]]
    %s2798 = sld [smem:[#allocation6 + $0x8]]
    %s2799 = ssub.f32 %s2798, 1.0
    %s2800 = scalar_lea.vmem %s3, 64
    %v2801 = vld [vmem:[%s2800] sm:$0xff]
    %s2802 = scalar_lea.vmem %s4, 64
    %v2803 = vld [vmem:[%s2802] sm:$0xff]
    %s2804 = scalar_lea.vmem %s5, 64
    %v2805 = vld [vmem:[%s2804] sm:$0xff]
    %v2807 = vsel %vm109, %v2805, 0
    %2809 = vmatprep.subr.mxu0 0.0
    %2810 = vmatpush1.msra.mxu0 %v2785
    %2811 = vmatprep.subr.mxu0 0.0
    %2812 = vmatpush1.msra.mxu0 %v2786
    %2813 = vmatprep.subr.mxu0 0.0
    %2814 = vmatpush1.msra.mxu0 %v2787
    %2815 = vmatprep.subr.mxu0 0.0
    %2816 = vmatpush1.msra.mxu0 %v2788
    %2817 = vmatprep.subr.mxu0 0.0
    %2818 = vmatpush1.msra.mxu0 0.0
    %2819 = vmatprep.subr.mxu0 0.0
    %2820 = vmatpush1.msra.mxu0 0.0
    %2821 = vmatprep.subr.mxu0 0.0
    %2822 = vmatpush1.msra.mxu0 0.0
    %2823 = vmatprep.subr.mxu0 0.0
    %2824 = vmatpush1.msra.mxu0 0.0
    %2825 = vmatprep.subr.mxu0 0.0
    %2826 = vmatpush1.msra.mxu0 0.0
    %2827 = vmatprep.subr.mxu0 0.0
    %2828 = vmatpush1.msra.mxu0 0.0
    %2829 = vmatprep.subr.mxu0 0.0
    %2830 = vmatpush1.msra.mxu0 0.0
    %2831 = vmatprep.subr.mxu0 0.0
    %2832 = vmatpush1.msra.mxu0 0.0
    %2833 = vmatprep.subr.mxu0 0.0
    %2834 = vmatpush1.msra.mxu0 0.0
    %2835 = vmatprep.subr.mxu0 0.0
    %2836 = vmatpush1.msra.mxu0 0.0
    %2837 = vmatprep.subr.mxu0 0.0
    %2838 = vmatpush1.msra.mxu0 0.0
    %2839 = vmatprep.subr.mxu0 0.0
    %2840 = vmatpush1.msra.mxu0 0.0
    %2841 = vmatprep.subr.mxu0 0.0
    %2842 = vmatpush1.msra.mxu0 0.0
    %2843 = vmatprep.subr.mxu0 0.0
    %2844 = vmatpush1.msra.mxu0 0.0
    %2845 = vmatprep.subr.mxu0 0.0
    %2846 = vmatpush1.msra.mxu0 0.0
    %2847 = vmatprep.subr.mxu0 0.0
    %2848 = vmatpush1.msra.mxu0 0.0
    %2849 = vmatprep.subr.mxu0 0.0
    %2850 = vmatpush1.msra.mxu0 0.0
    %2851 = vmatprep.subr.mxu0 0.0
    %2852 = vmatpush1.msra.mxu0 0.0
    %2853 = vmatprep.subr.mxu0 0.0
    %2854 = vmatpush1.msra.mxu0 0.0
    %2855 = vmatprep.subr.mxu0 0.0
    %2856 = vmatpush1.msra.mxu0 0.0
    %2857 = vmatprep.subr.mxu0 0.0
    %2858 = vmatpush1.msra.mxu0 0.0
    %2859 = vmatprep.subr.mxu0 0.0
    %2860 = vmatpush1.msra.mxu0 0.0
    %2861 = vmatprep.subr.mxu0 0.0
    %2862 = vmatpush1.msra.mxu0 0.0
    %2863 = vmatprep.subr.mxu0 0.0
    %2864 = vmatpush1.msra.mxu0 0.0
    %2865 = vmatprep.subr.mxu0 0.0
    %2866 = vmatpush1.msra.mxu0 0.0
    %2867 = vmatprep.subr.mxu0 0.0
    %2868 = vmatpush1.msra.mxu0 0.0
    %2869 = vmatprep.subr.mxu0 0.0
    %2870 = vmatpush1.msra.mxu0 0.0
    %2871 = vmatprep.subr.mxu0 0.0
    %2872 = vmatpush1.msra.mxu0 0.0
    %2873 = vmatprep.mubr.f32.mxu0 0.0
    %2874 = vmatmul.mubr.f32.gmra.mrb[0].mxu0 %v2807
    %v2875 = vpop.f32.mrb[0].mxu0
    %v2876 = vadd.f32 0.0, %v2875
    %v2877 = vpop.f32.mrb[0].mxu0
    %2878 = vdwg.mxu0
    %v2879 = vpack.c.bf16 %v2876, %v2876
    %v2881 = vsel %vm185, %v2879, 0
    %v2884 = vsel %vm189, %v2634, 0
    %2886 = vmatprep.subr.bf16.mxu0 0
    %2887 = vmatpush1.bf16.msra.mxu0 %v2884
    %2888 = vmatprep.subr.bf16.mxu0 0
    %2889 = vmatpush1.bf16.msra.mxu0 0
    %2890 = vmatprep.subr.bf16.mxu0 0
    %2891 = vmatpush1.bf16.msra.mxu0 0
    %2892 = vmatprep.subr.bf16.mxu0 0
    %2893 = vmatpush1.bf16.msra.mxu0 0
    %2894 = vmatprep.subr.bf16.mxu0 0
    %2895 = vmatpush1.bf16.msra.mxu0 0
    %2896 = vmatprep.subr.bf16.mxu0 0
    %2897 = vmatpush1.bf16.msra.mxu0 0
    %2898 = vmatprep.subr.bf16.mxu0 0
    %2899 = vmatpush1.bf16.msra.mxu0 0
    %2900 = vmatprep.subr.bf16.mxu0 0
    %2901 = vmatpush1.bf16.msra.mxu0 0
    %2902 = vmatprep.subr.bf16.mxu0 0
    %2903 = vmatpush1.bf16.msra.mxu0 0
    %2904 = vmatprep.subr.bf16.mxu0 0
    %2905 = vmatpush1.bf16.msra.mxu0 0
    %2906 = vmatprep.subr.bf16.mxu0 0
    %2907 = vmatpush1.bf16.msra.mxu0 0
    %2908 = vmatprep.subr.bf16.mxu0 0
    %2909 = vmatpush1.bf16.msra.mxu0 0
    %2910 = vmatprep.subr.bf16.mxu0 0
    %2911 = vmatpush1.bf16.msra.mxu0 0
    %2912 = vmatprep.subr.bf16.mxu0 0
    %2913 = vmatpush1.bf16.msra.mxu0 0
    %2914 = vmatprep.subr.bf16.mxu0 0
    %2915 = vmatpush1.bf16.msra.mxu0 0
    %2916 = vmatprep.subr.bf16.mxu0 0
    %2917 = vmatpush1.bf16.msra.mxu0 0
    %2918 = vmatprep.mubr.bf16.mxu0 0
    %2919 = vmatmul.mubr.bf16.gmra.mrb[0].mxu0 %v2881
    %v2920 = vpop.f32.mrb[0].mxu0
    %v2921 = vadd.f32 0.0, %v2920
    %v2922 = vpop.f32.mrb[0].mxu0
    %v2923 = vpop.f32.mrb[0].mxu0
    %v2924 = vpop.f32.mrb[0].mxu0
    %2925 = vdwg.mxu0
    %s2926 = scalar_lea.vmem %s6, 64
    %v2927 = vld [vmem:[%s2926] sm:$0xff]
    %v2928 = vsub.f32 %v2921, %v2927
    %v2929 = vstv %s2796
    %v2930 = vmul.f32 %v2929, %v2928
    %v2931 = vsub.f32 %v2633, %v2930
    %v2932 = vmax.f32 %v2931, 1e-20
    %v2933 = vlog2.pop %v2932
    %v2934 = vmul.f32 %v2933, 0.6931472
    %v2935 = vstv %s2799
    %v2936 = vmul.f32 %v2935, %v2934
    %v2937 = vmul.f32 %v2936, 1.442695
    %v2938 = vpow.pop %v2937
    %2940 = vset.pattern.permute.xlu0 0
    %2941 = vperm.xlu0 %2940, %v2803
    %v2942 = vpop.permute.xlu0 %2941
    %v2944 = vmul.f32 %v2942, %v2938
    %v2945 = vsub.f32 %v2931, %v2944
    %2947 = vset.pattern.permute.xlu0 0
    %2948 = vperm.xlu0 %2947, %v2801
    %v2949 = vpop.permute.xlu0 %2948
    %v2951 = vsub.f32 %v2931, %v2949
    %vm2952 = vcmp.gt.f32.partialorder %v2951, 0.0
    %v2953 = vsel %vm2952, %v2945, 0.0
    %v2954 = vmin.f32 %v2953, 1.0
    %v2955 = vmax.f32 %v2954, 0.0
    %v2956 = vrot.slane %v2955, 4
    %v2957 = vadd.f32 %v2955, %v2956
    %v2958 = vrot.slane %v2957, 2
    %v2959 = vadd.f32 %v2957, %v2958
    %v2960 = vrot.slane %v2959, 1
    %v2961 = vadd.f32 %v2959, %v2960
    %v2962 = vadd.f32 %v2961, 0.0001
    %v2963 = vrcp.pop %v2962
    %v2964 = vmul.f32 %v2955, %v2963
    %v2965 = vpack.c.bf16 %v2964, %v2964
    %2966 = vmatprep.subr.bf16.mxu0 0
    %2967 = vmatpush1.bf16.msra.mxu0 %v304
    %2968 = vmatprep.subr.bf16.mxu0 0
    %2969 = vmatpush1.bf16.msra.mxu0 %v305
    %2970 = vmatprep.subr.bf16.mxu0 0
    %2971 = vmatpush1.bf16.msra.mxu0 %v306
    %2972 = vmatprep.subr.bf16.mxu0 0
    %2973 = vmatpush1.bf16.msra.mxu0 %v307
    %2974 = vmatprep.subr.bf16.mxu0 0
    %2975 = vmatpush1.bf16.msra.mxu0 %v308
    %2976 = vmatprep.subr.bf16.mxu0 0
    %2977 = vmatpush1.bf16.msra.mxu0 %v309
    %2978 = vmatprep.subr.bf16.mxu0 0
    %2979 = vmatpush1.bf16.msra.mxu0 %v310
    %2980 = vmatprep.subr.bf16.mxu0 0
    %2981 = vmatpush1.bf16.msra.mxu0 %v311
    %2982 = vmatprep.subr.bf16.mxu0 0
    %2983 = vmatpush1.bf16.msra.mxu0 0
    %2984 = vmatprep.subr.bf16.mxu0 0
    %2985 = vmatpush1.bf16.msra.mxu0 0
    %2986 = vmatprep.subr.bf16.mxu0 0
    %2987 = vmatpush1.bf16.msra.mxu0 0
    %2988 = vmatprep.subr.bf16.mxu0 0
    %2989 = vmatpush1.bf16.msra.mxu0 0
    %2990 = vmatprep.subr.bf16.mxu0 0
    %2991 = vmatpush1.bf16.msra.mxu0 0
    %2992 = vmatprep.subr.bf16.mxu0 0
    %2993 = vmatpush1.bf16.msra.mxu0 0
    %2994 = vmatprep.subr.bf16.mxu0 0
    %2995 = vmatpush1.bf16.msra.mxu0 0
    %2996 = vmatprep.subr.bf16.mxu0 0
    %2997 = vmatpush1.bf16.msra.mxu0 0
    %2998 = vmatprep.mubr.bf16.mxu0 0
    %2999 = vmatmul.mubr.bf16.gmra.mrb[0].mxu0 %v2965
    %v3000 = vpop.f32.mrb[0].mxu0
    %v3001 = vadd.f32 0.0, %v3000
    %v3002 = vpop.f32.mrb[0].mxu0
    %v3003 = vpop.f32.mrb[0].mxu0
    %v3004 = vpop.f32.mrb[0].mxu0
    %3005 = vdwg.mxu0
    %v3007 = vsel %vm185, %v2785, 0
    %v3010 = vsel %vm185, %v2786, 0
    %v3013 = vsel %vm185, %v2787, 0
    %v3016 = vsel %vm185, %v2788, 0
    %3018 = vmatprep.subr.mxu0 0.0
    %3019 = vmatpush1.msra.mxu0 %v3001
    %3020 = vmatprep.subr.mxu0 0.0
    %3021 = vmatpush1.msra.mxu0 0.0
    %3022 = vmatprep.subr.mxu0 0.0
    %3023 = vmatpush1.msra.mxu0 0.0
    %3024 = vmatprep.subr.mxu0 0.0
    %3025 = vmatpush1.msra.mxu0 0.0
    %3026 = vmatprep.subr.mxu0 0.0
    %3027 = vmatpush1.msra.mxu0 0.0
    %3028 = vmatprep.subr.mxu0 0.0
    %3029 = vmatpush1.msra.mxu0 0.0
    %3030 = vmatprep.subr.mxu0 0.0
    %3031 = vmatpush1.msra.mxu0 0.0
    %3032 = vmatprep.subr.mxu0 0.0
    %3033 = vmatpush1.msra.mxu0 0.0
    %3034 = vmatprep.subr.mxu0 0.0
    %3035 = vmatpush1.msra.mxu0 0.0
    %3036 = vmatprep.subr.mxu0 0.0
    %3037 = vmatpush1.msra.mxu0 0.0
    %3038 = vmatprep.subr.mxu0 0.0
    %3039 = vmatpush1.msra.mxu0 0.0
    %3040 = vmatprep.subr.mxu0 0.0
    %3041 = vmatpush1.msra.mxu0 0.0
    %3042 = vmatprep.subr.mxu0 0.0
    %3043 = vmatpush1.msra.mxu0 0.0
    %3044 = vmatprep.subr.mxu0 0.0
    %3045 = vmatpush1.msra.mxu0 0.0
    %3046 = vmatprep.subr.mxu0 0.0
    %3047 = vmatpush1.msra.mxu0 0.0
    %3048 = vmatprep.subr.mxu0 0.0
    %3049 = vmatpush1.msra.mxu0 0.0
    %3050 = vmatprep.subr.mxu0 0.0
    %3051 = vmatpush1.msra.mxu0 0.0
    %3052 = vmatprep.subr.mxu0 0.0
    %3053 = vmatpush1.msra.mxu0 0.0
    %3054 = vmatprep.subr.mxu0 0.0
    %3055 = vmatpush1.msra.mxu0 0.0
    %3056 = vmatprep.subr.mxu0 0.0
    %3057 = vmatpush1.msra.mxu0 0.0
    %3058 = vmatprep.subr.mxu0 0.0
    %3059 = vmatpush1.msra.mxu0 0.0
    %3060 = vmatprep.subr.mxu0 0.0
    %3061 = vmatpush1.msra.mxu0 0.0
    %3062 = vmatprep.subr.mxu0 0.0
    %3063 = vmatpush1.msra.mxu0 0.0
    %3064 = vmatprep.subr.mxu0 0.0
    %3065 = vmatpush1.msra.mxu0 0.0
    %3066 = vmatprep.subr.mxu0 0.0
    %3067 = vmatpush1.msra.mxu0 0.0
    %3068 = vmatprep.subr.mxu0 0.0
    %3069 = vmatpush1.msra.mxu0 0.0
    %3070 = vmatprep.subr.mxu0 0.0
    %3071 = vmatpush1.msra.mxu0 0.0
    %3072 = vmatprep.subr.mxu0 0.0
    %3073 = vmatpush1.msra.mxu0 0.0
    %3074 = vmatprep.subr.mxu0 0.0
    %3075 = vmatpush1.msra.mxu0 0.0
    %3076 = vmatprep.subr.mxu0 0.0
    %3077 = vmatpush1.msra.mxu0 0.0
    %3078 = vmatprep.subr.mxu0 0.0
    %3079 = vmatpush1.msra.mxu0 0.0
    %3080 = vmatprep.subr.mxu0 0.0
    %3081 = vmatpush1.msra.mxu0 0.0
    %3082 = vmatprep.mubr.f32.mxu0 0.0
    %3083 = vmatmul.mubr.f32.gmra.mrb[0].mxu0 %v3007
    %v3084 = vpop.f32.mrb[0].mxu0
    %v3085 = vadd.f32 0.0, %v3084
    %v3086 = vpop.f32.mrb[0].mxu0
    %3087 = vmatprep.mubr.f32.mxu0 0.0
    %3088 = vmatmul.mubr.f32.gmra.mrb[0].mxu0 %v3010
    %v3089 = vpop.f32.mrb[0].mxu0
    %v3090 = vadd.f32 0.0, %v3089
    %v3091 = vpop.f32.mrb[0].mxu0
    %3092 = vmatprep.mubr.f32.mxu0 0.0
    %3093 = vmatmul.mubr.f32.gmra.mrb[0].mxu0 %v3013
    %v3094 = vpop.f32.mrb[0].mxu0
    %v3095 = vadd.f32 0.0, %v3094
    %v3096 = vpop.f32.mrb[0].mxu0
    %3097 = vmatprep.mubr.f32.mxu0 0.0
    %3098 = vmatmul.mubr.f32.gmra.mrb[0].mxu0 %v3016
    %v3099 = vpop.f32.mrb[0].mxu0
    %v3100 = vadd.f32 0.0, %v3099
    %v3101 = vpop.f32.mrb[0].mxu0
    %3102 = vdwg.mxu0
    %v3103 = vsub.f32 %v3085, %v93
    %v3104 = vsub.f32 %v3090, %v94
    %v3105 = vsub.f32 %v3095, %v95
    %v3106 = vsub.f32 %v3100, %v96
    %v3107 = vstv %s2797
    %v3108 = vmul.f32 %v3107, %v3103
    %v3109 = vmul.f32 %v3107, %v3104
    %v3110 = vmul.f32 %v3107, %v3105
    %v3111 = vmul.f32 %v3107, %v3106
    %v3112 = vsub.f32 %v2785, %v3108
    %v3113 = vsub.f32 %v2786, %v3109
    %v3114 = vsub.f32 %v2787, %v3110
    %v3115 = vsub.f32 %v2788, %v3111
    %v3116 = vmax.f32 %v3112, 0.0
    %v3117 = vmax.f32 %v3113, 0.0
    %v3118 = vmax.f32 %v3114, 0.0
    %v3119 = vmax.f32 %v3115, 0.0
    %s3120 = scalar_lea.vmem %s11, 256
    %3121 = vst.msk [vmem:[%s3120] sm:$0xff] %vm185, %v3116
    %3122 = vst.msk [vmem:[%s3120 + $0x8] sm:$0xff] %vm185, %v3117
    %3123 = vst.msk [vmem:[%s3120 + $0x10] sm:$0xff] %vm185, %v3118
    %3124 = vst.msk [vmem:[%s3120 + $0x18] sm:$0xff] %vm185, %v3119
    %s3125 = scalar_lea.vmem %s12, 64
    %3126 = vst [vmem:[%s3125] sm:$0xff] %v2964
    // Predicated region
    $region58: #{l1nmf_forward.1} parent=1 // pred_check
      _
    $region59: #{l1nmf_forward.1} parent=1 // pred_check_branch
      %3128 = sbr.rel (0) target = $region61
    $region60: #{l1nmf_forward.1} parent=1 // pred_region
      _
    $region61: #{l1nmf_forward.1} parent=1 // pred_fallthru
      _
    // Predicated region
    $region62: #{l1nmf_forward.1} parent=1 // pred_check
      _
    $region63: #{l1nmf_forward.1} parent=1 // pred_check_branch
      %3130 = sbr.rel (0) target = $region65
    $region64: #{l1nmf_forward.1} parent=1 // pred_region
      _
    $region65: #{l1nmf_forward.1} parent=1 // pred_fallthru
      _
    // Predicated region
    $region66: #{l1nmf_forward.1} parent=1 // pred_check
      _
    $region67: #{l1nmf_forward.1} parent=1 // pred_check_branch
      %3132 = sbr.rel (0) target = $region69
    $region68: #{l1nmf_forward.1} parent=1 // pred_region
      _
    $region69: #{l1nmf_forward.1} parent=1 // pred_fallthru
      _
    // Predicated region
    $region70: #{l1nmf_forward.1} parent=1 // pred_check
      _
    $region71: #{l1nmf_forward.1} parent=1 // pred_check_branch
      %3134 = sbr.rel (0) target = $region73
    $region72: #{l1nmf_forward.1} parent=1 // pred_region
      _
    $region73: #{l1nmf_forward.1} parent=1 // pred_fallthru
      _
    %3135 = vsyncpa [#allocation3], 1
    %3136 = vsyncpa [#allocation5], 1

</llo_original>
